<compile_context>
chip_gen: v5e
topology: v5e:2x2
jax: 0.10.0
libtpu: 0.0.40
codegen_flags: <defaults>
</compile_context>

<pallas_src>
import functools
import math

import numpy as np
import jax
import jax.numpy as jnp
from jax import lax
from jax.experimental import pallas as pl
from jax.experimental.pallas import tpu as pltpu


def _round_up(x, m):
    return ((x + m - 1) // m) * m


# --------------------------------------------------------------------------------------
# Fused kernel: 3x3 offset conv + GN + tanh + snake sampling + (K,1) conv + GN + ReLU.
# Layout: channels on sublanes, padded flattened spatial index (w*H_pad + hp) on lanes.
# --------------------------------------------------------------------------------------
def _fused_dsconv_kernel(stack_ref, maps_ref, woff_ref, boff_ref, gaoff_ref, beoff_ref,
                         wdsc_ref, bdsc_ref, gaout_ref, beout_ref,
                         o_ref,
                         taps_scr, samp_scr, off_scr, ycum_scr, *,
                         K, Cin, Cout, Wd, Hd, H_pad, lead, S_out, chunk,
                         extend_scope, eps):
    center = K // 2
    S_real = Wd * Hd
    base = lead * H_pad                       # plane flat index of working lane 0

    # host-precomputed per-lane maps (no in-kernel iota div/mod)
    w_f = maps_ref[0:1, :]                    # float row index w
    vm = maps_ref[1:2, :]                     # 1.0 on real pixels, 0.0 on pad lanes
    mask_l = maps_ref[2:3, :]                 # conv zero-pad fix for dx = -1
    mask_r = maps_ref[3:4, :]                 # conv zero-pad fix for dx = +1

    woff = woff_ref[...]
    boff = boff_ref[...]
    gaoff = gaoff_ref[...]
    beoff = beoff_ref[...]
    wdsc = wdsc_ref[...]
    bdsc = bdsc_ref[...]
    gaout = gaout_ref[...]
    beout = beout_ref[...]

    chunks = [(c0, min(chunk, S_out - c0)) for c0 in range(0, S_out, chunk)]

    # ---------------- phase A: 3x3 offset conv (only the K+1 rows used) ----------------
    for c0, cl in chunks:
        for dy in (-1, 0, 1):
            for dx in (-1, 0, 1):
                t = (dy + 1) * 3 + (dx + 1)
                st = base + dy * H_pad + dx + c0
                tap = stack_ref[:, st:st + cl].astype(jnp.float32)
                if dx == -1:
                    tap = tap * mask_l[:, c0:c0 + cl]
                elif dx == 1:
                    tap = tap * mask_r[:, c0:c0 + cl]
                taps_scr[t * Cin:(t + 1) * Cin, :cl] = tap
        off_scr[:, c0:c0 + cl] = (
            jnp.dot(woff, taps_scr[:, :cl], preferred_element_type=jnp.float32) + boff)

    # ---------------- GroupNorm(K, 2K) (only y-feeding groups) + tanh ------------------
    n_off = 2.0 * float(S_real)
    yoff = [None] * K
    for g in range(center + 1):
        r0, r1 = 2 * g, 2 * g + 2
        grp = off_scr[r0:r1, :]
        s = jnp.sum(jnp.sum(grp * vm, axis=1, keepdims=True), axis=0, keepdims=True)
        mean = s / n_off
        cen = (grp - mean) * vm
        var = jnp.sum(jnp.sum(cen * cen, axis=1, keepdims=True),
                      axis=0, keepdims=True) / n_off
        inv = lax.rsqrt(var + eps)
        keep = min(r1, K) - r0                # last group: only the y row (row K-1)
        norm = jnp.tanh((grp[:keep, :] - mean) * inv * gaoff[r0:r0 + keep, :]
                        + beoff[r0:r0 + keep, :])
        for j in range(keep):
            yoff[r0 + j] = norm[j:j + 1, :]

    # --------- cumulative snake offsets (outward from centre), pre-clamped rel. --------
    wmax = float(Wd - 1)
    cum = jnp.zeros((1, S_out), jnp.float32)
    for i in range(1, center + 1):
        cum = cum + yoff[center + i]
        ycum_scr[center + i:center + i + 1, :] = (
            jnp.clip(w_f + extend_scope * cum, 0.0, wmax) - w_f)
    cum = jnp.zeros((1, S_out), jnp.float32)
    for i in range(1, center + 1):
        cum = cum + yoff[center - i]
        ycum_scr[center - i:center - i + 1, :] = (
            jnp.clip(w_f + extend_scope * cum, 0.0, wmax) - w_f)

    # ---------------- phase B: bilinear snake sampling + (K,1) snake conv ---------------
    for c0, cl in chunks:
        for k in range(K):
            dx = k - center                   # exact integer column shift of tap k
            if k == center:                   # reference forces offset[center]=0: copy
                st = base + dx + c0
                samp_scr[k * Cin:(k + 1) * Cin, :cl] = (
                    stack_ref[:, st:st + cl].astype(jnp.float32))
                continue
            Dk = int(math.ceil(abs(dx) * extend_scope))
            r = ycum_scr[k:k + 1, c0:c0 + cl]        # clip(w + scope*cum) - w
            samp = jnp.zeros((Cin, cl), jnp.float32)
            for d in range(-Dk, Dk + 2):             # per-tap bounded row window
                a = jnp.maximum(1.0 - jnp.abs(r - float(d)), 0.0)   # tent weight
                st = base + d * H_pad + dx + c0
                fs = stack_ref[:, st:st + cl].astype(jnp.float32)
                samp = samp + a * fs
            samp_scr[k * Cin:(k + 1) * Cin, :cl] = samp
        o_ref[:, c0:c0 + cl] = (
            jnp.dot(wdsc, samp_scr[:, :cl], preferred_element_type=jnp.float32) + bdsc)

    # ---------------- GroupNorm(Cout // 4, Cout) + ReLU, in place in o_ref --------------
    ng = Cout // 4
    gs = Cout // ng
    n_out = float(gs * S_real)
    for g in range(ng):
        r0, r1 = g * gs, (g + 1) * gs
        grp = o_ref[r0:r1, :]
        s = jnp.sum(jnp.sum(grp * vm, axis=1, keepdims=True), axis=0, keepdims=True)
        mean = s / n_out
        cen = (grp - mean) * vm
        var = jnp.sum(jnp.sum(cen * cen, axis=1, keepdims=True),
                      axis=0, keepdims=True) / n_out
        inv = lax.rsqrt(var + eps)
        o_ref[r0:r1, :] = jnp.maximum(
            (grp - mean) * inv * gaout[r0:r1, :] + beout[r0:r1, :], 0.0)


# --------------------------------------------------------------------------------------
# Host wrapper (layout glue only: padding, lane maps, weight repacking, vmem sizing)
# --------------------------------------------------------------------------------------
def dsconv_pro_forward(x, params, *, kernel_size=9, extend_scope=1.0, morph=0,
                       lane_chunk=None, plane_dtype=jnp.float32):
    assert morph == 0, "only morph=0 (module default) is implemented"
    B, Cin, Wd, Hd = x.shape
    K = kernel_size
    assert K % 2 == 1 and K >= 3, "odd kernel_size >= 3 expected (module default is 9)"
    center = K // 2
    Cout = params["w_dsc"].shape[0]
    assert Cout % 4 == 0, "out_channels must be divisible by 4 (GroupNorm(out//4, out))"

    # --- padded-plane geometry -------------------------------------------------------
    D_max = int(math.ceil(center * float(extend_scope)))  # |snake offset| bound (tanh<=1)
    max_neg = max(D_max, 1)                                # largest negative row shift
    max_pos = max(D_max + 1, 1)                            # largest positive row shift
    H_pad = Hd + 2 * center                                # edge-padded column count
    S_work = Wd * H_pad
    S_out = _round_up(S_work, 128)                         # lane-dense output slab
    pad_lanes = S_out - S_work
    lead = max_neg + 1
    trail = max_pos + 1 + (-(-pad_lanes // H_pad))
    W_plane = lead + Wd + trail
    S_plane = W_plane * H_pad

    # single plane: edge-pad columns (grid_sample clamp), zero-pad rows (conv / out-of-range)
    xe = jnp.pad(x.astype(jnp.float32),
                 ((0, 0), (0, 0), (0, 0), (center, center)), mode="edge")
    plane = jnp.pad(xe, ((0, 0), (0, 0), (lead, trail), (0, 0)))
    plane = plane.reshape(B, Cin, S_plane).astype(plane_dtype)

    # per-lane index maps (built host-side once; avoids in-kernel integer div/mod)
    lane = np.arange(S_out)
    wrow = lane // H_pad
    hp = lane % H_pad
    lanemaps = jnp.asarray(np.stack([
        wrow.astype(np.float32),                                              # w_f
        ((hp >= center) & (hp < center + Hd) & (wrow < Wd)).astype(np.float32),  # valid
        (hp != center).astype(np.float32),                                    # mask_l
        (hp != center + Hd - 1).astype(np.float32),                           # mask_r
    ], axis=0))

    # --- weight repacking; only the K+1 offset-conv rows actually consumed ------------
    w_off2 = jnp.transpose(params["w_off"][:K + 1].astype(jnp.float32),
                           (0, 2, 3, 1)).reshape(K + 1, 9 * Cin)
    b_off = params["b_off"][:K + 1].astype(jnp.float32).reshape(K + 1, 1)
    ga_off = params.get("gn_offset_weight",
                        jnp.ones((2 * K,), jnp.float32))[:K + 1].astype(jnp.float32).reshape(K + 1, 1)
    be_off = params.get("gn_offset_bias",
                        jnp.zeros((2 * K,), jnp.float32))[:K + 1].astype(jnp.float32).reshape(K + 1, 1)

    w_dsc2 = jnp.transpose(params["w_dsc"][:, :, :, 0].astype(jnp.float32),
                           (0, 2, 1)).reshape(Cout, K * Cin)
    b_dsc = params["b_dsc"].astype(jnp.float32).reshape(Cout, 1)
    ga_out = params.get("gn_out_weight",
                        jnp.ones((Cout,), jnp.float32)).astype(jnp.float32).reshape(Cout, 1)
    be_out = params.get("gn_out_bias",
                        jnp.zeros((Cout,), jnp.float32)).astype(jnp.float32).reshape(Cout, 1)

    # --- lane chunk (multiple of 128) for scratch / matmul tiling ----------------------
    if lane_chunk is None:
        lane_chunk = 2048
    lane_chunk = int(min(_round_up(int(lane_chunk), 128), S_out))

    # --- explicit VMEM limit sized from the real footprint (+headroom) -----------------
    item = jnp.dtype(plane_dtype).itemsize
    vmem_need = (2 * Cin * S_plane * item               # input plane block (double buffer)
                 + 2 * Cout * S_out * 4                 # output block (double buffer)
                 + (9 * Cin + K * Cin) * lane_chunk * 4  # taps / samp scratch
                 + (2 * K + 1) * S_out * 4              # off_scr + ycum_scr
                 + 2 * 4 * (4 * S_out + (K + 1) * 9 * Cin + Cout * K * Cin + 4 * (K + 1 + Cout)))
    vmem_limit = int(min(max(vmem_need * 3 // 2 + (4 << 20), 32 << 20), 112 << 20))

    kern = functools.partial(
        _fused_dsconv_kernel, K=K, Cin=Cin, Cout=Cout, Wd=Wd, Hd=Hd,
        H_pad=H_pad, lead=lead, S_out=S_out, chunk=lane_chunk,
        extend_scope=float(extend_scope), eps=1e-5)

    out = pl.pallas_call(
        kern,
        out_shape=jax.ShapeDtypeStruct((B, Cout, S_out), jnp.float32),
        grid=(B,),
        in_specs=[
            pl.BlockSpec((None, Cin, S_plane), lambda b: (b, 0, 0)),
            pl.BlockSpec((4, S_out), lambda b: (0, 0)),
            pl.BlockSpec((K + 1, 9 * Cin), lambda b: (0, 0)),
            pl.BlockSpec((K + 1, 1), lambda b: (0, 0)),
            pl.BlockSpec((K + 1, 1), lambda b: (0, 0)),
            pl.BlockSpec((K + 1, 1), lambda b: (0, 0)),
            pl.BlockSpec((Cout, K * Cin), lambda b: (0, 0)),
            pl.BlockSpec((Cout, 1), lambda b: (0, 0)),
            pl.BlockSpec((Cout, 1), lambda b: (0, 0)),
            pl.BlockSpec((Cout, 1), lambda b: (0, 0)),
        ],
        out_specs=pl.BlockSpec((None, Cout, S_out), lambda b: (b, 0, 0)),
        scratch_shapes=[
            pltpu.VMEM((9 * Cin, lane_chunk), jnp.float32),   # 3x3-conv tap chunk
            pltpu.VMEM((K * Cin, lane_chunk), jnp.float32),   # snake-sampled tap chunk
            pltpu.VMEM((K + 1, S_out), jnp.float32),          # raw offset-conv rows
            pltpu.VMEM((K, S_out), jnp.float32),              # pre-clamped relative y coords
        ],
        compiler_params=pltpu.CompilerParams(
            dimension_semantics=("parallel",),
            vmem_limit_bytes=vmem_limit),
    )(plane, lanemaps, w_off2, b_off, ga_off, be_off, w_dsc2, b_dsc, ga_out, be_out)

    # drop lane padding / pad columns and reshape straight back to NCHW
    out = out[:, :, :S_work].reshape(B, Cout, Wd, H_pad)[:, :, :, center:center + Hd]
    return out


if __name__ == "__main__":
    B, Cin, H, W = 2, 4, 16, 16
    Cout, K = 4, 9          # out_channels must be divisible by 4 (GroupNorm(out//4, out))

    key = jax.random.PRNGKey(0)
    k1, k2, k3, k4, k5 = jax.random.split(key, 5)
    x = jax.random.normal(k1, (B, Cin, H, W), jnp.float32)
    params = {
        "w_off": 0.1 * jax.random.normal(k2, (2 * K, Cin, 3, 3), jnp.float32),
        "b_off": 0.1 * jax.random.normal(k3, (2 * K,), jnp.float32),
        "w_dsc": 0.1 * jax.random.normal(k4, (Cout, Cin, K, 1), jnp.float32),
        "b_dsc": 0.1 * jax.random.normal(k5, (Cout,), jnp.float32),
    }

    out = dsconv_pro_forward(x, params, kernel_size=K, extend_scope=1.0, morph=0)
    out = jax.block_until_ready(out)
    assert out.shape == (B, Cout, H, W), out.shape
    assert bool(jnp.all(jnp.isfinite(out))) and bool(jnp.all(out >= 0.0))

    # self-consistency across lane-chunk tilings (exercises the multi-chunk path)
    out_c = dsconv_pro_forward(x, params, kernel_size=K, extend_scope=1.0, morph=0,
                               lane_chunk=128)
    out_c = jax.block_until_ready(out_c)
    assert bool(jnp.allclose(out, out_c, atol=1e-5, rtol=1e-5))

    print("KERNEL_OK")
</pallas_src>

<mosaic_0001>
module attributes {stable_mosaic.version = 11 : i64} {
  func.func @_fused_dsconv_kernel(%arg0: i32, %arg1: memref<1x4x648xf32, #tpu.memory_space<vmem>>, %arg2: memref<4x384xf32, #tpu.memory_space<vmem>>, %arg3: memref<10x36xf32, #tpu.memory_space<vmem>>, %arg4: memref<10x1xf32, #tpu.memory_space<vmem>>, %arg5: memref<10x1xf32, #tpu.memory_space<vmem>>, %arg6: memref<10x1xf32, #tpu.memory_space<vmem>>, %arg7: memref<4x36xf32, #tpu.memory_space<vmem>>, %arg8: memref<4x1xf32, #tpu.memory_space<vmem>>, %arg9: memref<4x1xf32, #tpu.memory_space<vmem>>, %arg10: memref<4x1xf32, #tpu.memory_space<vmem>>, %arg11: memref<1x4x384xf32, #tpu.memory_space<vmem>>, %arg12: memref<36x384xf32, #tpu.memory_space<vmem>>, %arg13: memref<36x384xf32, #tpu.memory_space<vmem>>, %arg14: memref<10x384xf32, #tpu.memory_space<vmem>>, %arg15: memref<9x384xf32, #tpu.memory_space<vmem>>) attributes {dimension_semantics = [#tpu.dimension_semantics<parallel>], iteration_bounds = array<i64: 2>, scalar_prefetch = 0 : i64, scratch_operands = 4 : i64, tpu.core_type = #tpu.core_type<tc>, window_params = [{transform_indices = @transform_0, window_bounds = array<i64: 1, 4, 648>}, {pipeline_mode = #tpu.pipeline_mode<synchronous>, transform_indices = @transform_1, window_bounds = array<i64: 4, 384>}, {pipeline_mode = #tpu.pipeline_mode<synchronous>, transform_indices = @transform_2, window_bounds = array<i64: 10, 36>}, {pipeline_mode = #tpu.pipeline_mode<synchronous>, transform_indices = @transform_3, window_bounds = array<i64: 10, 1>}, {pipeline_mode = #tpu.pipeline_mode<synchronous>, transform_indices = @transform_4, window_bounds = array<i64: 10, 1>}, {pipeline_mode = #tpu.pipeline_mode<synchronous>, transform_indices = @transform_5, window_bounds = array<i64: 10, 1>}, {pipeline_mode = #tpu.pipeline_mode<synchronous>, transform_indices = @transform_6, window_bounds = array<i64: 4, 36>}, {pipeline_mode = #tpu.pipeline_mode<synchronous>, transform_indices = @transform_7, window_bounds = array<i64: 4, 1>}, {pipeline_mode = #tpu.pipeline_mode<synchronous>, transform_indices = @transform_8, window_bounds = array<i64: 4, 1>}, {pipeline_mode = #tpu.pipeline_mode<synchronous>, transform_indices = @transform_9, window_bounds = array<i64: 4, 1>}, {transform_indices = @transform_10, window_bounds = array<i64: 1, 4, 384>}]} {
    %c0 = arith.constant 0 : index
    %c0_0 = arith.constant 0 : index
    %0 = vector.load %arg2[%c0, %c0_0] : memref<4x384xf32, #tpu.memory_space<vmem>>, vector<1x384xf32>
    %c1 = arith.constant 1 : index
    %c0_1 = arith.constant 0 : index
    %1 = vector.load %arg2[%c1, %c0_1] : memref<4x384xf32, #tpu.memory_space<vmem>>, vector<1x384xf32>
    %c2 = arith.constant 2 : index
    %c0_2 = arith.constant 0 : index
    %2 = vector.load %arg2[%c2, %c0_2] : memref<4x384xf32, #tpu.memory_space<vmem>>, vector<1x384xf32>
    %c3 = arith.constant 3 : index
    %c0_3 = arith.constant 0 : index
    %3 = vector.load %arg2[%c3, %c0_3] : memref<4x384xf32, #tpu.memory_space<vmem>>, vector<1x384xf32>
    %c0_4 = arith.constant 0 : index
    %c0_5 = arith.constant 0 : index
    %4 = vector.load %arg3[%c0_4, %c0_5] : memref<10x36xf32, #tpu.memory_space<vmem>>, vector<10x36xf32>
    %c0_6 = arith.constant 0 : index
    %c0_7 = arith.constant 0 : index
    %5 = vector.load %arg4[%c0_6, %c0_7] : memref<10x1xf32, #tpu.memory_space<vmem>>, vector<10x1xf32>
    %c0_8 = arith.constant 0 : index
    %c0_9 = arith.constant 0 : index
    %6 = vector.load %arg5[%c0_8, %c0_9] : memref<10x1xf32, #tpu.memory_space<vmem>>, vector<10x1xf32>
    %c0_10 = arith.constant 0 : index
    %c0_11 = arith.constant 0 : index
    %7 = vector.load %arg6[%c0_10, %c0_11] : memref<10x1xf32, #tpu.memory_space<vmem>>, vector<10x1xf32>
    %c0_12 = arith.constant 0 : index
    %c0_13 = arith.constant 0 : index
    %8 = vector.load %arg7[%c0_12, %c0_13] : memref<4x36xf32, #tpu.memory_space<vmem>>, vector<4x36xf32>
    %c0_14 = arith.constant 0 : index
    %c0_15 = arith.constant 0 : index
    %9 = vector.load %arg8[%c0_14, %c0_15] : memref<4x1xf32, #tpu.memory_space<vmem>>, vector<4x1xf32>
    %c0_16 = arith.constant 0 : index
    %c0_17 = arith.constant 0 : index
    %10 = vector.load %arg9[%c0_16, %c0_17] : memref<4x1xf32, #tpu.memory_space<vmem>>, vector<4x1xf32>
    %c0_18 = arith.constant 0 : index
    %c0_19 = arith.constant 0 : index
    %11 = vector.load %arg10[%c0_18, %c0_19] : memref<4x1xf32, #tpu.memory_space<vmem>>, vector<4x1xf32>
    %c0_20 = arith.constant 0 : index
    %c0_21 = arith.constant 0 : index
    %c95 = arith.constant 95 : index
    %12 = vector.load %arg1[%c0_20, %c0_21, %c95] : memref<1x4x648xf32, #tpu.memory_space<vmem>>, vector<1x4x384xf32>
    %13 = vector.shape_cast %12 : vector<1x4x384xf32> to vector<4x384xf32>
    %14 = vector.broadcast %2 : vector<1x384xf32> to vector<4x384xf32>
    %15 = arith.mulf %13, %14 : vector<4x384xf32>
    %c0_22 = arith.constant 0 : index
    %c0_23 = arith.constant 0 : index
    %16 = vector.load %arg12[%c0_22, %c0_23] : memref<36x384xf32, #tpu.memory_space<vmem>>, vector<4x384xf32>
    tpu.vector_store %arg12[%c0_22, %c0_23], %15 {strides = array<i32>} : memref<36x384xf32, #tpu.memory_space<vmem>>, vector<4x384xf32>,
    %c0_24 = arith.constant 0 : index
    %c0_25 = arith.constant 0 : index
    %c96 = arith.constant 96 : index
    %17 = vector.load %arg1[%c0_24, %c0_25, %c96] : memref<1x4x648xf32, #tpu.memory_space<vmem>>, vector<1x4x384xf32>
    %18 = vector.shape_cast %17 : vector<1x4x384xf32> to vector<4x384xf32>
    %c4 = arith.constant 4 : index
    %c0_26 = arith.constant 0 : index
    %19 = vector.load %arg12[%c4, %c0_26] : memref<36x384xf32, #tpu.memory_space<vmem>>, vector<4x384xf32>
    tpu.vector_store %arg12[%c4, %c0_26], %18 {strides = array<i32>} : memref<36x384xf32, #tpu.memory_space<vmem>>, vector<4x384xf32>,
    %c0_27 = arith.constant 0 : index
    %c0_28 = arith.constant 0 : index
    %c97 = arith.constant 97 : index
    %20 = vector.load %arg1[%c0_27, %c0_28, %c97] : memref<1x4x648xf32, #tpu.memory_space<vmem>>, vector<1x4x384xf32>
    %21 = vector.shape_cast %20 : vector<1x4x384xf32> to vector<4x384xf32>
    %22 = vector.broadcast %3 : vector<1x384xf32> to vector<4x384xf32>
    %23 = arith.mulf %21, %22 : vector<4x384xf32>
    %c8 = arith.constant 8 : index
    %c0_29 = arith.constant 0 : index
    %24 = vector.load %arg12[%c8, %c0_29] : memref<36x384xf32, #tpu.memory_space<vmem>>, vector<4x384xf32>
    tpu.vector_store %arg12[%c8, %c0_29], %23 {strides = array<i32>} : memref<36x384xf32, #tpu.memory_space<vmem>>, vector<4x384xf32>,
    %c0_30 = arith.constant 0 : index
    %c0_31 = arith.constant 0 : index
    %c119 = arith.constant 119 : index
    %25 = vector.load %arg1[%c0_30, %c0_31, %c119] : memref<1x4x648xf32, #tpu.memory_space<vmem>>, vector<1x4x384xf32>
    %26 = vector.shape_cast %25 : vector<1x4x384xf32> to vector<4x384xf32>
    %27 = vector.broadcast %2 : vector<1x384xf32> to vector<4x384xf32>
    %28 = arith.mulf %26, %27 : vector<4x384xf32>
    %c12 = arith.constant 12 : index
    %c0_32 = arith.constant 0 : index
    %29 = vector.load %arg12[%c12, %c0_32] : memref<36x384xf32, #tpu.memory_space<vmem>>, vector<4x384xf32>
    tpu.vector_store %arg12[%c12, %c0_32], %28 {strides = array<i32>} : memref<36x384xf32, #tpu.memory_space<vmem>>, vector<4x384xf32>,
    %c0_33 = arith.constant 0 : index
    %c0_34 = arith.constant 0 : index
    %c120 = arith.constant 120 : index
    %30 = vector.load %arg1[%c0_33, %c0_34, %c120] : memref<1x4x648xf32, #tpu.memory_space<vmem>>, vector<1x4x384xf32>
    %31 = vector.shape_cast %30 : vector<1x4x384xf32> to vector<4x384xf32>
    %c16 = arith.constant 16 : index
    %c0_35 = arith.constant 0 : index
    %32 = vector.load %arg12[%c16, %c0_35] : memref<36x384xf32, #tpu.memory_space<vmem>>, vector<4x384xf32>
    tpu.vector_store %arg12[%c16, %c0_35], %31 {strides = array<i32>} : memref<36x384xf32, #tpu.memory_space<vmem>>, vector<4x384xf32>,
    %c0_36 = arith.constant 0 : index
    %c0_37 = arith.constant 0 : index
    %c121 = arith.constant 121 : index
    %33 = vector.load %arg1[%c0_36, %c0_37, %c121] : memref<1x4x648xf32, #tpu.memory_space<vmem>>, vector<1x4x384xf32>
    %34 = vector.shape_cast %33 : vector<1x4x384xf32> to vector<4x384xf32>
    %35 = vector.broadcast %3 : vector<1x384xf32> to vector<4x384xf32>
    %36 = arith.mulf %34, %35 : vector<4x384xf32>
    %c20 = arith.constant 20 : index
    %c0_38 = arith.constant 0 : index
    %37 = vector.load %arg12[%c20, %c0_38] : memref<36x384xf32, #tpu.memory_space<vmem>>, vector<4x384xf32>
    tpu.vector_store %arg12[%c20, %c0_38], %36 {strides = array<i32>} : memref<36x384xf32, #tpu.memory_space<vmem>>, vector<4x384xf32>,
    %c0_39 = arith.constant 0 : index
    %c0_40 = arith.constant 0 : index
    %c143 = arith.constant 143 : index
    %38 = vector.load %arg1[%c0_39, %c0_40, %c143] : memref<1x4x648xf32, #tpu.memory_space<vmem>>, vector<1x4x384xf32>
    %39 = vector.shape_cast %38 : vector<1x4x384xf32> to vector<4x384xf32>
    %40 = vector.broadcast %2 : vector<1x384xf32> to vector<4x384xf32>
    %41 = arith.mulf %39, %40 : vector<4x384xf32>
    %c24 = arith.constant 24 : index
    %c0_41 = arith.constant 0 : index
    %42 = vector.load %arg12[%c24, %c0_41] : memref<36x384xf32, #tpu.memory_space<vmem>>, vector<4x384xf32>
    tpu.vector_store %arg12[%c24, %c0_41], %41 {strides = array<i32>} : memref<36x384xf32, #tpu.memory_space<vmem>>, vector<4x384xf32>,
    %c0_42 = arith.constant 0 : index
    %c0_43 = arith.constant 0 : index
    %c144 = arith.constant 144 : index
    %43 = vector.load %arg1[%c0_42, %c0_43, %c144] : memref<1x4x648xf32, #tpu.memory_space<vmem>>, vector<1x4x384xf32>
    %44 = vector.shape_cast %43 : vector<1x4x384xf32> to vector<4x384xf32>
    %c28 = arith.constant 28 : index
    %c0_44 = arith.constant 0 : index
    %45 = vector.load %arg12[%c28, %c0_44] : memref<36x384xf32, #tpu.memory_space<vmem>>, vector<4x384xf32>
    tpu.vector_store %arg12[%c28, %c0_44], %44 {strides = array<i32>} : memref<36x384xf32, #tpu.memory_space<vmem>>, vector<4x384xf32>,
    %c0_45 = arith.constant 0 : index
    %c0_46 = arith.constant 0 : index
    %c145 = arith.constant 145 : index
    %46 = vector.load %arg1[%c0_45, %c0_46, %c145] : memref<1x4x648xf32, #tpu.memory_space<vmem>>, vector<1x4x384xf32>
    %47 = vector.shape_cast %46 : vector<1x4x384xf32> to vector<4x384xf32>
    %48 = vector.broadcast %3 : vector<1x384xf32> to vector<4x384xf32>
    %49 = arith.mulf %47, %48 : vector<4x384xf32>
    %c32 = arith.constant 32 : index
    %c0_47 = arith.constant 0 : index
    %50 = vector.load %arg12[%c32, %c0_47] : memref<36x384xf32, #tpu.memory_space<vmem>>, vector<4x384xf32>
    tpu.vector_store %arg12[%c32, %c0_47], %49 {strides = array<i32>} : memref<36x384xf32, #tpu.memory_space<vmem>>, vector<4x384xf32>,
    %c0_48 = arith.constant 0 : index
    %c0_49 = arith.constant 0 : index
    %51 = vector.load %arg12[%c0_48, %c0_49] : memref<36x384xf32, #tpu.memory_space<vmem>>, vector<36x384xf32>
    %cst = arith.constant dense<0.000000e+00> : vector<10x384xf32>
    %52 = tpu.matmul %4, %51, %cst {dimension_numbers = #tpu.dot_dimension_numbers<[1], [0], [0], [1], [0, 0, 1, 1], [], []>} : vector<10x36xf32>, vector<36x384xf32>, vector<10x384xf32> -> vector<10x384xf32>
    %53 = vector.broadcast %5 : vector<10x1xf32> to vector<10x384xf32>
    %54 = arith.addf %52, %53 : vector<10x384xf32>
    %c0_50 = arith.constant 0 : index
    %c0_51 = arith.constant 0 : index
    %55 = vector.load %arg14[%c0_50, %c0_51] : memref<10x384xf32, #tpu.memory_space<vmem>>, vector<10x384xf32>
    tpu.vector_store %arg14[%c0_50, %c0_51], %54 {strides = array<i32>} : memref<10x384xf32, #tpu.memory_space<vmem>>, vector<10x384xf32>,
    %c0_52 = arith.constant 0 : index
    %c0_53 = arith.constant 0 : index
    %56 = vector.load %arg14[%c0_52, %c0_53] : memref<10x384xf32, #tpu.memory_space<vmem>>, vector<2x384xf32>
    %57 = vector.broadcast %1 : vector<1x384xf32> to vector<2x384xf32>
    %58 = arith.mulf %56, %57 : vector<2x384xf32>
    %cst_54 = arith.constant dense<0.000000e+00> : vector<2xf32>
    %59 = vector.multi_reduction <add>, %58, %cst_54 [1] : vector<2x384xf32> to vector<2xf32>
    %60 = vector.shape_cast %59 : vector<2xf32> to vector<2x1xf32>
    %cst_55 = arith.constant dense<0.000000e+00> : vector<1xf32>
    %61 = vector.multi_reduction <add>, %60, %cst_55 [0] : vector<2x1xf32> to vector<1xf32>
    %62 = vector.shape_cast %61 : vector<1xf32> to vector<1x1xf32>
    %cst_56 = arith.constant 5.120000e+02 : f32
    %63 = vector.broadcast %cst_56 : f32 to vector<1x1xf32>
    %64 = arith.divf %62, %63 : vector<1x1xf32>
    %65 = vector.broadcast %64 : vector<1x1xf32> to vector<2x384xf32>
    %66 = arith.subf %56, %65 : vector<2x384xf32>
    %67 = vector.broadcast %1 : vector<1x384xf32> to vector<2x384xf32>
    %68 = arith.mulf %66, %67 : vector<2x384xf32>
    %69 = arith.mulf %68, %68 : vector<2x384xf32>
    %cst_57 = arith.constant dense<0.000000e+00> : vector<2xf32>
    %70 = vector.multi_reduction <add>, %69, %cst_57 [1] : vector<2x384xf32> to vector<2xf32>
    %71 = vector.shape_cast %70 : vector<2xf32> to vector<2x1xf32>
    %cst_58 = arith.constant dense<0.000000e+00> : vector<1xf32>
    %72 = vector.multi_reduction <add>, %71, %cst_58 [0] : vector<2x1xf32> to vector<1xf32>
    %73 = vector.shape_cast %72 : vector<1xf32> to vector<1x1xf32>
    %cst_59 = arith.constant 5.120000e+02 : f32
    %74 = vector.broadcast %cst_59 : f32 to vector<1x1xf32>
    %75 = arith.divf %73, %74 : vector<1x1xf32>
    %cst_60 = arith.constant 9.99999974E-6 : f32
    %76 = vector.broadcast %cst_60 : f32 to vector<1x1xf32>
    %77 = arith.addf %75, %76 : vector<1x1xf32>
    %78 = math.rsqrt %77 : vector<1x1xf32>
    %79 = vector.broadcast %64 : vector<1x1xf32> to vector<2x384xf32>
    %80 = arith.subf %56, %79 : vector<2x384xf32>
    %81 = vector.broadcast %78 : vector<1x1xf32> to vector<2x384xf32>
    %82 = arith.mulf %80, %81 : vector<2x384xf32>
    %83 = vector.extract_strided_slice %6 {offsets = [0, 0], sizes = [2, 1], strides = [1, 1]} : vector<10x1xf32> to vector<2x1xf32>
    %84 = vector.broadcast %83 : vector<2x1xf32> to vector<2x384xf32>
    %85 = arith.mulf %82, %84 : vector<2x384xf32>
    %86 = vector.extract_strided_slice %7 {offsets = [0, 0], sizes = [2, 1], strides = [1, 1]} : vector<10x1xf32> to vector<2x1xf32>
    %87 = vector.broadcast %86 : vector<2x1xf32> to vector<2x384xf32>
    %88 = arith.addf %85, %87 : vector<2x384xf32>
    %89 = math.tanh %88 : vector<2x384xf32>
    %90 = vector.extract_strided_slice %89 {offsets = [0, 0], sizes = [1, 384], strides = [1, 1]} : vector<2x384xf32> to vector<1x384xf32>
    %91 = vector.extract_strided_slice %89 {offsets = [1, 0], sizes = [1, 384], strides = [1, 1]} : vector<2x384xf32> to vector<1x384xf32>
    %c2_61 = arith.constant 2 : index
    %c0_62 = arith.constant 0 : index
    %92 = vector.load %arg14[%c2_61, %c0_62] : memref<10x384xf32, #tpu.memory_space<vmem>>, vector<2x384xf32>
    %93 = vector.broadcast %1 : vector<1x384xf32> to vector<2x384xf32>
    %94 = arith.mulf %92, %93 : vector<2x384xf32>
    %cst_63 = arith.constant dense<0.000000e+00> : vector<2xf32>
    %95 = vector.multi_reduction <add>, %94, %cst_63 [1] : vector<2x384xf32> to vector<2xf32>
    %96 = vector.shape_cast %95 : vector<2xf32> to vector<2x1xf32>
    %cst_64 = arith.constant dense<0.000000e+00> : vector<1xf32>
    %97 = vector.multi_reduction <add>, %96, %cst_64 [0] : vector<2x1xf32> to vector<1xf32>
    %98 = vector.shape_cast %97 : vector<1xf32> to vector<1x1xf32>
    %cst_65 = arith.constant 5.120000e+02 : f32
    %99 = vector.broadcast %cst_65 : f32 to vector<1x1xf32>
    %100 = arith.divf %98, %99 : vector<1x1xf32>
    %101 = vector.broadcast %100 : vector<1x1xf32> to vector<2x384xf32>
    %102 = arith.subf %92, %101 : vector<2x384xf32>
    %103 = vector.broadcast %1 : vector<1x384xf32> to vector<2x384xf32>
    %104 = arith.mulf %102, %103 : vector<2x384xf32>
    %105 = arith.mulf %104, %104 : vector<2x384xf32>
    %cst_66 = arith.constant dense<0.000000e+00> : vector<2xf32>
    %106 = vector.multi_reduction <add>, %105, %cst_66 [1] : vector<2x384xf32> to vector<2xf32>
    %107 = vector.shape_cast %106 : vector<2xf32> to vector<2x1xf32>
    %cst_67 = arith.constant dense<0.000000e+00> : vector<1xf32>
    %108 = vector.multi_reduction <add>, %107, %cst_67 [0] : vector<2x1xf32> to vector<1xf32>
    %109 = vector.shape_cast %108 : vector<1xf32> to vector<1x1xf32>
    %cst_68 = arith.constant 5.120000e+02 : f32
    %110 = vector.broadcast %cst_68 : f32 to vector<1x1xf32>
    %111 = arith.divf %109, %110 : vector<1x1xf32>
    %cst_69 = arith.constant 9.99999974E-6 : f32
    %112 = vector.broadcast %cst_69 : f32 to vector<1x1xf32>
    %113 = arith.addf %111, %112 : vector<1x1xf32>
    %114 = math.rsqrt %113 : vector<1x1xf32>
    %115 = vector.broadcast %100 : vector<1x1xf32> to vector<2x384xf32>
    %116 = arith.subf %92, %115 : vector<2x384xf32>
    %117 = vector.broadcast %114 : vector<1x1xf32> to vector<2x384xf32>
    %118 = arith.mulf %116, %117 : vector<2x384xf32>
    %119 = vector.extract_strided_slice %6 {offsets = [2, 0], sizes = [2, 1], strides = [1, 1]} : vector<10x1xf32> to vector<2x1xf32>
    %120 = vector.broadcast %119 : vector<2x1xf32> to vector<2x384xf32>
    %121 = arith.mulf %118, %120 : vector<2x384xf32>
    %122 = vector.extract_strided_slice %7 {offsets = [2, 0], sizes = [2, 1], strides = [1, 1]} : vector<10x1xf32> to vector<2x1xf32>
    %123 = vector.broadcast %122 : vector<2x1xf32> to vector<2x384xf32>
    %124 = arith.addf %121, %123 : vector<2x384xf32>
    %125 = math.tanh %124 : vector<2x384xf32>
    %126 = vector.extract_strided_slice %125 {offsets = [0, 0], sizes = [1, 384], strides = [1, 1]} : vector<2x384xf32> to vector<1x384xf32>
    %127 = vector.extract_strided_slice %125 {offsets = [1, 0], sizes = [1, 384], strides = [1, 1]} : vector<2x384xf32> to vector<1x384xf32>
    %c4_70 = arith.constant 4 : index
    %c0_71 = arith.constant 0 : index
    %128 = vector.load %arg14[%c4_70, %c0_71] : memref<10x384xf32, #tpu.memory_space<vmem>>, vector<2x384xf32>
    %129 = vector.broadcast %1 : vector<1x384xf32> to vector<2x384xf32>
    %130 = arith.mulf %128, %129 : vector<2x384xf32>
    %cst_72 = arith.constant dense<0.000000e+00> : vector<2xf32>
    %131 = vector.multi_reduction <add>, %130, %cst_72 [1] : vector<2x384xf32> to vector<2xf32>
    %132 = vector.shape_cast %131 : vector<2xf32> to vector<2x1xf32>
    %cst_73 = arith.constant dense<0.000000e+00> : vector<1xf32>
    %133 = vector.multi_reduction <add>, %132, %cst_73 [0] : vector<2x1xf32> to vector<1xf32>
    %134 = vector.shape_cast %133 : vector<1xf32> to vector<1x1xf32>
    %cst_74 = arith.constant 5.120000e+02 : f32
    %135 = vector.broadcast %cst_74 : f32 to vector<1x1xf32>
    %136 = arith.divf %134, %135 : vector<1x1xf32>
    %137 = vector.broadcast %136 : vector<1x1xf32> to vector<2x384xf32>
    %138 = arith.subf %128, %137 : vector<2x384xf32>
    %139 = vector.broadcast %1 : vector<1x384xf32> to vector<2x384xf32>
    %140 = arith.mulf %138, %139 : vector<2x384xf32>
    %141 = arith.mulf %140, %140 : vector<2x384xf32>
    %cst_75 = arith.constant dense<0.000000e+00> : vector<2xf32>
    %142 = vector.multi_reduction <add>, %141, %cst_75 [1] : vector<2x384xf32> to vector<2xf32>
    %143 = vector.shape_cast %142 : vector<2xf32> to vector<2x1xf32>
    %cst_76 = arith.constant dense<0.000000e+00> : vector<1xf32>
    %144 = vector.multi_reduction <add>, %143, %cst_76 [0] : vector<2x1xf32> to vector<1xf32>
    %145 = vector.shape_cast %144 : vector<1xf32> to vector<1x1xf32>
    %cst_77 = arith.constant 5.120000e+02 : f32
    %146 = vector.broadcast %cst_77 : f32 to vector<1x1xf32>
    %147 = arith.divf %145, %146 : vector<1x1xf32>
    %cst_78 = arith.constant 9.99999974E-6 : f32
    %148 = vector.broadcast %cst_78 : f32 to vector<1x1xf32>
    %149 = arith.addf %147, %148 : vector<1x1xf32>
    %150 = math.rsqrt %149 : vector<1x1xf32>
    %151 = vector.broadcast %136 : vector<1x1xf32> to vector<2x384xf32>
    %152 = arith.subf %128, %151 : vector<2x384xf32>
    %153 = vector.broadcast %150 : vector<1x1xf32> to vector<2x384xf32>
    %154 = arith.mulf %152, %153 : vector<2x384xf32>
    %155 = vector.extract_strided_slice %6 {offsets = [4, 0], sizes = [2, 1], strides = [1, 1]} : vector<10x1xf32> to vector<2x1xf32>
    %156 = vector.broadcast %155 : vector<2x1xf32> to vector<2x384xf32>
    %157 = arith.mulf %154, %156 : vector<2x384xf32>
    %158 = vector.extract_strided_slice %7 {offsets = [4, 0], sizes = [2, 1], strides = [1, 1]} : vector<10x1xf32> to vector<2x1xf32>
    %159 = vector.broadcast %158 : vector<2x1xf32> to vector<2x384xf32>
    %160 = arith.addf %157, %159 : vector<2x384xf32>
    %161 = math.tanh %160 : vector<2x384xf32>
    %162 = vector.extract_strided_slice %161 {offsets = [1, 0], sizes = [1, 384], strides = [1, 1]} : vector<2x384xf32> to vector<1x384xf32>
    %c6 = arith.constant 6 : index
    %c0_79 = arith.constant 0 : index
    %163 = vector.load %arg14[%c6, %c0_79] : memref<10x384xf32, #tpu.memory_space<vmem>>, vector<2x384xf32>
    %164 = vector.broadcast %1 : vector<1x384xf32> to vector<2x384xf32>
    %165 = arith.mulf %163, %164 : vector<2x384xf32>
    %cst_80 = arith.constant dense<0.000000e+00> : vector<2xf32>
    %166 = vector.multi_reduction <add>, %165, %cst_80 [1] : vector<2x384xf32> to vector<2xf32>
    %167 = vector.shape_cast %166 : vector<2xf32> to vector<2x1xf32>
    %cst_81 = arith.constant dense<0.000000e+00> : vector<1xf32>
    %168 = vector.multi_reduction <add>, %167, %cst_81 [0] : vector<2x1xf32> to vector<1xf32>
    %169 = vector.shape_cast %168 : vector<1xf32> to vector<1x1xf32>
    %cst_82 = arith.constant 5.120000e+02 : f32
    %170 = vector.broadcast %cst_82 : f32 to vector<1x1xf32>
    %171 = arith.divf %169, %170 : vector<1x1xf32>
    %172 = vector.broadcast %171 : vector<1x1xf32> to vector<2x384xf32>
    %173 = arith.subf %163, %172 : vector<2x384xf32>
    %174 = vector.broadcast %1 : vector<1x384xf32> to vector<2x384xf32>
    %175 = arith.mulf %173, %174 : vector<2x384xf32>
    %176 = arith.mulf %175, %175 : vector<2x384xf32>
    %cst_83 = arith.constant dense<0.000000e+00> : vector<2xf32>
    %177 = vector.multi_reduction <add>, %176, %cst_83 [1] : vector<2x384xf32> to vector<2xf32>
    %178 = vector.shape_cast %177 : vector<2xf32> to vector<2x1xf32>
    %cst_84 = arith.constant dense<0.000000e+00> : vector<1xf32>
    %179 = vector.multi_reduction <add>, %178, %cst_84 [0] : vector<2x1xf32> to vector<1xf32>
    %180 = vector.shape_cast %179 : vector<1xf32> to vector<1x1xf32>
    %cst_85 = arith.constant 5.120000e+02 : f32
    %181 = vector.broadcast %cst_85 : f32 to vector<1x1xf32>
    %182 = arith.divf %180, %181 : vector<1x1xf32>
    %cst_86 = arith.constant 9.99999974E-6 : f32
    %183 = vector.broadcast %cst_86 : f32 to vector<1x1xf32>
    %184 = arith.addf %182, %183 : vector<1x1xf32>
    %185 = math.rsqrt %184 : vector<1x1xf32>
    %186 = vector.broadcast %171 : vector<1x1xf32> to vector<2x384xf32>
    %187 = arith.subf %163, %186 : vector<2x384xf32>
    %188 = vector.broadcast %185 : vector<1x1xf32> to vector<2x384xf32>
    %189 = arith.mulf %187, %188 : vector<2x384xf32>
    %190 = vector.extract_strided_slice %6 {offsets = [6, 0], sizes = [2, 1], strides = [1, 1]} : vector<10x1xf32> to vector<2x1xf32>
    %191 = vector.broadcast %190 : vector<2x1xf32> to vector<2x384xf32>
    %192 = arith.mulf %189, %191 : vector<2x384xf32>
    %193 = vector.extract_strided_slice %7 {offsets = [6, 0], sizes = [2, 1], strides = [1, 1]} : vector<10x1xf32> to vector<2x1xf32>
    %194 = vector.broadcast %193 : vector<2x1xf32> to vector<2x384xf32>
    %195 = arith.addf %192, %194 : vector<2x384xf32>
    %196 = math.tanh %195 : vector<2x384xf32>
    %197 = vector.extract_strided_slice %196 {offsets = [0, 0], sizes = [1, 384], strides = [1, 1]} : vector<2x384xf32> to vector<1x384xf32>
    %198 = vector.extract_strided_slice %196 {offsets = [1, 0], sizes = [1, 384], strides = [1, 1]} : vector<2x384xf32> to vector<1x384xf32>
    %c8_87 = arith.constant 8 : index
    %c0_88 = arith.constant 0 : index
    %199 = vector.load %arg14[%c8_87, %c0_88] : memref<10x384xf32, #tpu.memory_space<vmem>>, vector<2x384xf32>
    %200 = vector.broadcast %1 : vector<1x384xf32> to vector<2x384xf32>
    %201 = arith.mulf %199, %200 : vector<2x384xf32>
    %cst_89 = arith.constant dense<0.000000e+00> : vector<2xf32>
    %202 = vector.multi_reduction <add>, %201, %cst_89 [1] : vector<2x384xf32> to vector<2xf32>
    %203 = vector.shape_cast %202 : vector<2xf32> to vector<2x1xf32>
    %cst_90 = arith.constant dense<0.000000e+00> : vector<1xf32>
    %204 = vector.multi_reduction <add>, %203, %cst_90 [0] : vector<2x1xf32> to vector<1xf32>
    %205 = vector.shape_cast %204 : vector<1xf32> to vector<1x1xf32>
    %cst_91 = arith.constant 5.120000e+02 : f32
    %206 = vector.broadcast %cst_91 : f32 to vector<1x1xf32>
    %207 = arith.divf %205, %206 : vector<1x1xf32>
    %208 = vector.broadcast %207 : vector<1x1xf32> to vector<2x384xf32>
    %209 = arith.subf %199, %208 : vector<2x384xf32>
    %210 = vector.broadcast %1 : vector<1x384xf32> to vector<2x384xf32>
    %211 = arith.mulf %209, %210 : vector<2x384xf32>
    %212 = arith.mulf %211, %211 : vector<2x384xf32>
    %cst_92 = arith.constant dense<0.000000e+00> : vector<2xf32>
    %213 = vector.multi_reduction <add>, %212, %cst_92 [1] : vector<2x384xf32> to vector<2xf32>
    %214 = vector.shape_cast %213 : vector<2xf32> to vector<2x1xf32>
    %cst_93 = arith.constant dense<0.000000e+00> : vector<1xf32>
    %215 = vector.multi_reduction <add>, %214, %cst_93 [0] : vector<2x1xf32> to vector<1xf32>
    %216 = vector.shape_cast %215 : vector<1xf32> to vector<1x1xf32>
    %cst_94 = arith.constant 5.120000e+02 : f32
    %217 = vector.broadcast %cst_94 : f32 to vector<1x1xf32>
    %218 = arith.divf %216, %217 : vector<1x1xf32>
    %cst_95 = arith.constant 9.99999974E-6 : f32
    %219 = vector.broadcast %cst_95 : f32 to vector<1x1xf32>
    %220 = arith.addf %218, %219 : vector<1x1xf32>
    %221 = math.rsqrt %220 : vector<1x1xf32>
    %222 = vector.extract_strided_slice %199 {offsets = [0, 0], sizes = [1, 384], strides = [1, 1]} : vector<2x384xf32> to vector<1x384xf32>
    %223 = vector.broadcast %207 : vector<1x1xf32> to vector<1x384xf32>
    %224 = arith.subf %222, %223 : vector<1x384xf32>
    %225 = vector.broadcast %221 : vector<1x1xf32> to vector<1x384xf32>
    %226 = arith.mulf %224, %225 : vector<1x384xf32>
    %227 = vector.extract_strided_slice %6 {offsets = [8, 0], sizes = [1, 1], strides = [1, 1]} : vector<10x1xf32> to vector<1x1xf32>
    %228 = vector.broadcast %227 : vector<1x1xf32> to vector<1x384xf32>
    %229 = arith.mulf %226, %228 : vector<1x384xf32>
    %230 = vector.extract_strided_slice %7 {offsets = [8, 0], sizes = [1, 1], strides = [1, 1]} : vector<10x1xf32> to vector<1x1xf32>
    %231 = vector.broadcast %230 : vector<1x1xf32> to vector<1x384xf32>
    %232 = arith.addf %229, %231 : vector<1x384xf32>
    %233 = math.tanh %232 : vector<1x384xf32>
    %cst_96 = arith.constant 0.000000e+00 : f32
    %234 = vector.broadcast %cst_96 : f32 to vector<1x384xf32>
    %235 = arith.addf %234, %162 : vector<1x384xf32>
    %cst_97 = arith.constant 1.000000e+00 : f32
    %236 = vector.broadcast %cst_97 : f32 to vector<1x384xf32>
    %237 = arith.mulf %236, %235 : vector<1x384xf32>
    %238 = arith.addf %0, %237 : vector<1x384xf32>
    %cst_98 = arith.constant 0.000000e+00 : f32
    %cst_99 = arith.constant 1.500000e+01 : f32
    %239 = vector.broadcast %cst_98 : f32 to vector<1x384xf32>
    %240 = arith.maximumf %239, %238 : vector<1x384xf32>
    %241 = vector.broadcast %cst_99 : f32 to vector<1x384xf32>
    %242 = arith.minimumf %241, %240 : vector<1x384xf32>
    %243 = arith.subf %242, %0 : vector<1x384xf32>
    %c5 = arith.constant 5 : index
    %c0_100 = arith.constant 0 : index
    %244 = vector.load %arg15[%c5, %c0_100] : memref<9x384xf32, #tpu.memory_space<vmem>>, vector<1x384xf32>
    tpu.vector_store %arg15[%c5, %c0_100], %243 {strides = array<i32>} : memref<9x384xf32, #tpu.memory_space<vmem>>, vector<1x384xf32>,
    %245 = arith.addf %235, %197 : vector<1x384xf32>
    %cst_101 = arith.constant 1.000000e+00 : f32
    %246 = vector.broadcast %cst_101 : f32 to vector<1x384xf32>
    %247 = arith.mulf %246, %245 : vector<1x384xf32>
    %248 = arith.addf %0, %247 : vector<1x384xf32>
    %cst_102 = arith.constant 0.000000e+00 : f32
    %cst_103 = arith.constant 1.500000e+01 : f32
    %249 = vector.broadcast %cst_102 : f32 to vector<1x384xf32>
    %250 = arith.maximumf %249, %248 : vector<1x384xf32>
    %251 = vector.broadcast %cst_103 : f32 to vector<1x384xf32>
    %252 = arith.minimumf %251, %250 : vector<1x384xf32>
    %253 = arith.subf %252, %0 : vector<1x384xf32>
    %c6_104 = arith.constant 6 : index
    %c0_105 = arith.constant 0 : index
    %254 = vector.load %arg15[%c6_104, %c0_105] : memref<9x384xf32, #tpu.memory_space<vmem>>, vector<1x384xf32>
    tpu.vector_store %arg15[%c6_104, %c0_105], %253 {strides = array<i32>} : memref<9x384xf32, #tpu.memory_space<vmem>>, vector<1x384xf32>,
    %255 = arith.addf %245, %198 : vector<1x384xf32>
    %cst_106 = arith.constant 1.000000e+00 : f32
    %256 = vector.broadcast %cst_106 : f32 to vector<1x384xf32>
    %257 = arith.mulf %256, %255 : vector<1x384xf32>
    %258 = arith.addf %0, %257 : vector<1x384xf32>
    %cst_107 = arith.constant 0.000000e+00 : f32
    %cst_108 = arith.constant 1.500000e+01 : f32
    %259 = vector.broadcast %cst_107 : f32 to vector<1x384xf32>
    %260 = arith.maximumf %259, %258 : vector<1x384xf32>
    %261 = vector.broadcast %cst_108 : f32 to vector<1x384xf32>
    %262 = arith.minimumf %261, %260 : vector<1x384xf32>
    %263 = arith.subf %262, %0 : vector<1x384xf32>
    %c7 = arith.constant 7 : index
    %c0_109 = arith.constant 0 : index
    %264 = vector.load %arg15[%c7, %c0_109] : memref<9x384xf32, #tpu.memory_space<vmem>>, vector<1x384xf32>
    tpu.vector_store %arg15[%c7, %c0_109], %263 {strides = array<i32>} : memref<9x384xf32, #tpu.memory_space<vmem>>, vector<1x384xf32>,
    %265 = arith.addf %255, %233 : vector<1x384xf32>
    %cst_110 = arith.constant 1.000000e+00 : f32
    %266 = vector.broadcast %cst_110 : f32 to vector<1x384xf32>
    %267 = arith.mulf %266, %265 : vector<1x384xf32>
    %268 = arith.addf %0, %267 : vector<1x384xf32>
    %cst_111 = arith.constant 0.000000e+00 : f32
    %cst_112 = arith.constant 1.500000e+01 : f32
    %269 = vector.broadcast %cst_111 : f32 to vector<1x384xf32>
    %270 = arith.maximumf %269, %268 : vector<1x384xf32>
    %271 = vector.broadcast %cst_112 : f32 to vector<1x384xf32>
    %272 = arith.minimumf %271, %270 : vector<1x384xf32>
    %273 = arith.subf %272, %0 : vector<1x384xf32>
    %c8_113 = arith.constant 8 : index
    %c0_114 = arith.constant 0 : index
    %274 = vector.load %arg15[%c8_113, %c0_114] : memref<9x384xf32, #tpu.memory_space<vmem>>, vector<1x384xf32>
    tpu.vector_store %arg15[%c8_113, %c0_114], %273 {strides = array<i32>} : memref<9x384xf32, #tpu.memory_space<vmem>>, vector<1x384xf32>,
    %cst_115 = arith.constant 0.000000e+00 : f32
    %275 = vector.broadcast %cst_115 : f32 to vector<1x384xf32>
    %276 = arith.addf %275, %127 : vector<1x384xf32>
    %cst_116 = arith.constant 1.000000e+00 : f32
    %277 = vector.broadcast %cst_116 : f32 to vector<1x384xf32>
    %278 = arith.mulf %277, %276 : vector<1x384xf32>
    %279 = arith.addf %0, %278 : vector<1x384xf32>
    %cst_117 = arith.constant 0.000000e+00 : f32
    %cst_118 = arith.constant 1.500000e+01 : f32
    %280 = vector.broadcast %cst_117 : f32 to vector<1x384xf32>
    %281 = arith.maximumf %280, %279 : vector<1x384xf32>
    %282 = vector.broadcast %cst_118 : f32 to vector<1x384xf32>
    %283 = arith.minimumf %282, %281 : vector<1x384xf32>
    %284 = arith.subf %283, %0 : vector<1x384xf32>
    %c3_119 = arith.constant 3 : index
    %c0_120 = arith.constant 0 : index
    %285 = vector.load %arg15[%c3_119, %c0_120] : memref<9x384xf32, #tpu.memory_space<vmem>>, vector<1x384xf32>
    tpu.vector_store %arg15[%c3_119, %c0_120], %284 {strides = array<i32>} : memref<9x384xf32, #tpu.memory_space<vmem>>, vector<1x384xf32>,
    %286 = arith.addf %276, %126 : vector<1x384xf32>
    %cst_121 = arith.constant 1.000000e+00 : f32
    %287 = vector.broadcast %cst_121 : f32 to vector<1x384xf32>
    %288 = arith.mulf %287, %286 : vector<1x384xf32>
    %289 = arith.addf %0, %288 : vector<1x384xf32>
    %cst_122 = arith.constant 0.000000e+00 : f32
    %cst_123 = arith.constant 1.500000e+01 : f32
    %290 = vector.broadcast %cst_122 : f32 to vector<1x384xf32>
    %291 = arith.maximumf %290, %289 : vector<1x384xf32>
    %292 = vector.broadcast %cst_123 : f32 to vector<1x384xf32>
    %293 = arith.minimumf %292, %291 : vector<1x384xf32>
    %294 = arith.subf %293, %0 : vector<1x384xf32>
    %c2_124 = arith.constant 2 : index
    %c0_125 = arith.constant 0 : index
    %295 = vector.load %arg15[%c2_124, %c0_125] : memref<9x384xf32, #tpu.memory_space<vmem>>, vector<1x384xf32>
    tpu.vector_store %arg15[%c2_124, %c0_125], %294 {strides = array<i32>} : memref<9x384xf32, #tpu.memory_space<vmem>>, vector<1x384xf32>,
    %296 = arith.addf %286, %91 : vector<1x384xf32>
    %cst_126 = arith.constant 1.000000e+00 : f32
    %297 = vector.broadcast %cst_126 : f32 to vector<1x384xf32>
    %298 = arith.mulf %297, %296 : vector<1x384xf32>
    %299 = arith.addf %0, %298 : vector<1x384xf32>
    %cst_127 = arith.constant 0.000000e+00 : f32
    %cst_128 = arith.constant 1.500000e+01 : f32
    %300 = vector.broadcast %cst_127 : f32 to vector<1x384xf32>
    %301 = arith.maximumf %300, %299 : vector<1x384xf32>
    %302 = vector.broadcast %cst_128 : f32 to vector<1x384xf32>
    %303 = arith.minimumf %302, %301 : vector<1x384xf32>
    %304 = arith.subf %303, %0 : vector<1x384xf32>
    %c1_129 = arith.constant 1 : index
    %c0_130 = arith.constant 0 : index
    %305 = vector.load %arg15[%c1_129, %c0_130] : memref<9x384xf32, #tpu.memory_space<vmem>>, vector<1x384xf32>
    tpu.vector_store %arg15[%c1_129, %c0_130], %304 {strides = array<i32>} : memref<9x384xf32, #tpu.memory_space<vmem>>, vector<1x384xf32>,
    %306 = arith.addf %296, %90 : vector<1x384xf32>
    %cst_131 = arith.constant 1.000000e+00 : f32
    %307 = vector.broadcast %cst_131 : f32 to vector<1x384xf32>
    %308 = arith.mulf %307, %306 : vector<1x384xf32>
    %309 = arith.addf %0, %308 : vector<1x384xf32>
    %cst_132 = arith.constant 0.000000e+00 : f32
    %cst_133 = arith.constant 1.500000e+01 : f32
    %310 = vector.broadcast %cst_132 : f32 to vector<1x384xf32>
    %311 = arith.maximumf %310, %309 : vector<1x384xf32>
    %312 = vector.broadcast %cst_133 : f32 to vector<1x384xf32>
    %313 = arith.minimumf %312, %311 : vector<1x384xf32>
    %314 = arith.subf %313, %0 : vector<1x384xf32>
    %c0_134 = arith.constant 0 : index
    %c0_135 = arith.constant 0 : index
    %315 = vector.load %arg15[%c0_134, %c0_135] : memref<9x384xf32, #tpu.memory_space<vmem>>, vector<1x384xf32>
    tpu.vector_store %arg15[%c0_134, %c0_135], %314 {strides = array<i32>} : memref<9x384xf32, #tpu.memory_space<vmem>>, vector<1x384xf32>,
    %c0_136 = arith.constant 0 : index
    %c0_137 = arith.constant 0 : index
    %316 = vector.load %arg15[%c0_136, %c0_137] : memref<9x384xf32, #tpu.memory_space<vmem>>, vector<1x384xf32>
    %cst_138 = arith.constant 0.000000e+00 : f32
    %317 = vector.broadcast %cst_138 : f32 to vector<4x384xf32>
    %cst_139 = arith.constant -4.000000e+00 : f32
    %318 = vector.broadcast %cst_139 : f32 to vector<1x384xf32>
    %319 = arith.subf %316, %318 : vector<1x384xf32>
    %320 = math.absf %319 : vector<1x384xf32>
    %cst_140 = arith.constant 1.000000e+00 : f32
    %321 = vector.broadcast %cst_140 : f32 to vector<1x384xf32>
    %322 = arith.subf %321, %320 : vector<1x384xf32>
    %cst_141 = arith.constant 0.000000e+00 : f32
    %323 = vector.broadcast %cst_141 : f32 to vector<1x384xf32>
    %324 = arith.maximumf %322, %323 : vector<1x384xf32>
    %c0_142 = arith.constant 0 : index
    %c0_143 = arith.constant 0 : index
    %c20_144 = arith.constant 20 : index
    %325 = vector.load %arg1[%c0_142, %c0_143, %c20_144] : memref<1x4x648xf32, #tpu.memory_space<vmem>>, vector<1x4x384xf32>
    %326 = vector.shape_cast %325 : vector<1x4x384xf32> to vector<4x384xf32>
    %327 = vector.broadcast %324 : vector<1x384xf32> to vector<4x384xf32>
    %328 = arith.mulf %327, %326 : vector<4x384xf32>
    %329 = arith.addf %317, %328 : vector<4x384xf32>
    %cst_145 = arith.constant -3.000000e+00 : f32
    %330 = vector.broadcast %cst_145 : f32 to vector<1x384xf32>
    %331 = arith.subf %316, %330 : vector<1x384xf32>
    %332 = math.absf %331 : vector<1x384xf32>
    %cst_146 = arith.constant 1.000000e+00 : f32
    %333 = vector.broadcast %cst_146 : f32 to vector<1x384xf32>
    %334 = arith.subf %333, %332 : vector<1x384xf32>
    %cst_147 = arith.constant 0.000000e+00 : f32
    %335 = vector.broadcast %cst_147 : f32 to vector<1x384xf32>
    %336 = arith.maximumf %334, %335 : vector<1x384xf32>
    %c0_148 = arith.constant 0 : index
    %c0_149 = arith.constant 0 : index
    %c44 = arith.constant 44 : index
    %337 = vector.load %arg1[%c0_148, %c0_149, %c44] : memref<1x4x648xf32, #tpu.memory_space<vmem>>, vector<1x4x384xf32>
    %338 = vector.shape_cast %337 : vector<1x4x384xf32> to vector<4x384xf32>
    %339 = vector.broadcast %336 : vector<1x384xf32> to vector<4x384xf32>
    %340 = arith.mulf %339, %338 : vector<4x384xf32>
    %341 = arith.addf %329, %340 : vector<4x384xf32>
    %cst_150 = arith.constant -2.000000e+00 : f32
    %342 = vector.broadcast %cst_150 : f32 to vector<1x384xf32>
    %343 = arith.subf %316, %342 : vector<1x384xf32>
    %344 = math.absf %343 : vector<1x384xf32>
    %cst_151 = arith.constant 1.000000e+00 : f32
    %345 = vector.broadcast %cst_151 : f32 to vector<1x384xf32>
    %346 = arith.subf %345, %344 : vector<1x384xf32>
    %cst_152 = arith.constant 0.000000e+00 : f32
    %347 = vector.broadcast %cst_152 : f32 to vector<1x384xf32>
    %348 = arith.maximumf %346, %347 : vector<1x384xf32>
    %c0_153 = arith.constant 0 : index
    %c0_154 = arith.constant 0 : index
    %c68 = arith.constant 68 : index
    %349 = vector.load %arg1[%c0_153, %c0_154, %c68] : memref<1x4x648xf32, #tpu.memory_space<vmem>>, vector<1x4x384xf32>
    %350 = vector.shape_cast %349 : vector<1x4x384xf32> to vector<4x384xf32>
    %351 = vector.broadcast %348 : vector<1x384xf32> to vector<4x384xf32>
    %352 = arith.mulf %351, %350 : vector<4x384xf32>
    %353 = arith.addf %341, %352 : vector<4x384xf32>
    %cst_155 = arith.constant -1.000000e+00 : f32
    %354 = vector.broadcast %cst_155 : f32 to vector<1x384xf32>
    %355 = arith.subf %316, %354 : vector<1x384xf32>
    %356 = math.absf %355 : vector<1x384xf32>
    %cst_156 = arith.constant 1.000000e+00 : f32
    %357 = vector.broadcast %cst_156 : f32 to vector<1x384xf32>
    %358 = arith.subf %357, %356 : vector<1x384xf32>
    %cst_157 = arith.constant 0.000000e+00 : f32
    %359 = vector.broadcast %cst_157 : f32 to vector<1x384xf32>
    %360 = arith.maximumf %358, %359 : vector<1x384xf32>
    %c0_158 = arith.constant 0 : index
    %c0_159 = arith.constant 0 : index
    %c92 = arith.constant 92 : index
    %361 = vector.load %arg1[%c0_158, %c0_159, %c92] : memref<1x4x648xf32, #tpu.memory_space<vmem>>, vector<1x4x384xf32>
    %362 = vector.shape_cast %361 : vector<1x4x384xf32> to vector<4x384xf32>
    %363 = vector.broadcast %360 : vector<1x384xf32> to vector<4x384xf32>
    %364 = arith.mulf %363, %362 : vector<4x384xf32>
    %365 = arith.addf %353, %364 : vector<4x384xf32>
    %cst_160 = arith.constant 0.000000e+00 : f32
    %366 = vector.broadcast %cst_160 : f32 to vector<1x384xf32>
    %367 = arith.subf %316, %366 : vector<1x384xf32>
    %368 = math.absf %367 : vector<1x384xf32>
    %cst_161 = arith.constant 1.000000e+00 : f32
    %369 = vector.broadcast %cst_161 : f32 to vector<1x384xf32>
    %370 = arith.subf %369, %368 : vector<1x384xf32>
    %cst_162 = arith.constant 0.000000e+00 : f32
    %371 = vector.broadcast %cst_162 : f32 to vector<1x384xf32>
    %372 = arith.maximumf %370, %371 : vector<1x384xf32>
    %c0_163 = arith.constant 0 : index
    %c0_164 = arith.constant 0 : index
    %c116 = arith.constant 116 : index
    %373 = vector.load %arg1[%c0_163, %c0_164, %c116] : memref<1x4x648xf32, #tpu.memory_space<vmem>>, vector<1x4x384xf32>
    %374 = vector.shape_cast %373 : vector<1x4x384xf32> to vector<4x384xf32>
    %375 = vector.broadcast %372 : vector<1x384xf32> to vector<4x384xf32>
    %376 = arith.mulf %375, %374 : vector<4x384xf32>
    %377 = arith.addf %365, %376 : vector<4x384xf32>
    %cst_165 = arith.constant 1.000000e+00 : f32
    %378 = vector.broadcast %cst_165 : f32 to vector<1x384xf32>
    %379 = arith.subf %316, %378 : vector<1x384xf32>
    %380 = math.absf %379 : vector<1x384xf32>
    %cst_166 = arith.constant 1.000000e+00 : f32
    %381 = vector.broadcast %cst_166 : f32 to vector<1x384xf32>
    %382 = arith.subf %381, %380 : vector<1x384xf32>
    %cst_167 = arith.constant 0.000000e+00 : f32
    %383 = vector.broadcast %cst_167 : f32 to vector<1x384xf32>
    %384 = arith.maximumf %382, %383 : vector<1x384xf32>
    %c0_168 = arith.constant 0 : index
    %c0_169 = arith.constant 0 : index
    %c140 = arith.constant 140 : index
    %385 = vector.load %arg1[%c0_168, %c0_169, %c140] : memref<1x4x648xf32, #tpu.memory_space<vmem>>, vector<1x4x384xf32>
    %386 = vector.shape_cast %385 : vector<1x4x384xf32> to vector<4x384xf32>
    %387 = vector.broadcast %384 : vector<1x384xf32> to vector<4x384xf32>
    %388 = arith.mulf %387, %386 : vector<4x384xf32>
    %389 = arith.addf %377, %388 : vector<4x384xf32>
    %cst_170 = arith.constant 2.000000e+00 : f32
    %390 = vector.broadcast %cst_170 : f32 to vector<1x384xf32>
    %391 = arith.subf %316, %390 : vector<1x384xf32>
    %392 = math.absf %391 : vector<1x384xf32>
    %cst_171 = arith.constant 1.000000e+00 : f32
    %393 = vector.broadcast %cst_171 : f32 to vector<1x384xf32>
    %394 = arith.subf %393, %392 : vector<1x384xf32>
    %cst_172 = arith.constant 0.000000e+00 : f32
    %395 = vector.broadcast %cst_172 : f32 to vector<1x384xf32>
    %396 = arith.maximumf %394, %395 : vector<1x384xf32>
    %c0_173 = arith.constant 0 : index
    %c0_174 = arith.constant 0 : index
    %c164 = arith.constant 164 : index
    %397 = vector.load %arg1[%c0_173, %c0_174, %c164] : memref<1x4x648xf32, #tpu.memory_space<vmem>>, vector<1x4x384xf32>
    %398 = vector.shape_cast %397 : vector<1x4x384xf32> to vector<4x384xf32>
    %399 = vector.broadcast %396 : vector<1x384xf32> to vector<4x384xf32>
    %400 = arith.mulf %399, %398 : vector<4x384xf32>
    %401 = arith.addf %389, %400 : vector<4x384xf32>
    %cst_175 = arith.constant 3.000000e+00 : f32
    %402 = vector.broadcast %cst_175 : f32 to vector<1x384xf32>
    %403 = arith.subf %316, %402 : vector<1x384xf32>
    %404 = math.absf %403 : vector<1x384xf32>
    %cst_176 = arith.constant 1.000000e+00 : f32
    %405 = vector.broadcast %cst_176 : f32 to vector<1x384xf32>
    %406 = arith.subf %405, %404 : vector<1x384xf32>
    %cst_177 = arith.constant 0.000000e+00 : f32
    %407 = vector.broadcast %cst_177 : f32 to vector<1x384xf32>
    %408 = arith.maximumf %406, %407 : vector<1x384xf32>
    %c0_178 = arith.constant 0 : index
    %c0_179 = arith.constant 0 : index
    %c188 = arith.constant 188 : index
    %409 = vector.load %arg1[%c0_178, %c0_179, %c188] : memref<1x4x648xf32, #tpu.memory_space<vmem>>, vector<1x4x384xf32>
    %410 = vector.shape_cast %409 : vector<1x4x384xf32> to vector<4x384xf32>
    %411 = vector.broadcast %408 : vector<1x384xf32> to vector<4x384xf32>
    %412 = arith.mulf %411, %410 : vector<4x384xf32>
    %413 = arith.addf %401, %412 : vector<4x384xf32>
    %cst_180 = arith.constant 4.000000e+00 : f32
    %414 = vector.broadcast %cst_180 : f32 to vector<1x384xf32>
    %415 = arith.subf %316, %414 : vector<1x384xf32>
    %416 = math.absf %415 : vector<1x384xf32>
    %cst_181 = arith.constant 1.000000e+00 : f32
    %417 = vector.broadcast %cst_181 : f32 to vector<1x384xf32>
    %418 = arith.subf %417, %416 : vector<1x384xf32>
    %cst_182 = arith.constant 0.000000e+00 : f32
    %419 = vector.broadcast %cst_182 : f32 to vector<1x384xf32>
    %420 = arith.maximumf %418, %419 : vector<1x384xf32>
    %c0_183 = arith.constant 0 : index
    %c0_184 = arith.constant 0 : index
    %c212 = arith.constant 212 : index
    %421 = vector.load %arg1[%c0_183, %c0_184, %c212] : memref<1x4x648xf32, #tpu.memory_space<vmem>>, vector<1x4x384xf32>
    %422 = vector.shape_cast %421 : vector<1x4x384xf32> to vector<4x384xf32>
    %423 = vector.broadcast %420 : vector<1x384xf32> to vector<4x384xf32>
    %424 = arith.mulf %423, %422 : vector<4x384xf32>
    %425 = arith.addf %413, %424 : vector<4x384xf32>
    %cst_185 = arith.constant 5.000000e+00 : f32
    %426 = vector.broadcast %cst_185 : f32 to vector<1x384xf32>
    %427 = arith.subf %316, %426 : vector<1x384xf32>
    %428 = math.absf %427 : vector<1x384xf32>
    %cst_186 = arith.constant 1.000000e+00 : f32
    %429 = vector.broadcast %cst_186 : f32 to vector<1x384xf32>
    %430 = arith.subf %429, %428 : vector<1x384xf32>
    %cst_187 = arith.constant 0.000000e+00 : f32
    %431 = vector.broadcast %cst_187 : f32 to vector<1x384xf32>
    %432 = arith.maximumf %430, %431 : vector<1x384xf32>
    %c0_188 = arith.constant 0 : index
    %c0_189 = arith.constant 0 : index
    %c236 = arith.constant 236 : index
    %433 = vector.load %arg1[%c0_188, %c0_189, %c236] : memref<1x4x648xf32, #tpu.memory_space<vmem>>, vector<1x4x384xf32>
    %434 = vector.shape_cast %433 : vector<1x4x384xf32> to vector<4x384xf32>
    %435 = vector.broadcast %432 : vector<1x384xf32> to vector<4x384xf32>
    %436 = arith.mulf %435, %434 : vector<4x384xf32>
    %437 = arith.addf %425, %436 : vector<4x384xf32>
    %c0_190 = arith.constant 0 : index
    %c0_191 = arith.constant 0 : index
    %438 = vector.load %arg13[%c0_190, %c0_191] : memref<36x384xf32, #tpu.memory_space<vmem>>, vector<4x384xf32>
    tpu.vector_store %arg13[%c0_190, %c0_191], %437 {strides = array<i32>} : memref<36x384xf32, #tpu.memory_space<vmem>>, vector<4x384xf32>,
    %c1_192 = arith.constant 1 : index
    %c0_193 = arith.constant 0 : index
    %439 = vector.load %arg15[%c1_192, %c0_193] : memref<9x384xf32, #tpu.memory_space<vmem>>, vector<1x384xf32>
    %cst_194 = arith.constant 0.000000e+00 : f32
    %440 = vector.broadcast %cst_194 : f32 to vector<4x384xf32>
    %cst_195 = arith.constant -3.000000e+00 : f32
    %441 = vector.broadcast %cst_195 : f32 to vector<1x384xf32>
    %442 = arith.subf %439, %441 : vector<1x384xf32>
    %443 = math.absf %442 : vector<1x384xf32>
    %cst_196 = arith.constant 1.000000e+00 : f32
    %444 = vector.broadcast %cst_196 : f32 to vector<1x384xf32>
    %445 = arith.subf %444, %443 : vector<1x384xf32>
    %cst_197 = arith.constant 0.000000e+00 : f32
    %446 = vector.broadcast %cst_197 : f32 to vector<1x384xf32>
    %447 = arith.maximumf %445, %446 : vector<1x384xf32>
    %c0_198 = arith.constant 0 : index
    %c0_199 = arith.constant 0 : index
    %c45 = arith.constant 45 : index
    %448 = vector.load %arg1[%c0_198, %c0_199, %c45] : memref<1x4x648xf32, #tpu.memory_space<vmem>>, vector<1x4x384xf32>
    %449 = vector.shape_cast %448 : vector<1x4x384xf32> to vector<4x384xf32>
    %450 = vector.broadcast %447 : vector<1x384xf32> to vector<4x384xf32>
    %451 = arith.mulf %450, %449 : vector<4x384xf32>
    %452 = arith.addf %440, %451 : vector<4x384xf32>
    %cst_200 = arith.constant -2.000000e+00 : f32
    %453 = vector.broadcast %cst_200 : f32 to vector<1x384xf32>
    %454 = arith.subf %439, %453 : vector<1x384xf32>
    %455 = math.absf %454 : vector<1x384xf32>
    %cst_201 = arith.constant 1.000000e+00 : f32
    %456 = vector.broadcast %cst_201 : f32 to vector<1x384xf32>
    %457 = arith.subf %456, %455 : vector<1x384xf32>
    %cst_202 = arith.constant 0.000000e+00 : f32
    %458 = vector.broadcast %cst_202 : f32 to vector<1x384xf32>
    %459 = arith.maximumf %457, %458 : vector<1x384xf32>
    %c0_203 = arith.constant 0 : index
    %c0_204 = arith.constant 0 : index
    %c69 = arith.constant 69 : index
    %460 = vector.load %arg1[%c0_203, %c0_204, %c69] : memref<1x4x648xf32, #tpu.memory_space<vmem>>, vector<1x4x384xf32>
    %461 = vector.shape_cast %460 : vector<1x4x384xf32> to vector<4x384xf32>
    %462 = vector.broadcast %459 : vector<1x384xf32> to vector<4x384xf32>
    %463 = arith.mulf %462, %461 : vector<4x384xf32>
    %464 = arith.addf %452, %463 : vector<4x384xf32>
    %cst_205 = arith.constant -1.000000e+00 : f32
    %465 = vector.broadcast %cst_205 : f32 to vector<1x384xf32>
    %466 = arith.subf %439, %465 : vector<1x384xf32>
    %467 = math.absf %466 : vector<1x384xf32>
    %cst_206 = arith.constant 1.000000e+00 : f32
    %468 = vector.broadcast %cst_206 : f32 to vector<1x384xf32>
    %469 = arith.subf %468, %467 : vector<1x384xf32>
    %cst_207 = arith.constant 0.000000e+00 : f32
    %470 = vector.broadcast %cst_207 : f32 to vector<1x384xf32>
    %471 = arith.maximumf %469, %470 : vector<1x384xf32>
    %c0_208 = arith.constant 0 : index
    %c0_209 = arith.constant 0 : index
    %c93 = arith.constant 93 : index
    %472 = vector.load %arg1[%c0_208, %c0_209, %c93] : memref<1x4x648xf32, #tpu.memory_space<vmem>>, vector<1x4x384xf32>
    %473 = vector.shape_cast %472 : vector<1x4x384xf32> to vector<4x384xf32>
    %474 = vector.broadcast %471 : vector<1x384xf32> to vector<4x384xf32>
    %475 = arith.mulf %474, %473 : vector<4x384xf32>
    %476 = arith.addf %464, %475 : vector<4x384xf32>
    %cst_210 = arith.constant 0.000000e+00 : f32
    %477 = vector.broadcast %cst_210 : f32 to vector<1x384xf32>
    %478 = arith.subf %439, %477 : vector<1x384xf32>
    %479 = math.absf %478 : vector<1x384xf32>
    %cst_211 = arith.constant 1.000000e+00 : f32
    %480 = vector.broadcast %cst_211 : f32 to vector<1x384xf32>
    %481 = arith.subf %480, %479 : vector<1x384xf32>
    %cst_212 = arith.constant 0.000000e+00 : f32
    %482 = vector.broadcast %cst_212 : f32 to vector<1x384xf32>
    %483 = arith.maximumf %481, %482 : vector<1x384xf32>
    %c0_213 = arith.constant 0 : index
    %c0_214 = arith.constant 0 : index
    %c117 = arith.constant 117 : index
    %484 = vector.load %arg1[%c0_213, %c0_214, %c117] : memref<1x4x648xf32, #tpu.memory_space<vmem>>, vector<1x4x384xf32>
    %485 = vector.shape_cast %484 : vector<1x4x384xf32> to vector<4x384xf32>
    %486 = vector.broadcast %483 : vector<1x384xf32> to vector<4x384xf32>
    %487 = arith.mulf %486, %485 : vector<4x384xf32>
    %488 = arith.addf %476, %487 : vector<4x384xf32>
    %cst_215 = arith.constant 1.000000e+00 : f32
    %489 = vector.broadcast %cst_215 : f32 to vector<1x384xf32>
    %490 = arith.subf %439, %489 : vector<1x384xf32>
    %491 = math.absf %490 : vector<1x384xf32>
    %cst_216 = arith.constant 1.000000e+00 : f32
    %492 = vector.broadcast %cst_216 : f32 to vector<1x384xf32>
    %493 = arith.subf %492, %491 : vector<1x384xf32>
    %cst_217 = arith.constant 0.000000e+00 : f32
    %494 = vector.broadcast %cst_217 : f32 to vector<1x384xf32>
    %495 = arith.maximumf %493, %494 : vector<1x384xf32>
    %c0_218 = arith.constant 0 : index
    %c0_219 = arith.constant 0 : index
    %c141 = arith.constant 141 : index
    %496 = vector.load %arg1[%c0_218, %c0_219, %c141] : memref<1x4x648xf32, #tpu.memory_space<vmem>>, vector<1x4x384xf32>
    %497 = vector.shape_cast %496 : vector<1x4x384xf32> to vector<4x384xf32>
    %498 = vector.broadcast %495 : vector<1x384xf32> to vector<4x384xf32>
    %499 = arith.mulf %498, %497 : vector<4x384xf32>
    %500 = arith.addf %488, %499 : vector<4x384xf32>
    %cst_220 = arith.constant 2.000000e+00 : f32
    %501 = vector.broadcast %cst_220 : f32 to vector<1x384xf32>
    %502 = arith.subf %439, %501 : vector<1x384xf32>
    %503 = math.absf %502 : vector<1x384xf32>
    %cst_221 = arith.constant 1.000000e+00 : f32
    %504 = vector.broadcast %cst_221 : f32 to vector<1x384xf32>
    %505 = arith.subf %504, %503 : vector<1x384xf32>
    %cst_222 = arith.constant 0.000000e+00 : f32
    %506 = vector.broadcast %cst_222 : f32 to vector<1x384xf32>
    %507 = arith.maximumf %505, %506 : vector<1x384xf32>
    %c0_223 = arith.constant 0 : index
    %c0_224 = arith.constant 0 : index
    %c165 = arith.constant 165 : index
    %508 = vector.load %arg1[%c0_223, %c0_224, %c165] : memref<1x4x648xf32, #tpu.memory_space<vmem>>, vector<1x4x384xf32>
    %509 = vector.shape_cast %508 : vector<1x4x384xf32> to vector<4x384xf32>
    %510 = vector.broadcast %507 : vector<1x384xf32> to vector<4x384xf32>
    %511 = arith.mulf %510, %509 : vector<4x384xf32>
    %512 = arith.addf %500, %511 : vector<4x384xf32>
    %cst_225 = arith.constant 3.000000e+00 : f32
    %513 = vector.broadcast %cst_225 : f32 to vector<1x384xf32>
    %514 = arith.subf %439, %513 : vector<1x384xf32>
    %515 = math.absf %514 : vector<1x384xf32>
    %cst_226 = arith.constant 1.000000e+00 : f32
    %516 = vector.broadcast %cst_226 : f32 to vector<1x384xf32>
    %517 = arith.subf %516, %515 : vector<1x384xf32>
    %cst_227 = arith.constant 0.000000e+00 : f32
    %518 = vector.broadcast %cst_227 : f32 to vector<1x384xf32>
    %519 = arith.maximumf %517, %518 : vector<1x384xf32>
    %c0_228 = arith.constant 0 : index
    %c0_229 = arith.constant 0 : index
    %c189 = arith.constant 189 : index
    %520 = vector.load %arg1[%c0_228, %c0_229, %c189] : memref<1x4x648xf32, #tpu.memory_space<vmem>>, vector<1x4x384xf32>
    %521 = vector.shape_cast %520 : vector<1x4x384xf32> to vector<4x384xf32>
    %522 = vector.broadcast %519 : vector<1x384xf32> to vector<4x384xf32>
    %523 = arith.mulf %522, %521 : vector<4x384xf32>
    %524 = arith.addf %512, %523 : vector<4x384xf32>
    %cst_230 = arith.constant 4.000000e+00 : f32
    %525 = vector.broadcast %cst_230 : f32 to vector<1x384xf32>
    %526 = arith.subf %439, %525 : vector<1x384xf32>
    %527 = math.absf %526 : vector<1x384xf32>
    %cst_231 = arith.constant 1.000000e+00 : f32
    %528 = vector.broadcast %cst_231 : f32 to vector<1x384xf32>
    %529 = arith.subf %528, %527 : vector<1x384xf32>
    %cst_232 = arith.constant 0.000000e+00 : f32
    %530 = vector.broadcast %cst_232 : f32 to vector<1x384xf32>
    %531 = arith.maximumf %529, %530 : vector<1x384xf32>
    %c0_233 = arith.constant 0 : index
    %c0_234 = arith.constant 0 : index
    %c213 = arith.constant 213 : index
    %532 = vector.load %arg1[%c0_233, %c0_234, %c213] : memref<1x4x648xf32, #tpu.memory_space<vmem>>, vector<1x4x384xf32>
    %533 = vector.shape_cast %532 : vector<1x4x384xf32> to vector<4x384xf32>
    %534 = vector.broadcast %531 : vector<1x384xf32> to vector<4x384xf32>
    %535 = arith.mulf %534, %533 : vector<4x384xf32>
    %536 = arith.addf %524, %535 : vector<4x384xf32>
    %c4_235 = arith.constant 4 : index
    %c0_236 = arith.constant 0 : index
    %537 = vector.load %arg13[%c4_235, %c0_236] : memref<36x384xf32, #tpu.memory_space<vmem>>, vector<4x384xf32>
    tpu.vector_store %arg13[%c4_235, %c0_236], %536 {strides = array<i32>} : memref<36x384xf32, #tpu.memory_space<vmem>>, vector<4x384xf32>,
    %c2_237 = arith.constant 2 : index
    %c0_238 = arith.constant 0 : index
    %538 = vector.load %arg15[%c2_237, %c0_238] : memref<9x384xf32, #tpu.memory_space<vmem>>, vector<1x384xf32>
    %cst_239 = arith.constant 0.000000e+00 : f32
    %539 = vector.broadcast %cst_239 : f32 to vector<4x384xf32>
    %cst_240 = arith.constant -2.000000e+00 : f32
    %540 = vector.broadcast %cst_240 : f32 to vector<1x384xf32>
    %541 = arith.subf %538, %540 : vector<1x384xf32>
    %542 = math.absf %541 : vector<1x384xf32>
    %cst_241 = arith.constant 1.000000e+00 : f32
    %543 = vector.broadcast %cst_241 : f32 to vector<1x384xf32>
    %544 = arith.subf %543, %542 : vector<1x384xf32>
    %cst_242 = arith.constant 0.000000e+00 : f32
    %545 = vector.broadcast %cst_242 : f32 to vector<1x384xf32>
    %546 = arith.maximumf %544, %545 : vector<1x384xf32>
    %c0_243 = arith.constant 0 : index
    %c0_244 = arith.constant 0 : index
    %c70 = arith.constant 70 : index
    %547 = vector.load %arg1[%c0_243, %c0_244, %c70] : memref<1x4x648xf32, #tpu.memory_space<vmem>>, vector<1x4x384xf32>
    %548 = vector.shape_cast %547 : vector<1x4x384xf32> to vector<4x384xf32>
    %549 = vector.broadcast %546 : vector<1x384xf32> to vector<4x384xf32>
    %550 = arith.mulf %549, %548 : vector<4x384xf32>
    %551 = arith.addf %539, %550 : vector<4x384xf32>
    %cst_245 = arith.constant -1.000000e+00 : f32
    %552 = vector.broadcast %cst_245 : f32 to vector<1x384xf32>
    %553 = arith.subf %538, %552 : vector<1x384xf32>
    %554 = math.absf %553 : vector<1x384xf32>
    %cst_246 = arith.constant 1.000000e+00 : f32
    %555 = vector.broadcast %cst_246 : f32 to vector<1x384xf32>
    %556 = arith.subf %555, %554 : vector<1x384xf32>
    %cst_247 = arith.constant 0.000000e+00 : f32
    %557 = vector.broadcast %cst_247 : f32 to vector<1x384xf32>
    %558 = arith.maximumf %556, %557 : vector<1x384xf32>
    %c0_248 = arith.constant 0 : index
    %c0_249 = arith.constant 0 : index
    %c94 = arith.constant 94 : index
    %559 = vector.load %arg1[%c0_248, %c0_249, %c94] : memref<1x4x648xf32, #tpu.memory_space<vmem>>, vector<1x4x384xf32>
    %560 = vector.shape_cast %559 : vector<1x4x384xf32> to vector<4x384xf32>
    %561 = vector.broadcast %558 : vector<1x384xf32> to vector<4x384xf32>
    %562 = arith.mulf %561, %560 : vector<4x384xf32>
    %563 = arith.addf %551, %562 : vector<4x384xf32>
    %cst_250 = arith.constant 0.000000e+00 : f32
    %564 = vector.broadcast %cst_250 : f32 to vector<1x384xf32>
    %565 = arith.subf %538, %564 : vector<1x384xf32>
    %566 = math.absf %565 : vector<1x384xf32>
    %cst_251 = arith.constant 1.000000e+00 : f32
    %567 = vector.broadcast %cst_251 : f32 to vector<1x384xf32>
    %568 = arith.subf %567, %566 : vector<1x384xf32>
    %cst_252 = arith.constant 0.000000e+00 : f32
    %569 = vector.broadcast %cst_252 : f32 to vector<1x384xf32>
    %570 = arith.maximumf %568, %569 : vector<1x384xf32>
    %c0_253 = arith.constant 0 : index
    %c0_254 = arith.constant 0 : index
    %c118 = arith.constant 118 : index
    %571 = vector.load %arg1[%c0_253, %c0_254, %c118] : memref<1x4x648xf32, #tpu.memory_space<vmem>>, vector<1x4x384xf32>
    %572 = vector.shape_cast %571 : vector<1x4x384xf32> to vector<4x384xf32>
    %573 = vector.broadcast %570 : vector<1x384xf32> to vector<4x384xf32>
    %574 = arith.mulf %573, %572 : vector<4x384xf32>
    %575 = arith.addf %563, %574 : vector<4x384xf32>
    %cst_255 = arith.constant 1.000000e+00 : f32
    %576 = vector.broadcast %cst_255 : f32 to vector<1x384xf32>
    %577 = arith.subf %538, %576 : vector<1x384xf32>
    %578 = math.absf %577 : vector<1x384xf32>
    %cst_256 = arith.constant 1.000000e+00 : f32
    %579 = vector.broadcast %cst_256 : f32 to vector<1x384xf32>
    %580 = arith.subf %579, %578 : vector<1x384xf32>
    %cst_257 = arith.constant 0.000000e+00 : f32
    %581 = vector.broadcast %cst_257 : f32 to vector<1x384xf32>
    %582 = arith.maximumf %580, %581 : vector<1x384xf32>
    %c0_258 = arith.constant 0 : index
    %c0_259 = arith.constant 0 : index
    %c142 = arith.constant 142 : index
    %583 = vector.load %arg1[%c0_258, %c0_259, %c142] : memref<1x4x648xf32, #tpu.memory_space<vmem>>, vector<1x4x384xf32>
    %584 = vector.shape_cast %583 : vector<1x4x384xf32> to vector<4x384xf32>
    %585 = vector.broadcast %582 : vector<1x384xf32> to vector<4x384xf32>
    %586 = arith.mulf %585, %584 : vector<4x384xf32>
    %587 = arith.addf %575, %586 : vector<4x384xf32>
    %cst_260 = arith.constant 2.000000e+00 : f32
    %588 = vector.broadcast %cst_260 : f32 to vector<1x384xf32>
    %589 = arith.subf %538, %588 : vector<1x384xf32>
    %590 = math.absf %589 : vector<1x384xf32>
    %cst_261 = arith.constant 1.000000e+00 : f32
    %591 = vector.broadcast %cst_261 : f32 to vector<1x384xf32>
    %592 = arith.subf %591, %590 : vector<1x384xf32>
    %cst_262 = arith.constant 0.000000e+00 : f32
    %593 = vector.broadcast %cst_262 : f32 to vector<1x384xf32>
    %594 = arith.maximumf %592, %593 : vector<1x384xf32>
    %c0_263 = arith.constant 0 : index
    %c0_264 = arith.constant 0 : index
    %c166 = arith.constant 166 : index
    %595 = vector.load %arg1[%c0_263, %c0_264, %c166] : memref<1x4x648xf32, #tpu.memory_space<vmem>>, vector<1x4x384xf32>
    %596 = vector.shape_cast %595 : vector<1x4x384xf32> to vector<4x384xf32>
    %597 = vector.broadcast %594 : vector<1x384xf32> to vector<4x384xf32>
    %598 = arith.mulf %597, %596 : vector<4x384xf32>
    %599 = arith.addf %587, %598 : vector<4x384xf32>
    %cst_265 = arith.constant 3.000000e+00 : f32
    %600 = vector.broadcast %cst_265 : f32 to vector<1x384xf32>
    %601 = arith.subf %538, %600 : vector<1x384xf32>
    %602 = math.absf %601 : vector<1x384xf32>
    %cst_266 = arith.constant 1.000000e+00 : f32
    %603 = vector.broadcast %cst_266 : f32 to vector<1x384xf32>
    %604 = arith.subf %603, %602 : vector<1x384xf32>
    %cst_267 = arith.constant 0.000000e+00 : f32
    %605 = vector.broadcast %cst_267 : f32 to vector<1x384xf32>
    %606 = arith.maximumf %604, %605 : vector<1x384xf32>
    %c0_268 = arith.constant 0 : index
    %c0_269 = arith.constant 0 : index
    %c190 = arith.constant 190 : index
    %607 = vector.load %arg1[%c0_268, %c0_269, %c190] : memref<1x4x648xf32, #tpu.memory_space<vmem>>, vector<1x4x384xf32>
    %608 = vector.shape_cast %607 : vector<1x4x384xf32> to vector<4x384xf32>
    %609 = vector.broadcast %606 : vector<1x384xf32> to vector<4x384xf32>
    %610 = arith.mulf %609, %608 : vector<4x384xf32>
    %611 = arith.addf %599, %610 : vector<4x384xf32>
    %c8_270 = arith.constant 8 : index
    %c0_271 = arith.constant 0 : index
    %612 = vector.load %arg13[%c8_270, %c0_271] : memref<36x384xf32, #tpu.memory_space<vmem>>, vector<4x384xf32>
    tpu.vector_store %arg13[%c8_270, %c0_271], %611 {strides = array<i32>} : memref<36x384xf32, #tpu.memory_space<vmem>>, vector<4x384xf32>,
    %c3_272 = arith.constant 3 : index
    %c0_273 = arith.constant 0 : index
    %613 = vector.load %arg15[%c3_272, %c0_273] : memref<9x384xf32, #tpu.memory_space<vmem>>, vector<1x384xf32>
    %cst_274 = arith.constant 0.000000e+00 : f32
    %614 = vector.broadcast %cst_274 : f32 to vector<4x384xf32>
    %cst_275 = arith.constant -1.000000e+00 : f32
    %615 = vector.broadcast %cst_275 : f32 to vector<1x384xf32>
    %616 = arith.subf %613, %615 : vector<1x384xf32>
    %617 = math.absf %616 : vector<1x384xf32>
    %cst_276 = arith.constant 1.000000e+00 : f32
    %618 = vector.broadcast %cst_276 : f32 to vector<1x384xf32>
    %619 = arith.subf %618, %617 : vector<1x384xf32>
    %cst_277 = arith.constant 0.000000e+00 : f32
    %620 = vector.broadcast %cst_277 : f32 to vector<1x384xf32>
    %621 = arith.maximumf %619, %620 : vector<1x384xf32>
    %c0_278 = arith.constant 0 : index
    %c0_279 = arith.constant 0 : index
    %c95_280 = arith.constant 95 : index
    %622 = vector.load %arg1[%c0_278, %c0_279, %c95_280] : memref<1x4x648xf32, #tpu.memory_space<vmem>>, vector<1x4x384xf32>
    %623 = vector.shape_cast %622 : vector<1x4x384xf32> to vector<4x384xf32>
    %624 = vector.broadcast %621 : vector<1x384xf32> to vector<4x384xf32>
    %625 = arith.mulf %624, %623 : vector<4x384xf32>
    %626 = arith.addf %614, %625 : vector<4x384xf32>
    %cst_281 = arith.constant 0.000000e+00 : f32
    %627 = vector.broadcast %cst_281 : f32 to vector<1x384xf32>
    %628 = arith.subf %613, %627 : vector<1x384xf32>
    %629 = math.absf %628 : vector<1x384xf32>
    %cst_282 = arith.constant 1.000000e+00 : f32
    %630 = vector.broadcast %cst_282 : f32 to vector<1x384xf32>
    %631 = arith.subf %630, %629 : vector<1x384xf32>
    %cst_283 = arith.constant 0.000000e+00 : f32
    %632 = vector.broadcast %cst_283 : f32 to vector<1x384xf32>
    %633 = arith.maximumf %631, %632 : vector<1x384xf32>
    %c0_284 = arith.constant 0 : index
    %c0_285 = arith.constant 0 : index
    %c119_286 = arith.constant 119 : index
    %634 = vector.load %arg1[%c0_284, %c0_285, %c119_286] : memref<1x4x648xf32, #tpu.memory_space<vmem>>, vector<1x4x384xf32>
    %635 = vector.shape_cast %634 : vector<1x4x384xf32> to vector<4x384xf32>
    %636 = vector.broadcast %633 : vector<1x384xf32> to vector<4x384xf32>
    %637 = arith.mulf %636, %635 : vector<4x384xf32>
    %638 = arith.addf %626, %637 : vector<4x384xf32>
    %cst_287 = arith.constant 1.000000e+00 : f32
    %639 = vector.broadcast %cst_287 : f32 to vector<1x384xf32>
    %640 = arith.subf %613, %639 : vector<1x384xf32>
    %641 = math.absf %640 : vector<1x384xf32>
    %cst_288 = arith.constant 1.000000e+00 : f32
    %642 = vector.broadcast %cst_288 : f32 to vector<1x384xf32>
    %643 = arith.subf %642, %641 : vector<1x384xf32>
    %cst_289 = arith.constant 0.000000e+00 : f32
    %644 = vector.broadcast %cst_289 : f32 to vector<1x384xf32>
    %645 = arith.maximumf %643, %644 : vector<1x384xf32>
    %c0_290 = arith.constant 0 : index
    %c0_291 = arith.constant 0 : index
    %c143_292 = arith.constant 143 : index
    %646 = vector.load %arg1[%c0_290, %c0_291, %c143_292] : memref<1x4x648xf32, #tpu.memory_space<vmem>>, vector<1x4x384xf32>
    %647 = vector.shape_cast %646 : vector<1x4x384xf32> to vector<4x384xf32>
    %648 = vector.broadcast %645 : vector<1x384xf32> to vector<4x384xf32>
    %649 = arith.mulf %648, %647 : vector<4x384xf32>
    %650 = arith.addf %638, %649 : vector<4x384xf32>
    %cst_293 = arith.constant 2.000000e+00 : f32
    %651 = vector.broadcast %cst_293 : f32 to vector<1x384xf32>
    %652 = arith.subf %613, %651 : vector<1x384xf32>
    %653 = math.absf %652 : vector<1x384xf32>
    %cst_294 = arith.constant 1.000000e+00 : f32
    %654 = vector.broadcast %cst_294 : f32 to vector<1x384xf32>
    %655 = arith.subf %654, %653 : vector<1x384xf32>
    %cst_295 = arith.constant 0.000000e+00 : f32
    %656 = vector.broadcast %cst_295 : f32 to vector<1x384xf32>
    %657 = arith.maximumf %655, %656 : vector<1x384xf32>
    %c0_296 = arith.constant 0 : index
    %c0_297 = arith.constant 0 : index
    %c167 = arith.constant 167 : index
    %658 = vector.load %arg1[%c0_296, %c0_297, %c167] : memref<1x4x648xf32, #tpu.memory_space<vmem>>, vector<1x4x384xf32>
    %659 = vector.shape_cast %658 : vector<1x4x384xf32> to vector<4x384xf32>
    %660 = vector.broadcast %657 : vector<1x384xf32> to vector<4x384xf32>
    %661 = arith.mulf %660, %659 : vector<4x384xf32>
    %662 = arith.addf %650, %661 : vector<4x384xf32>
    %c12_298 = arith.constant 12 : index
    %c0_299 = arith.constant 0 : index
    %663 = vector.load %arg13[%c12_298, %c0_299] : memref<36x384xf32, #tpu.memory_space<vmem>>, vector<4x384xf32>
    tpu.vector_store %arg13[%c12_298, %c0_299], %662 {strides = array<i32>} : memref<36x384xf32, #tpu.memory_space<vmem>>, vector<4x384xf32>,
    %c0_300 = arith.constant 0 : index
    %c0_301 = arith.constant 0 : index
    %c120_302 = arith.constant 120 : index
    %664 = vector.load %arg1[%c0_300, %c0_301, %c120_302] : memref<1x4x648xf32, #tpu.memory_space<vmem>>, vector<1x4x384xf32>
    %665 = vector.shape_cast %664 : vector<1x4x384xf32> to vector<4x384xf32>
    %c16_303 = arith.constant 16 : index
    %c0_304 = arith.constant 0 : index
    %666 = vector.load %arg13[%c16_303, %c0_304] : memref<36x384xf32, #tpu.memory_space<vmem>>, vector<4x384xf32>
    tpu.vector_store %arg13[%c16_303, %c0_304], %665 {strides = array<i32>} : memref<36x384xf32, #tpu.memory_space<vmem>>, vector<4x384xf32>,
    %c5_305 = arith.constant 5 : index
    %c0_306 = arith.constant 0 : index
    %667 = vector.load %arg15[%c5_305, %c0_306] : memref<9x384xf32, #tpu.memory_space<vmem>>, vector<1x384xf32>
    %cst_307 = arith.constant 0.000000e+00 : f32
    %668 = vector.broadcast %cst_307 : f32 to vector<4x384xf32>
    %cst_308 = arith.constant -1.000000e+00 : f32
    %669 = vector.broadcast %cst_308 : f32 to vector<1x384xf32>
    %670 = arith.subf %667, %669 : vector<1x384xf32>
    %671 = math.absf %670 : vector<1x384xf32>
    %cst_309 = arith.constant 1.000000e+00 : f32
    %672 = vector.broadcast %cst_309 : f32 to vector<1x384xf32>
    %673 = arith.subf %672, %671 : vector<1x384xf32>
    %cst_310 = arith.constant 0.000000e+00 : f32
    %674 = vector.broadcast %cst_310 : f32 to vector<1x384xf32>
    %675 = arith.maximumf %673, %674 : vector<1x384xf32>
    %c0_311 = arith.constant 0 : index
    %c0_312 = arith.constant 0 : index
    %c97_313 = arith.constant 97 : index
    %676 = vector.load %arg1[%c0_311, %c0_312, %c97_313] : memref<1x4x648xf32, #tpu.memory_space<vmem>>, vector<1x4x384xf32>
    %677 = vector.shape_cast %676 : vector<1x4x384xf32> to vector<4x384xf32>
    %678 = vector.broadcast %675 : vector<1x384xf32> to vector<4x384xf32>
    %679 = arith.mulf %678, %677 : vector<4x384xf32>
    %680 = arith.addf %668, %679 : vector<4x384xf32>
    %cst_314 = arith.constant 0.000000e+00 : f32
    %681 = vector.broadcast %cst_314 : f32 to vector<1x384xf32>
    %682 = arith.subf %667, %681 : vector<1x384xf32>
    %683 = math.absf %682 : vector<1x384xf32>
    %cst_315 = arith.constant 1.000000e+00 : f32
    %684 = vector.broadcast %cst_315 : f32 to vector<1x384xf32>
    %685 = arith.subf %684, %683 : vector<1x384xf32>
    %cst_316 = arith.constant 0.000000e+00 : f32
    %686 = vector.broadcast %cst_316 : f32 to vector<1x384xf32>
    %687 = arith.maximumf %685, %686 : vector<1x384xf32>
    %c0_317 = arith.constant 0 : index
    %c0_318 = arith.constant 0 : index
    %c121_319 = arith.constant 121 : index
    %688 = vector.load %arg1[%c0_317, %c0_318, %c121_319] : memref<1x4x648xf32, #tpu.memory_space<vmem>>, vector<1x4x384xf32>
    %689 = vector.shape_cast %688 : vector<1x4x384xf32> to vector<4x384xf32>
    %690 = vector.broadcast %687 : vector<1x384xf32> to vector<4x384xf32>
    %691 = arith.mulf %690, %689 : vector<4x384xf32>
    %692 = arith.addf %680, %691 : vector<4x384xf32>
    %cst_320 = arith.constant 1.000000e+00 : f32
    %693 = vector.broadcast %cst_320 : f32 to vector<1x384xf32>
    %694 = arith.subf %667, %693 : vector<1x384xf32>
    %695 = math.absf %694 : vector<1x384xf32>
    %cst_321 = arith.constant 1.000000e+00 : f32
    %696 = vector.broadcast %cst_321 : f32 to vector<1x384xf32>
    %697 = arith.subf %696, %695 : vector<1x384xf32>
    %cst_322 = arith.constant 0.000000e+00 : f32
    %698 = vector.broadcast %cst_322 : f32 to vector<1x384xf32>
    %699 = arith.maximumf %697, %698 : vector<1x384xf32>
    %c0_323 = arith.constant 0 : index
    %c0_324 = arith.constant 0 : index
    %c145_325 = arith.constant 145 : index
    %700 = vector.load %arg1[%c0_323, %c0_324, %c145_325] : memref<1x4x648xf32, #tpu.memory_space<vmem>>, vector<1x4x384xf32>
    %701 = vector.shape_cast %700 : vector<1x4x384xf32> to vector<4x384xf32>
    %702 = vector.broadcast %699 : vector<1x384xf32> to vector<4x384xf32>
    %703 = arith.mulf %702, %701 : vector<4x384xf32>
    %704 = arith.addf %692, %703 : vector<4x384xf32>
    %cst_326 = arith.constant 2.000000e+00 : f32
    %705 = vector.broadcast %cst_326 : f32 to vector<1x384xf32>
    %706 = arith.subf %667, %705 : vector<1x384xf32>
    %707 = math.absf %706 : vector<1x384xf32>
    %cst_327 = arith.constant 1.000000e+00 : f32
    %708 = vector.broadcast %cst_327 : f32 to vector<1x384xf32>
    %709 = arith.subf %708, %707 : vector<1x384xf32>
    %cst_328 = arith.constant 0.000000e+00 : f32
    %710 = vector.broadcast %cst_328 : f32 to vector<1x384xf32>
    %711 = arith.maximumf %709, %710 : vector<1x384xf32>
    %c0_329 = arith.constant 0 : index
    %c0_330 = arith.constant 0 : index
    %c169 = arith.constant 169 : index
    %712 = vector.load %arg1[%c0_329, %c0_330, %c169] : memref<1x4x648xf32, #tpu.memory_space<vmem>>, vector<1x4x384xf32>
    %713 = vector.shape_cast %712 : vector<1x4x384xf32> to vector<4x384xf32>
    %714 = vector.broadcast %711 : vector<1x384xf32> to vector<4x384xf32>
    %715 = arith.mulf %714, %713 : vector<4x384xf32>
    %716 = arith.addf %704, %715 : vector<4x384xf32>
    %c20_331 = arith.constant 20 : index
    %c0_332 = arith.constant 0 : index
    %717 = vector.load %arg13[%c20_331, %c0_332] : memref<36x384xf32, #tpu.memory_space<vmem>>, vector<4x384xf32>
    tpu.vector_store %arg13[%c20_331, %c0_332], %716 {strides = array<i32>} : memref<36x384xf32, #tpu.memory_space<vmem>>, vector<4x384xf32>,
    %c6_333 = arith.constant 6 : index
    %c0_334 = arith.constant 0 : index
    %718 = vector.load %arg15[%c6_333, %c0_334] : memref<9x384xf32, #tpu.memory_space<vmem>>, vector<1x384xf32>
    %cst_335 = arith.constant 0.000000e+00 : f32
    %719 = vector.broadcast %cst_335 : f32 to vector<4x384xf32>
    %cst_336 = arith.constant -2.000000e+00 : f32
    %720 = vector.broadcast %cst_336 : f32 to vector<1x384xf32>
    %721 = arith.subf %718, %720 : vector<1x384xf32>
    %722 = math.absf %721 : vector<1x384xf32>
    %cst_337 = arith.constant 1.000000e+00 : f32
    %723 = vector.broadcast %cst_337 : f32 to vector<1x384xf32>
    %724 = arith.subf %723, %722 : vector<1x384xf32>
    %cst_338 = arith.constant 0.000000e+00 : f32
    %725 = vector.broadcast %cst_338 : f32 to vector<1x384xf32>
    %726 = arith.maximumf %724, %725 : vector<1x384xf32>
    %c0_339 = arith.constant 0 : index
    %c0_340 = arith.constant 0 : index
    %c74 = arith.constant 74 : index
    %727 = vector.load %arg1[%c0_339, %c0_340, %c74] : memref<1x4x648xf32, #tpu.memory_space<vmem>>, vector<1x4x384xf32>
    %728 = vector.shape_cast %727 : vector<1x4x384xf32> to vector<4x384xf32>
    %729 = vector.broadcast %726 : vector<1x384xf32> to vector<4x384xf32>
    %730 = arith.mulf %729, %728 : vector<4x384xf32>
    %731 = arith.addf %719, %730 : vector<4x384xf32>
    %cst_341 = arith.constant -1.000000e+00 : f32
    %732 = vector.broadcast %cst_341 : f32 to vector<1x384xf32>
    %733 = arith.subf %718, %732 : vector<1x384xf32>
    %734 = math.absf %733 : vector<1x384xf32>
    %cst_342 = arith.constant 1.000000e+00 : f32
    %735 = vector.broadcast %cst_342 : f32 to vector<1x384xf32>
    %736 = arith.subf %735, %734 : vector<1x384xf32>
    %cst_343 = arith.constant 0.000000e+00 : f32
    %737 = vector.broadcast %cst_343 : f32 to vector<1x384xf32>
    %738 = arith.maximumf %736, %737 : vector<1x384xf32>
    %c0_344 = arith.constant 0 : index
    %c0_345 = arith.constant 0 : index
    %c98 = arith.constant 98 : index
    %739 = vector.load %arg1[%c0_344, %c0_345, %c98] : memref<1x4x648xf32, #tpu.memory_space<vmem>>, vector<1x4x384xf32>
    %740 = vector.shape_cast %739 : vector<1x4x384xf32> to vector<4x384xf32>
    %741 = vector.broadcast %738 : vector<1x384xf32> to vector<4x384xf32>
    %742 = arith.mulf %741, %740 : vector<4x384xf32>
    %743 = arith.addf %731, %742 : vector<4x384xf32>
    %cst_346 = arith.constant 0.000000e+00 : f32
    %744 = vector.broadcast %cst_346 : f32 to vector<1x384xf32>
    %745 = arith.subf %718, %744 : vector<1x384xf32>
    %746 = math.absf %745 : vector<1x384xf32>
    %cst_347 = arith.constant 1.000000e+00 : f32
    %747 = vector.broadcast %cst_347 : f32 to vector<1x384xf32>
    %748 = arith.subf %747, %746 : vector<1x384xf32>
    %cst_348 = arith.constant 0.000000e+00 : f32
    %749 = vector.broadcast %cst_348 : f32 to vector<1x384xf32>
    %750 = arith.maximumf %748, %749 : vector<1x384xf32>
    %c0_349 = arith.constant 0 : index
    %c0_350 = arith.constant 0 : index
    %c122 = arith.constant 122 : index
    %751 = vector.load %arg1[%c0_349, %c0_350, %c122] : memref<1x4x648xf32, #tpu.memory_space<vmem>>, vector<1x4x384xf32>
    %752 = vector.shape_cast %751 : vector<1x4x384xf32> to vector<4x384xf32>
    %753 = vector.broadcast %750 : vector<1x384xf32> to vector<4x384xf32>
    %754 = arith.mulf %753, %752 : vector<4x384xf32>
    %755 = arith.addf %743, %754 : vector<4x384xf32>
    %cst_351 = arith.constant 1.000000e+00 : f32
    %756 = vector.broadcast %cst_351 : f32 to vector<1x384xf32>
    %757 = arith.subf %718, %756 : vector<1x384xf32>
    %758 = math.absf %757 : vector<1x384xf32>
    %cst_352 = arith.constant 1.000000e+00 : f32
    %759 = vector.broadcast %cst_352 : f32 to vector<1x384xf32>
    %760 = arith.subf %759, %758 : vector<1x384xf32>
    %cst_353 = arith.constant 0.000000e+00 : f32
    %761 = vector.broadcast %cst_353 : f32 to vector<1x384xf32>
    %762 = arith.maximumf %760, %761 : vector<1x384xf32>
    %c0_354 = arith.constant 0 : index
    %c0_355 = arith.constant 0 : index
    %c146 = arith.constant 146 : index
    %763 = vector.load %arg1[%c0_354, %c0_355, %c146] : memref<1x4x648xf32, #tpu.memory_space<vmem>>, vector<1x4x384xf32>
    %764 = vector.shape_cast %763 : vector<1x4x384xf32> to vector<4x384xf32>
    %765 = vector.broadcast %762 : vector<1x384xf32> to vector<4x384xf32>
    %766 = arith.mulf %765, %764 : vector<4x384xf32>
    %767 = arith.addf %755, %766 : vector<4x384xf32>
    %cst_356 = arith.constant 2.000000e+00 : f32
    %768 = vector.broadcast %cst_356 : f32 to vector<1x384xf32>
    %769 = arith.subf %718, %768 : vector<1x384xf32>
    %770 = math.absf %769 : vector<1x384xf32>
    %cst_357 = arith.constant 1.000000e+00 : f32
    %771 = vector.broadcast %cst_357 : f32 to vector<1x384xf32>
    %772 = arith.subf %771, %770 : vector<1x384xf32>
    %cst_358 = arith.constant 0.000000e+00 : f32
    %773 = vector.broadcast %cst_358 : f32 to vector<1x384xf32>
    %774 = arith.maximumf %772, %773 : vector<1x384xf32>
    %c0_359 = arith.constant 0 : index
    %c0_360 = arith.constant 0 : index
    %c170 = arith.constant 170 : index
    %775 = vector.load %arg1[%c0_359, %c0_360, %c170] : memref<1x4x648xf32, #tpu.memory_space<vmem>>, vector<1x4x384xf32>
    %776 = vector.shape_cast %775 : vector<1x4x384xf32> to vector<4x384xf32>
    %777 = vector.broadcast %774 : vector<1x384xf32> to vector<4x384xf32>
    %778 = arith.mulf %777, %776 : vector<4x384xf32>
    %779 = arith.addf %767, %778 : vector<4x384xf32>
    %cst_361 = arith.constant 3.000000e+00 : f32
    %780 = vector.broadcast %cst_361 : f32 to vector<1x384xf32>
    %781 = arith.subf %718, %780 : vector<1x384xf32>
    %782 = math.absf %781 : vector<1x384xf32>
    %cst_362 = arith.constant 1.000000e+00 : f32
    %783 = vector.broadcast %cst_362 : f32 to vector<1x384xf32>
    %784 = arith.subf %783, %782 : vector<1x384xf32>
    %cst_363 = arith.constant 0.000000e+00 : f32
    %785 = vector.broadcast %cst_363 : f32 to vector<1x384xf32>
    %786 = arith.maximumf %784, %785 : vector<1x384xf32>
    %c0_364 = arith.constant 0 : index
    %c0_365 = arith.constant 0 : index
    %c194 = arith.constant 194 : index
    %787 = vector.load %arg1[%c0_364, %c0_365, %c194] : memref<1x4x648xf32, #tpu.memory_space<vmem>>, vector<1x4x384xf32>
    %788 = vector.shape_cast %787 : vector<1x4x384xf32> to vector<4x384xf32>
    %789 = vector.broadcast %786 : vector<1x384xf32> to vector<4x384xf32>
    %790 = arith.mulf %789, %788 : vector<4x384xf32>
    %791 = arith.addf %779, %790 : vector<4x384xf32>
    %c24_366 = arith.constant 24 : index
    %c0_367 = arith.constant 0 : index
    %792 = vector.load %arg13[%c24_366, %c0_367] : memref<36x384xf32, #tpu.memory_space<vmem>>, vector<4x384xf32>
    tpu.vector_store %arg13[%c24_366, %c0_367], %791 {strides = array<i32>} : memref<36x384xf32, #tpu.memory_space<vmem>>, vector<4x384xf32>,
    %c7_368 = arith.constant 7 : index
    %c0_369 = arith.constant 0 : index
    %793 = vector.load %arg15[%c7_368, %c0_369] : memref<9x384xf32, #tpu.memory_space<vmem>>, vector<1x384xf32>
    %cst_370 = arith.constant 0.000000e+00 : f32
    %794 = vector.broadcast %cst_370 : f32 to vector<4x384xf32>
    %cst_371 = arith.constant -3.000000e+00 : f32
    %795 = vector.broadcast %cst_371 : f32 to vector<1x384xf32>
    %796 = arith.subf %793, %795 : vector<1x384xf32>
    %797 = math.absf %796 : vector<1x384xf32>
    %cst_372 = arith.constant 1.000000e+00 : f32
    %798 = vector.broadcast %cst_372 : f32 to vector<1x384xf32>
    %799 = arith.subf %798, %797 : vector<1x384xf32>
    %cst_373 = arith.constant 0.000000e+00 : f32
    %800 = vector.broadcast %cst_373 : f32 to vector<1x384xf32>
    %801 = arith.maximumf %799, %800 : vector<1x384xf32>
    %c0_374 = arith.constant 0 : index
    %c0_375 = arith.constant 0 : index
    %c51 = arith.constant 51 : index
    %802 = vector.load %arg1[%c0_374, %c0_375, %c51] : memref<1x4x648xf32, #tpu.memory_space<vmem>>, vector<1x4x384xf32>
    %803 = vector.shape_cast %802 : vector<1x4x384xf32> to vector<4x384xf32>
    %804 = vector.broadcast %801 : vector<1x384xf32> to vector<4x384xf32>
    %805 = arith.mulf %804, %803 : vector<4x384xf32>
    %806 = arith.addf %794, %805 : vector<4x384xf32>
    %cst_376 = arith.constant -2.000000e+00 : f32
    %807 = vector.broadcast %cst_376 : f32 to vector<1x384xf32>
    %808 = arith.subf %793, %807 : vector<1x384xf32>
    %809 = math.absf %808 : vector<1x384xf32>
    %cst_377 = arith.constant 1.000000e+00 : f32
    %810 = vector.broadcast %cst_377 : f32 to vector<1x384xf32>
    %811 = arith.subf %810, %809 : vector<1x384xf32>
    %cst_378 = arith.constant 0.000000e+00 : f32
    %812 = vector.broadcast %cst_378 : f32 to vector<1x384xf32>
    %813 = arith.maximumf %811, %812 : vector<1x384xf32>
    %c0_379 = arith.constant 0 : index
    %c0_380 = arith.constant 0 : index
    %c75 = arith.constant 75 : index
    %814 = vector.load %arg1[%c0_379, %c0_380, %c75] : memref<1x4x648xf32, #tpu.memory_space<vmem>>, vector<1x4x384xf32>
    %815 = vector.shape_cast %814 : vector<1x4x384xf32> to vector<4x384xf32>
    %816 = vector.broadcast %813 : vector<1x384xf32> to vector<4x384xf32>
    %817 = arith.mulf %816, %815 : vector<4x384xf32>
    %818 = arith.addf %806, %817 : vector<4x384xf32>
    %cst_381 = arith.constant -1.000000e+00 : f32
    %819 = vector.broadcast %cst_381 : f32 to vector<1x384xf32>
    %820 = arith.subf %793, %819 : vector<1x384xf32>
    %821 = math.absf %820 : vector<1x384xf32>
    %cst_382 = arith.constant 1.000000e+00 : f32
    %822 = vector.broadcast %cst_382 : f32 to vector<1x384xf32>
    %823 = arith.subf %822, %821 : vector<1x384xf32>
    %cst_383 = arith.constant 0.000000e+00 : f32
    %824 = vector.broadcast %cst_383 : f32 to vector<1x384xf32>
    %825 = arith.maximumf %823, %824 : vector<1x384xf32>
    %c0_384 = arith.constant 0 : index
    %c0_385 = arith.constant 0 : index
    %c99 = arith.constant 99 : index
    %826 = vector.load %arg1[%c0_384, %c0_385, %c99] : memref<1x4x648xf32, #tpu.memory_space<vmem>>, vector<1x4x384xf32>
    %827 = vector.shape_cast %826 : vector<1x4x384xf32> to vector<4x384xf32>
    %828 = vector.broadcast %825 : vector<1x384xf32> to vector<4x384xf32>
    %829 = arith.mulf %828, %827 : vector<4x384xf32>
    %830 = arith.addf %818, %829 : vector<4x384xf32>
    %cst_386 = arith.constant 0.000000e+00 : f32
    %831 = vector.broadcast %cst_386 : f32 to vector<1x384xf32>
    %832 = arith.subf %793, %831 : vector<1x384xf32>
    %833 = math.absf %832 : vector<1x384xf32>
    %cst_387 = arith.constant 1.000000e+00 : f32
    %834 = vector.broadcast %cst_387 : f32 to vector<1x384xf32>
    %835 = arith.subf %834, %833 : vector<1x384xf32>
    %cst_388 = arith.constant 0.000000e+00 : f32
    %836 = vector.broadcast %cst_388 : f32 to vector<1x384xf32>
    %837 = arith.maximumf %835, %836 : vector<1x384xf32>
    %c0_389 = arith.constant 0 : index
    %c0_390 = arith.constant 0 : index
    %c123 = arith.constant 123 : index
    %838 = vector.load %arg1[%c0_389, %c0_390, %c123] : memref<1x4x648xf32, #tpu.memory_space<vmem>>, vector<1x4x384xf32>
    %839 = vector.shape_cast %838 : vector<1x4x384xf32> to vector<4x384xf32>
    %840 = vector.broadcast %837 : vector<1x384xf32> to vector<4x384xf32>
    %841 = arith.mulf %840, %839 : vector<4x384xf32>
    %842 = arith.addf %830, %841 : vector<4x384xf32>
    %cst_391 = arith.constant 1.000000e+00 : f32
    %843 = vector.broadcast %cst_391 : f32 to vector<1x384xf32>
    %844 = arith.subf %793, %843 : vector<1x384xf32>
    %845 = math.absf %844 : vector<1x384xf32>
    %cst_392 = arith.constant 1.000000e+00 : f32
    %846 = vector.broadcast %cst_392 : f32 to vector<1x384xf32>
    %847 = arith.subf %846, %845 : vector<1x384xf32>
    %cst_393 = arith.constant 0.000000e+00 : f32
    %848 = vector.broadcast %cst_393 : f32 to vector<1x384xf32>
    %849 = arith.maximumf %847, %848 : vector<1x384xf32>
    %c0_394 = arith.constant 0 : index
    %c0_395 = arith.constant 0 : index
    %c147 = arith.constant 147 : index
    %850 = vector.load %arg1[%c0_394, %c0_395, %c147] : memref<1x4x648xf32, #tpu.memory_space<vmem>>, vector<1x4x384xf32>
    %851 = vector.shape_cast %850 : vector<1x4x384xf32> to vector<4x384xf32>
    %852 = vector.broadcast %849 : vector<1x384xf32> to vector<4x384xf32>
    %853 = arith.mulf %852, %851 : vector<4x384xf32>
    %854 = arith.addf %842, %853 : vector<4x384xf32>
    %cst_396 = arith.constant 2.000000e+00 : f32
    %855 = vector.broadcast %cst_396 : f32 to vector<1x384xf32>
    %856 = arith.subf %793, %855 : vector<1x384xf32>
    %857 = math.absf %856 : vector<1x384xf32>
    %cst_397 = arith.constant 1.000000e+00 : f32
    %858 = vector.broadcast %cst_397 : f32 to vector<1x384xf32>
    %859 = arith.subf %858, %857 : vector<1x384xf32>
    %cst_398 = arith.constant 0.000000e+00 : f32
    %860 = vector.broadcast %cst_398 : f32 to vector<1x384xf32>
    %861 = arith.maximumf %859, %860 : vector<1x384xf32>
    %c0_399 = arith.constant 0 : index
    %c0_400 = arith.constant 0 : index
    %c171 = arith.constant 171 : index
    %862 = vector.load %arg1[%c0_399, %c0_400, %c171] : memref<1x4x648xf32, #tpu.memory_space<vmem>>, vector<1x4x384xf32>
    %863 = vector.shape_cast %862 : vector<1x4x384xf32> to vector<4x384xf32>
    %864 = vector.broadcast %861 : vector<1x384xf32> to vector<4x384xf32>
    %865 = arith.mulf %864, %863 : vector<4x384xf32>
    %866 = arith.addf %854, %865 : vector<4x384xf32>
    %cst_401 = arith.constant 3.000000e+00 : f32
    %867 = vector.broadcast %cst_401 : f32 to vector<1x384xf32>
    %868 = arith.subf %793, %867 : vector<1x384xf32>
    %869 = math.absf %868 : vector<1x384xf32>
    %cst_402 = arith.constant 1.000000e+00 : f32
    %870 = vector.broadcast %cst_402 : f32 to vector<1x384xf32>
    %871 = arith.subf %870, %869 : vector<1x384xf32>
    %cst_403 = arith.constant 0.000000e+00 : f32
    %872 = vector.broadcast %cst_403 : f32 to vector<1x384xf32>
    %873 = arith.maximumf %871, %872 : vector<1x384xf32>
    %c0_404 = arith.constant 0 : index
    %c0_405 = arith.constant 0 : index
    %c195 = arith.constant 195 : index
    %874 = vector.load %arg1[%c0_404, %c0_405, %c195] : memref<1x4x648xf32, #tpu.memory_space<vmem>>, vector<1x4x384xf32>
    %875 = vector.shape_cast %874 : vector<1x4x384xf32> to vector<4x384xf32>
    %876 = vector.broadcast %873 : vector<1x384xf32> to vector<4x384xf32>
    %877 = arith.mulf %876, %875 : vector<4x384xf32>
    %878 = arith.addf %866, %877 : vector<4x384xf32>
    %cst_406 = arith.constant 4.000000e+00 : f32
    %879 = vector.broadcast %cst_406 : f32 to vector<1x384xf32>
    %880 = arith.subf %793, %879 : vector<1x384xf32>
    %881 = math.absf %880 : vector<1x384xf32>
    %cst_407 = arith.constant 1.000000e+00 : f32
    %882 = vector.broadcast %cst_407 : f32 to vector<1x384xf32>
    %883 = arith.subf %882, %881 : vector<1x384xf32>
    %cst_408 = arith.constant 0.000000e+00 : f32
    %884 = vector.broadcast %cst_408 : f32 to vector<1x384xf32>
    %885 = arith.maximumf %883, %884 : vector<1x384xf32>
    %c0_409 = arith.constant 0 : index
    %c0_410 = arith.constant 0 : index
    %c219 = arith.constant 219 : index
    %886 = vector.load %arg1[%c0_409, %c0_410, %c219] : memref<1x4x648xf32, #tpu.memory_space<vmem>>, vector<1x4x384xf32>
    %887 = vector.shape_cast %886 : vector<1x4x384xf32> to vector<4x384xf32>
    %888 = vector.broadcast %885 : vector<1x384xf32> to vector<4x384xf32>
    %889 = arith.mulf %888, %887 : vector<4x384xf32>
    %890 = arith.addf %878, %889 : vector<4x384xf32>
    %c28_411 = arith.constant 28 : index
    %c0_412 = arith.constant 0 : index
    %891 = vector.load %arg13[%c28_411, %c0_412] : memref<36x384xf32, #tpu.memory_space<vmem>>, vector<4x384xf32>
    tpu.vector_store %arg13[%c28_411, %c0_412], %890 {strides = array<i32>} : memref<36x384xf32, #tpu.memory_space<vmem>>, vector<4x384xf32>,
    %c8_413 = arith.constant 8 : index
    %c0_414 = arith.constant 0 : index
    %892 = vector.load %arg15[%c8_413, %c0_414] : memref<9x384xf32, #tpu.memory_space<vmem>>, vector<1x384xf32>
    %cst_415 = arith.constant 0.000000e+00 : f32
    %893 = vector.broadcast %cst_415 : f32 to vector<4x384xf32>
    %cst_416 = arith.constant -4.000000e+00 : f32
    %894 = vector.broadcast %cst_416 : f32 to vector<1x384xf32>
    %895 = arith.subf %892, %894 : vector<1x384xf32>
    %896 = math.absf %895 : vector<1x384xf32>
    %cst_417 = arith.constant 1.000000e+00 : f32
    %897 = vector.broadcast %cst_417 : f32 to vector<1x384xf32>
    %898 = arith.subf %897, %896 : vector<1x384xf32>
    %cst_418 = arith.constant 0.000000e+00 : f32
    %899 = vector.broadcast %cst_418 : f32 to vector<1x384xf32>
    %900 = arith.maximumf %898, %899 : vector<1x384xf32>
    %c0_419 = arith.constant 0 : index
    %c0_420 = arith.constant 0 : index
    %c28_421 = arith.constant 28 : index
    %901 = vector.load %arg1[%c0_419, %c0_420, %c28_421] : memref<1x4x648xf32, #tpu.memory_space<vmem>>, vector<1x4x384xf32>
    %902 = vector.shape_cast %901 : vector<1x4x384xf32> to vector<4x384xf32>
    %903 = vector.broadcast %900 : vector<1x384xf32> to vector<4x384xf32>
    %904 = arith.mulf %903, %902 : vector<4x384xf32>
    %905 = arith.addf %893, %904 : vector<4x384xf32>
    %cst_422 = arith.constant -3.000000e+00 : f32
    %906 = vector.broadcast %cst_422 : f32 to vector<1x384xf32>
    %907 = arith.subf %892, %906 : vector<1x384xf32>
    %908 = math.absf %907 : vector<1x384xf32>
    %cst_423 = arith.constant 1.000000e+00 : f32
    %909 = vector.broadcast %cst_423 : f32 to vector<1x384xf32>
    %910 = arith.subf %909, %908 : vector<1x384xf32>
    %cst_424 = arith.constant 0.000000e+00 : f32
    %911 = vector.broadcast %cst_424 : f32 to vector<1x384xf32>
    %912 = arith.maximumf %910, %911 : vector<1x384xf32>
    %c0_425 = arith.constant 0 : index
    %c0_426 = arith.constant 0 : index
    %c52 = arith.constant 52 : index
    %913 = vector.load %arg1[%c0_425, %c0_426, %c52] : memref<1x4x648xf32, #tpu.memory_space<vmem>>, vector<1x4x384xf32>
    %914 = vector.shape_cast %913 : vector<1x4x384xf32> to vector<4x384xf32>
    %915 = vector.broadcast %912 : vector<1x384xf32> to vector<4x384xf32>
    %916 = arith.mulf %915, %914 : vector<4x384xf32>
    %917 = arith.addf %905, %916 : vector<4x384xf32>
    %cst_427 = arith.constant -2.000000e+00 : f32
    %918 = vector.broadcast %cst_427 : f32 to vector<1x384xf32>
    %919 = arith.subf %892, %918 : vector<1x384xf32>
    %920 = math.absf %919 : vector<1x384xf32>
    %cst_428 = arith.constant 1.000000e+00 : f32
    %921 = vector.broadcast %cst_428 : f32 to vector<1x384xf32>
    %922 = arith.subf %921, %920 : vector<1x384xf32>
    %cst_429 = arith.constant 0.000000e+00 : f32
    %923 = vector.broadcast %cst_429 : f32 to vector<1x384xf32>
    %924 = arith.maximumf %922, %923 : vector<1x384xf32>
    %c0_430 = arith.constant 0 : index
    %c0_431 = arith.constant 0 : index
    %c76 = arith.constant 76 : index
    %925 = vector.load %arg1[%c0_430, %c0_431, %c76] : memref<1x4x648xf32, #tpu.memory_space<vmem>>, vector<1x4x384xf32>
    %926 = vector.shape_cast %925 : vector<1x4x384xf32> to vector<4x384xf32>
    %927 = vector.broadcast %924 : vector<1x384xf32> to vector<4x384xf32>
    %928 = arith.mulf %927, %926 : vector<4x384xf32>
    %929 = arith.addf %917, %928 : vector<4x384xf32>
    %cst_432 = arith.constant -1.000000e+00 : f32
    %930 = vector.broadcast %cst_432 : f32 to vector<1x384xf32>
    %931 = arith.subf %892, %930 : vector<1x384xf32>
    %932 = math.absf %931 : vector<1x384xf32>
    %cst_433 = arith.constant 1.000000e+00 : f32
    %933 = vector.broadcast %cst_433 : f32 to vector<1x384xf32>
    %934 = arith.subf %933, %932 : vector<1x384xf32>
    %cst_434 = arith.constant 0.000000e+00 : f32
    %935 = vector.broadcast %cst_434 : f32 to vector<1x384xf32>
    %936 = arith.maximumf %934, %935 : vector<1x384xf32>
    %c0_435 = arith.constant 0 : index
    %c0_436 = arith.constant 0 : index
    %c100 = arith.constant 100 : index
    %937 = vector.load %arg1[%c0_435, %c0_436, %c100] : memref<1x4x648xf32, #tpu.memory_space<vmem>>, vector<1x4x384xf32>
    %938 = vector.shape_cast %937 : vector<1x4x384xf32> to vector<4x384xf32>
    %939 = vector.broadcast %936 : vector<1x384xf32> to vector<4x384xf32>
    %940 = arith.mulf %939, %938 : vector<4x384xf32>
    %941 = arith.addf %929, %940 : vector<4x384xf32>
    %cst_437 = arith.constant 0.000000e+00 : f32
    %942 = vector.broadcast %cst_437 : f32 to vector<1x384xf32>
    %943 = arith.subf %892, %942 : vector<1x384xf32>
    %944 = math.absf %943 : vector<1x384xf32>
    %cst_438 = arith.constant 1.000000e+00 : f32
    %945 = vector.broadcast %cst_438 : f32 to vector<1x384xf32>
    %946 = arith.subf %945, %944 : vector<1x384xf32>
    %cst_439 = arith.constant 0.000000e+00 : f32
    %947 = vector.broadcast %cst_439 : f32 to vector<1x384xf32>
    %948 = arith.maximumf %946, %947 : vector<1x384xf32>
    %c0_440 = arith.constant 0 : index
    %c0_441 = arith.constant 0 : index
    %c124 = arith.constant 124 : index
    %949 = vector.load %arg1[%c0_440, %c0_441, %c124] : memref<1x4x648xf32, #tpu.memory_space<vmem>>, vector<1x4x384xf32>
    %950 = vector.shape_cast %949 : vector<1x4x384xf32> to vector<4x384xf32>
    %951 = vector.broadcast %948 : vector<1x384xf32> to vector<4x384xf32>
    %952 = arith.mulf %951, %950 : vector<4x384xf32>
    %953 = arith.addf %941, %952 : vector<4x384xf32>
    %cst_442 = arith.constant 1.000000e+00 : f32
    %954 = vector.broadcast %cst_442 : f32 to vector<1x384xf32>
    %955 = arith.subf %892, %954 : vector<1x384xf32>
    %956 = math.absf %955 : vector<1x384xf32>
    %cst_443 = arith.constant 1.000000e+00 : f32
    %957 = vector.broadcast %cst_443 : f32 to vector<1x384xf32>
    %958 = arith.subf %957, %956 : vector<1x384xf32>
    %cst_444 = arith.constant 0.000000e+00 : f32
    %959 = vector.broadcast %cst_444 : f32 to vector<1x384xf32>
    %960 = arith.maximumf %958, %959 : vector<1x384xf32>
    %c0_445 = arith.constant 0 : index
    %c0_446 = arith.constant 0 : index
    %c148 = arith.constant 148 : index
    %961 = vector.load %arg1[%c0_445, %c0_446, %c148] : memref<1x4x648xf32, #tpu.memory_space<vmem>>, vector<1x4x384xf32>
    %962 = vector.shape_cast %961 : vector<1x4x384xf32> to vector<4x384xf32>
    %963 = vector.broadcast %960 : vector<1x384xf32> to vector<4x384xf32>
    %964 = arith.mulf %963, %962 : vector<4x384xf32>
    %965 = arith.addf %953, %964 : vector<4x384xf32>
    %cst_447 = arith.constant 2.000000e+00 : f32
    %966 = vector.broadcast %cst_447 : f32 to vector<1x384xf32>
    %967 = arith.subf %892, %966 : vector<1x384xf32>
    %968 = math.absf %967 : vector<1x384xf32>
    %cst_448 = arith.constant 1.000000e+00 : f32
    %969 = vector.broadcast %cst_448 : f32 to vector<1x384xf32>
    %970 = arith.subf %969, %968 : vector<1x384xf32>
    %cst_449 = arith.constant 0.000000e+00 : f32
    %971 = vector.broadcast %cst_449 : f32 to vector<1x384xf32>
    %972 = arith.maximumf %970, %971 : vector<1x384xf32>
    %c0_450 = arith.constant 0 : index
    %c0_451 = arith.constant 0 : index
    %c172 = arith.constant 172 : index
    %973 = vector.load %arg1[%c0_450, %c0_451, %c172] : memref<1x4x648xf32, #tpu.memory_space<vmem>>, vector<1x4x384xf32>
    %974 = vector.shape_cast %973 : vector<1x4x384xf32> to vector<4x384xf32>
    %975 = vector.broadcast %972 : vector<1x384xf32> to vector<4x384xf32>
    %976 = arith.mulf %975, %974 : vector<4x384xf32>
    %977 = arith.addf %965, %976 : vector<4x384xf32>
    %cst_452 = arith.constant 3.000000e+00 : f32
    %978 = vector.broadcast %cst_452 : f32 to vector<1x384xf32>
    %979 = arith.subf %892, %978 : vector<1x384xf32>
    %980 = math.absf %979 : vector<1x384xf32>
    %cst_453 = arith.constant 1.000000e+00 : f32
    %981 = vector.broadcast %cst_453 : f32 to vector<1x384xf32>
    %982 = arith.subf %981, %980 : vector<1x384xf32>
    %cst_454 = arith.constant 0.000000e+00 : f32
    %983 = vector.broadcast %cst_454 : f32 to vector<1x384xf32>
    %984 = arith.maximumf %982, %983 : vector<1x384xf32>
    %c0_455 = arith.constant 0 : index
    %c0_456 = arith.constant 0 : index
    %c196 = arith.constant 196 : index
    %985 = vector.load %arg1[%c0_455, %c0_456, %c196] : memref<1x4x648xf32, #tpu.memory_space<vmem>>, vector<1x4x384xf32>
    %986 = vector.shape_cast %985 : vector<1x4x384xf32> to vector<4x384xf32>
    %987 = vector.broadcast %984 : vector<1x384xf32> to vector<4x384xf32>
    %988 = arith.mulf %987, %986 : vector<4x384xf32>
    %989 = arith.addf %977, %988 : vector<4x384xf32>
    %cst_457 = arith.constant 4.000000e+00 : f32
    %990 = vector.broadcast %cst_457 : f32 to vector<1x384xf32>
    %991 = arith.subf %892, %990 : vector<1x384xf32>
    %992 = math.absf %991 : vector<1x384xf32>
    %cst_458 = arith.constant 1.000000e+00 : f32
    %993 = vector.broadcast %cst_458 : f32 to vector<1x384xf32>
    %994 = arith.subf %993, %992 : vector<1x384xf32>
    %cst_459 = arith.constant 0.000000e+00 : f32
    %995 = vector.broadcast %cst_459 : f32 to vector<1x384xf32>
    %996 = arith.maximumf %994, %995 : vector<1x384xf32>
    %c0_460 = arith.constant 0 : index
    %c0_461 = arith.constant 0 : index
    %c220 = arith.constant 220 : index
    %997 = vector.load %arg1[%c0_460, %c0_461, %c220] : memref<1x4x648xf32, #tpu.memory_space<vmem>>, vector<1x4x384xf32>
    %998 = vector.shape_cast %997 : vector<1x4x384xf32> to vector<4x384xf32>
    %999 = vector.broadcast %996 : vector<1x384xf32> to vector<4x384xf32>
    %1000 = arith.mulf %999, %998 : vector<4x384xf32>
    %1001 = arith.addf %989, %1000 : vector<4x384xf32>
    %cst_462 = arith.constant 5.000000e+00 : f32
    %1002 = vector.broadcast %cst_462 : f32 to vector<1x384xf32>
    %1003 = arith.subf %892, %1002 : vector<1x384xf32>
    %1004 = math.absf %1003 : vector<1x384xf32>
    %cst_463 = arith.constant 1.000000e+00 : f32
    %1005 = vector.broadcast %cst_463 : f32 to vector<1x384xf32>
    %1006 = arith.subf %1005, %1004 : vector<1x384xf32>
    %cst_464 = arith.constant 0.000000e+00 : f32
    %1007 = vector.broadcast %cst_464 : f32 to vector<1x384xf32>
    %1008 = arith.maximumf %1006, %1007 : vector<1x384xf32>
    %c0_465 = arith.constant 0 : index
    %c0_466 = arith.constant 0 : index
    %c244 = arith.constant 244 : index
    %1009 = vector.load %arg1[%c0_465, %c0_466, %c244] : memref<1x4x648xf32, #tpu.memory_space<vmem>>, vector<1x4x384xf32>
    %1010 = vector.shape_cast %1009 : vector<1x4x384xf32> to vector<4x384xf32>
    %1011 = vector.broadcast %1008 : vector<1x384xf32> to vector<4x384xf32>
    %1012 = arith.mulf %1011, %1010 : vector<4x384xf32>
    %1013 = arith.addf %1001, %1012 : vector<4x384xf32>
    %c32_467 = arith.constant 32 : index
    %c0_468 = arith.constant 0 : index
    %1014 = vector.load %arg13[%c32_467, %c0_468] : memref<36x384xf32, #tpu.memory_space<vmem>>, vector<4x384xf32>
    tpu.vector_store %arg13[%c32_467, %c0_468], %1013 {strides = array<i32>} : memref<36x384xf32, #tpu.memory_space<vmem>>, vector<4x384xf32>,
    %c0_469 = arith.constant 0 : index
    %c0_470 = arith.constant 0 : index
    %1015 = vector.load %arg13[%c0_469, %c0_470] : memref<36x384xf32, #tpu.memory_space<vmem>>, vector<36x384xf32>
    %cst_471 = arith.constant dense<0.000000e+00> : vector<4x384xf32>
    %1016 = tpu.matmul %8, %1015, %cst_471 {dimension_numbers = #tpu.dot_dimension_numbers<[1], [0], [0], [1], [0, 0, 1, 1], [], []>} : vector<4x36xf32>, vector<36x384xf32>, vector<4x384xf32> -> vector<4x384xf32>
    %1017 = vector.broadcast %9 : vector<4x1xf32> to vector<4x384xf32>
    %1018 = arith.addf %1016, %1017 : vector<4x384xf32>
    %c0_472 = arith.constant 0 : index
    %c0_473 = arith.constant 0 : index
    %c0_474 = arith.constant 0 : index
    %1019 = vector.load %arg11[%c0_472, %c0_473, %c0_474] : memref<1x4x384xf32, #tpu.memory_space<vmem>>, vector<1x4x384xf32>
    %1020 = vector.shape_cast %1019 : vector<1x4x384xf32> to vector<4x384xf32>
    %1021 = vector.shape_cast %1018 : vector<4x384xf32> to vector<1x4x384xf32>
    tpu.vector_store %arg11[%c0_472, %c0_473, %c0_474], %1021 {strides = array<i32>} : memref<1x4x384xf32, #tpu.memory_space<vmem>>, vector<1x4x384xf32>,
    %c0_475 = arith.constant 0 : index
    %c0_476 = arith.constant 0 : index
    %c0_477 = arith.constant 0 : index
    %1022 = vector.load %arg11[%c0_475, %c0_476, %c0_477] : memref<1x4x384xf32, #tpu.memory_space<vmem>>, vector<1x4x384xf32>
    %1023 = vector.shape_cast %1022 : vector<1x4x384xf32> to vector<4x384xf32>
    %1024 = vector.broadcast %1 : vector<1x384xf32> to vector<4x384xf32>
    %1025 = arith.mulf %1023, %1024 : vector<4x384xf32>
    %cst_478 = arith.constant dense<0.000000e+00> : vector<4xf32>
    %1026 = vector.multi_reduction <add>, %1025, %cst_478 [1] : vector<4x384xf32> to vector<4xf32>
    %1027 = vector.shape_cast %1026 : vector<4xf32> to vector<4x1xf32>
    %cst_479 = arith.constant dense<0.000000e+00> : vector<1xf32>
    %1028 = vector.multi_reduction <add>, %1027, %cst_479 [0] : vector<4x1xf32> to vector<1xf32>
    %1029 = vector.shape_cast %1028 : vector<1xf32> to vector<1x1xf32>
    %cst_480 = arith.constant 1.024000e+03 : f32
    %1030 = vector.broadcast %cst_480 : f32 to vector<1x1xf32>
    %1031 = arith.divf %1029, %1030 : vector<1x1xf32>
    %1032 = vector.broadcast %1031 : vector<1x1xf32> to vector<4x384xf32>
    %1033 = arith.subf %1023, %1032 : vector<4x384xf32>
    %1034 = vector.broadcast %1 : vector<1x384xf32> to vector<4x384xf32>
    %1035 = arith.mulf %1033, %1034 : vector<4x384xf32>
    %1036 = arith.mulf %1035, %1035 : vector<4x384xf32>
    %cst_481 = arith.constant dense<0.000000e+00> : vector<4xf32>
    %1037 = vector.multi_reduction <add>, %1036, %cst_481 [1] : vector<4x384xf32> to vector<4xf32>
    %1038 = vector.shape_cast %1037 : vector<4xf32> to vector<4x1xf32>
    %cst_482 = arith.constant dense<0.000000e+00> : vector<1xf32>
    %1039 = vector.multi_reduction <add>, %1038, %cst_482 [0] : vector<4x1xf32> to vector<1xf32>
    %1040 = vector.shape_cast %1039 : vector<1xf32> to vector<1x1xf32>
    %cst_483 = arith.constant 1.024000e+03 : f32
    %1041 = vector.broadcast %cst_483 : f32 to vector<1x1xf32>
    %1042 = arith.divf %1040, %1041 : vector<1x1xf32>
    %cst_484 = arith.constant 9.99999974E-6 : f32
    %1043 = vector.broadcast %cst_484 : f32 to vector<1x1xf32>
    %1044 = arith.addf %1042, %1043 : vector<1x1xf32>
    %1045 = math.rsqrt %1044 : vector<1x1xf32>
    %1046 = vector.broadcast %1031 : vector<1x1xf32> to vector<4x384xf32>
    %1047 = arith.subf %1023, %1046 : vector<4x384xf32>
    %1048 = vector.broadcast %1045 : vector<1x1xf32> to vector<4x384xf32>
    %1049 = arith.mulf %1047, %1048 : vector<4x384xf32>
    %1050 = vector.broadcast %10 : vector<4x1xf32> to vector<4x384xf32>
    %1051 = arith.mulf %1049, %1050 : vector<4x384xf32>
    %1052 = vector.broadcast %11 : vector<4x1xf32> to vector<4x384xf32>
    %1053 = arith.addf %1051, %1052 : vector<4x384xf32>
    %cst_485 = arith.constant 0.000000e+00 : f32
    %1054 = vector.broadcast %cst_485 : f32 to vector<4x384xf32>
    %1055 = arith.maximumf %1053, %1054 : vector<4x384xf32>
    %c0_486 = arith.constant 0 : index
    %c0_487 = arith.constant 0 : index
    %c0_488 = arith.constant 0 : index
    %1056 = vector.load %arg11[%c0_486, %c0_487, %c0_488] : memref<1x4x384xf32, #tpu.memory_space<vmem>>, vector<1x4x384xf32>
    %1057 = vector.shape_cast %1056 : vector<1x4x384xf32> to vector<4x384xf32>
    %1058 = vector.shape_cast %1055 : vector<4x384xf32> to vector<1x4x384xf32>
    tpu.vector_store %arg11[%c0_486, %c0_487, %c0_488], %1058 {strides = array<i32>} : memref<1x4x384xf32, #tpu.memory_space<vmem>>, vector<1x4x384xf32>,
    return
  }
  func.func @transform_0(%arg0: i32) -> (i32, i32, i32) {
    %c0_i32 = arith.constant 0 : i32
    %c0_i32_0 = arith.constant 0 : i32
    %c0_i32_1 = arith.constant 0 : i32
    return %arg0, %c0_i32, %c0_i32_0 : i32, i32, i32
  }
  func.func @transform_1(%arg0: i32) -> (i32, i32) {
    %c0_i32 = arith.constant 0 : i32
    %c0_i32_0 = arith.constant 0 : i32
    %c0_i32_1 = arith.constant 0 : i32
    return %c0_i32, %c0_i32_0 : i32, i32
  }
  func.func @transform_2(%arg0: i32) -> (i32, i32) {
    %c0_i32 = arith.constant 0 : i32
    %c0_i32_0 = arith.constant 0 : i32
    %c0_i32_1 = arith.constant 0 : i32
    return %c0_i32, %c0_i32_0 : i32, i32
  }
  func.func @transform_3(%arg0: i32) -> (i32, i32) {
    %c0_i32 = arith.constant 0 : i32
    %c0_i32_0 = arith.constant 0 : i32
    %c0_i32_1 = arith.constant 0 : i32
    return %c0_i32, %c0_i32_0 : i32, i32
  }
  func.func @transform_4(%arg0: i32) -> (i32, i32) {
    %c0_i32 = arith.constant 0 : i32
    %c0_i32_0 = arith.constant 0 : i32
    %c0_i32_1 = arith.constant 0 : i32
    return %c0_i32, %c0_i32_0 : i32, i32
  }
  func.func @transform_5(%arg0: i32) -> (i32, i32) {
    %c0_i32 = arith.constant 0 : i32
    %c0_i32_0 = arith.constant 0 : i32
    %c0_i32_1 = arith.constant 0 : i32
    return %c0_i32, %c0_i32_0 : i32, i32
  }
  func.func @transform_6(%arg0: i32) -> (i32, i32) {
    %c0_i32 = arith.constant 0 : i32
    %c0_i32_0 = arith.constant 0 : i32
    %c0_i32_1 = arith.constant 0 : i32
    return %c0_i32, %c0_i32_0 : i32, i32
  }
  func.func @transform_7(%arg0: i32) -> (i32, i32) {
    %c0_i32 = arith.constant 0 : i32
    %c0_i32_0 = arith.constant 0 : i32
    %c0_i32_1 = arith.constant 0 : i32
    return %c0_i32, %c0_i32_0 : i32, i32
  }
  func.func @transform_8(%arg0: i32) -> (i32, i32) {
    %c0_i32 = arith.constant 0 : i32
    %c0_i32_0 = arith.constant 0 : i32
    %c0_i32_1 = arith.constant 0 : i32
    return %c0_i32, %c0_i32_0 : i32, i32
  }
  func.func @transform_9(%arg0: i32) -> (i32, i32) {
    %c0_i32 = arith.constant 0 : i32
    %c0_i32_0 = arith.constant 0 : i32
    %c0_i32_1 = arith.constant 0 : i32
    return %c0_i32, %c0_i32_0 : i32, i32
  }
  func.func @transform_10(%arg0: i32) -> (i32, i32, i32) {
    %c0_i32 = arith.constant 0 : i32
    %c0_i32_0 = arith.constant 0 : i32
    %c0_i32_1 = arith.constant 0 : i32
    return %arg0, %c0_i32, %c0_i32_0 : i32, i32, i32
  }
}

</mosaic_0001>

<llo_original>
// kernel: tpu_custom_call.1
$region0: #{tpu_custom_call.1}
  #allocation0 [shape = 'u32[]', space=smem, size = 0x4, offset = 0x4, fixed_abs, tag = 'smem constant byte address 0x4 - core index']
  #allocation1 [shape = 'u32[72,128]{1,0:T(1,128)}', space=vmem, size = 0x9000, scoped, tag = 'internal scratch']
  #allocation2 [shape = 'f32[36,384]{1,0:T(8,128)}', space=vmem, size = 0xf000, scoped, tag = 'scratch operand']
  #allocation3 [shape = 'f32[36,384]{1,0:T(8,128)}', space=vmem, size = 0xf000, scoped, tag = 'scratch operand']
  #allocation4 [shape = 'f32[10,384]{1,0:T(8,128)}', space=vmem, size = 0x6000, scoped, tag = 'scratch operand']
  #allocation5 [shape = 'f32[9,384]{1,0:T(8,128)}', space=vmem, size = 0x6000, scoped, tag = 'scratch operand']
  %s0 = inlined_call_operand.hbm [shape: f32[2,4,648], index: 0, kind: input, shape index: {}]
  %s1 = inlined_call_operand.vmem [shape: f32[4,384], index: 1, kind: input, shape index: {}]
  %s2 = inlined_call_operand.vmem [shape: f32[10,36], index: 2, kind: input, shape index: {}]
  %s3 = inlined_call_operand.vmem [shape: f32[10,1], index: 3, kind: input, shape index: {}]
  %s4 = inlined_call_operand.vmem [shape: f32[10,1], index: 4, kind: input, shape index: {}]
  %s5 = inlined_call_operand.vmem [shape: f32[10,1], index: 5, kind: input, shape index: {}]
  %s6 = inlined_call_operand.vmem [shape: f32[4,36], index: 6, kind: input, shape index: {}]
  %s7 = inlined_call_operand.vmem [shape: f32[4,1], index: 7, kind: input, shape index: {}]
  %s8 = inlined_call_operand.vmem [shape: f32[4,1], index: 8, kind: input, shape index: {}]
  %s9 = inlined_call_operand.vmem [shape: f32[4,1], index: 9, kind: input, shape index: {}]
  %s10 = inlined_call_operand.hbm [shape: f32[2,4,384], index: 10, kind: output, shape index: {}]
  %s11 = sld [smem:[#allocation0]]
  $region77: #{tpu_custom_call.1} parent=0
    _
  %s13 = ssub.s32 1, %s11
  %s14 = scalar_select 0, %s13, %s11
  $region1: #{tpu_custom_call.1} parent=0
    #allocation6 [shape = 'u8[24576]{0}', space=vmem, size = 0x6000, scoped, tag = 'input window, operand 0']
    #allocation7 [shape = 's32[2]{0}', space=sflag, size = 0x8, scoped, tag = 'scoped memory for tpu_custom_call.1']
    #allocation8 [shape = 's32[2]{0}', space=sflag, size = 0x8, scoped, tag = 'scoped memory for tpu_custom_call.1']
    #allocation9 [shape = 'u8[12288]{0}', space=vmem, size = 0x3000, scoped, tag = 'output window, operand 0']
    %15 = vsyncpa [#allocation7], 0
    %s16 = scalar_lea.sflag [#allocation7], 1
    %17 = vsyncpa %s16, 0
    %18 = vsyncpa [#allocation8], 0
    %s19 = scalar_lea.sflag [#allocation8], 1
    %20 = vsyncpa %s19, 0
    loop: start=0, step=1, limit=4
    $region2: #{tpu_custom_call.1} parent=1 // loop_pre_header
      _
    $region3: #{tpu_custom_call.1} parent=1 // loop_header
      %s22 = sphi 0, %s26
      %p23 = scmp.ge.s32.totalorder %s22, 4
      %s32 = sphi 0, %s34
      %s35 = sphi 0, %s32
      %s36 = sphi 0, %s35
      %s52 = sphi 0, %s36
      %s56 = sphi 0, %s56
      %s58 = sphi 0, %s56
      %s59 = sphi 0, %s58
      %s73 = sphi 0, %s59
      %s77 = sphi 0, %s77
      %s79 = sphi 0, %s77
      %s80 = sphi 0, %s79
      %s94 = sphi 0, %s80
      %s98 = sphi 0, %s98
      %s100 = sphi 0, %s98
      %s101 = sphi 0, %s100
      %s115 = sphi 0, %s101
      %s119 = sphi 0, %s119
      %s121 = sphi 0, %s119
      %s122 = sphi 0, %s121
      %s136 = sphi 0, %s122
      %s140 = sphi 0, %s140
      %s142 = sphi 0, %s140
      %s143 = sphi 0, %s142
      %s157 = sphi 0, %s143
      %s161 = sphi 0, %s161
      %s163 = sphi 0, %s161
      %s164 = sphi 0, %s163
      %s178 = sphi 0, %s164
      %s182 = sphi 0, %s182
      %s184 = sphi 0, %s182
      %s185 = sphi 0, %s184
      %s199 = sphi 0, %s185
      %s203 = sphi 0, %s203
      %s205 = sphi 0, %s203
      %s206 = sphi 0, %s205
      %s220 = sphi 0, %s206
      %s224 = sphi 0, %s224
      %s226 = sphi 0, %s224
      %s227 = sphi 0, %s226
      %s241 = sphi 0, %s227
      %s247 = sphi 0, %s249
      %s250 = sphi 0, %s247
      %s251 = sphi 0, %s250
      %s267 = sphi 0, %s251
    $region4: #{tpu_custom_call.1} parent=1 // loop_header_branch
      %25 = sbr.rel (%p23) target = $region8
    $region5: #{tpu_custom_call.1} parent=1 // loop_body
      %s27 = ssub.s32 %s22, 1
      %s28 = ssub.s32 %s22, 2
      %s29 = sadd.s32 %s22, 1
      %s30 = ssub.s32 %s22, %s29
      %p31 = scmp.eq.s32.totalorder %s30, 0
      %s33 = sadd.s32 %s32, 1
      %s34 = scalar_select %p31, %s32, %s33
      %p37 = pneg %p31
      %p38 = scmp.eq.s32.totalorder %s22, 1
      %p39 = por %p37, %p38
      %p40 = scmp.ne.s32.totalorder %s32, %s35
      %p41 = scmp.eq.s32.totalorder %s22, 0
      %p42 = por %p40, %p41
      %p43 = scmp.ne.s32.totalorder %s32, %s35
      %p44 = scmp.eq.s32.totalorder %s27, 1
      %p45 = por %p43, %p44
      %p46 = scmp.ne.s32.totalorder %s35, %s36
      %p47 = scmp.eq.s32.totalorder %s27, 0
      %p48 = por %p46, %p47
      %p49 = scmp.ne.s32.totalorder %s35, %s36
      %p50 = scmp.eq.s32.totalorder %s28, 1
      %p51 = por %p49, %p50
      %p53 = scmp.ne.s32.totalorder %s36, %s52
      %p54 = scmp.eq.s32.totalorder %s28, 0
      %p55 = por %p53, %p54
      %s57 = sadd.s32 %s56, 1
      %p60 = scmp.eq.s32.totalorder %s22, 1
      %p61 = scmp.ne.s32.totalorder %s56, %s58
      %p62 = scmp.eq.s32.totalorder %s22, 0
      %p63 = por %p61, %p62
      %p64 = scmp.ne.s32.totalorder %s56, %s58
      %p65 = scmp.eq.s32.totalorder %s27, 1
      %p66 = por %p64, %p65
      %p67 = scmp.ne.s32.totalorder %s58, %s59
      %p68 = scmp.eq.s32.totalorder %s27, 0
      %p69 = por %p67, %p68
      %p70 = scmp.ne.s32.totalorder %s58, %s59
      %p71 = scmp.eq.s32.totalorder %s28, 1
      %p72 = por %p70, %p71
      %p74 = scmp.ne.s32.totalorder %s59, %s73
      %p75 = scmp.eq.s32.totalorder %s28, 0
      %p76 = por %p74, %p75
      %s78 = sadd.s32 %s77, 1
      %p81 = scmp.eq.s32.totalorder %s22, 1
      %p82 = scmp.ne.s32.totalorder %s77, %s79
      %p83 = scmp.eq.s32.totalorder %s22, 0
      %p84 = por %p82, %p83
      %p85 = scmp.ne.s32.totalorder %s77, %s79
      %p86 = scmp.eq.s32.totalorder %s27, 1
      %p87 = por %p85, %p86
      %p88 = scmp.ne.s32.totalorder %s79, %s80
      %p89 = scmp.eq.s32.totalorder %s27, 0
      %p90 = por %p88, %p89
      %p91 = scmp.ne.s32.totalorder %s79, %s80
      %p92 = scmp.eq.s32.totalorder %s28, 1
      %p93 = por %p91, %p92
      %p95 = scmp.ne.s32.totalorder %s80, %s94
      %p96 = scmp.eq.s32.totalorder %s28, 0
      %p97 = por %p95, %p96
      %s99 = sadd.s32 %s98, 1
      %p102 = scmp.eq.s32.totalorder %s22, 1
      %p103 = scmp.ne.s32.totalorder %s98, %s100
      %p104 = scmp.eq.s32.totalorder %s22, 0
      %p105 = por %p103, %p104
      %p106 = scmp.ne.s32.totalorder %s98, %s100
      %p107 = scmp.eq.s32.totalorder %s27, 1
      %p108 = por %p106, %p107
      %p109 = scmp.ne.s32.totalorder %s100, %s101
      %p110 = scmp.eq.s32.totalorder %s27, 0
      %p111 = por %p109, %p110
      %p112 = scmp.ne.s32.totalorder %s100, %s101
      %p113 = scmp.eq.s32.totalorder %s28, 1
      %p114 = por %p112, %p113
      %p116 = scmp.ne.s32.totalorder %s101, %s115
      %p117 = scmp.eq.s32.totalorder %s28, 0
      %p118 = por %p116, %p117
      %s120 = sadd.s32 %s119, 1
      %p123 = scmp.eq.s32.totalorder %s22, 1
      %p124 = scmp.ne.s32.totalorder %s119, %s121
      %p125 = scmp.eq.s32.totalorder %s22, 0
      %p126 = por %p124, %p125
      %p127 = scmp.ne.s32.totalorder %s119, %s121
      %p128 = scmp.eq.s32.totalorder %s27, 1
      %p129 = por %p127, %p128
      %p130 = scmp.ne.s32.totalorder %s121, %s122
      %p131 = scmp.eq.s32.totalorder %s27, 0
      %p132 = por %p130, %p131
      %p133 = scmp.ne.s32.totalorder %s121, %s122
      %p134 = scmp.eq.s32.totalorder %s28, 1
      %p135 = por %p133, %p134
      %p137 = scmp.ne.s32.totalorder %s122, %s136
      %p138 = scmp.eq.s32.totalorder %s28, 0
      %p139 = por %p137, %p138
      %s141 = sadd.s32 %s140, 1
      %p144 = scmp.eq.s32.totalorder %s22, 1
      %p145 = scmp.ne.s32.totalorder %s140, %s142
      %p146 = scmp.eq.s32.totalorder %s22, 0
      %p147 = por %p145, %p146
      %p148 = scmp.ne.s32.totalorder %s140, %s142
      %p149 = scmp.eq.s32.totalorder %s27, 1
      %p150 = por %p148, %p149
      %p151 = scmp.ne.s32.totalorder %s142, %s143
      %p152 = scmp.eq.s32.totalorder %s27, 0
      %p153 = por %p151, %p152
      %p154 = scmp.ne.s32.totalorder %s142, %s143
      %p155 = scmp.eq.s32.totalorder %s28, 1
      %p156 = por %p154, %p155
      %p158 = scmp.ne.s32.totalorder %s143, %s157
      %p159 = scmp.eq.s32.totalorder %s28, 0
      %p160 = por %p158, %p159
      %s162 = sadd.s32 %s161, 1
      %p165 = scmp.eq.s32.totalorder %s22, 1
      %p166 = scmp.ne.s32.totalorder %s161, %s163
      %p167 = scmp.eq.s32.totalorder %s22, 0
      %p168 = por %p166, %p167
      %p169 = scmp.ne.s32.totalorder %s161, %s163
      %p170 = scmp.eq.s32.totalorder %s27, 1
      %p171 = por %p169, %p170
      %p172 = scmp.ne.s32.totalorder %s163, %s164
      %p173 = scmp.eq.s32.totalorder %s27, 0
      %p174 = por %p172, %p173
      %p175 = scmp.ne.s32.totalorder %s163, %s164
      %p176 = scmp.eq.s32.totalorder %s28, 1
      %p177 = por %p175, %p176
      %p179 = scmp.ne.s32.totalorder %s164, %s178
      %p180 = scmp.eq.s32.totalorder %s28, 0
      %p181 = por %p179, %p180
      %s183 = sadd.s32 %s182, 1
      %p186 = scmp.eq.s32.totalorder %s22, 1
      %p187 = scmp.ne.s32.totalorder %s182, %s184
      %p188 = scmp.eq.s32.totalorder %s22, 0
      %p189 = por %p187, %p188
      %p190 = scmp.ne.s32.totalorder %s182, %s184
      %p191 = scmp.eq.s32.totalorder %s27, 1
      %p192 = por %p190, %p191
      %p193 = scmp.ne.s32.totalorder %s184, %s185
      %p194 = scmp.eq.s32.totalorder %s27, 0
      %p195 = por %p193, %p194
      %p196 = scmp.ne.s32.totalorder %s184, %s185
      %p197 = scmp.eq.s32.totalorder %s28, 1
      %p198 = por %p196, %p197
      %p200 = scmp.ne.s32.totalorder %s185, %s199
      %p201 = scmp.eq.s32.totalorder %s28, 0
      %p202 = por %p200, %p201
      %s204 = sadd.s32 %s203, 1
      %p207 = scmp.eq.s32.totalorder %s22, 1
      %p208 = scmp.ne.s32.totalorder %s203, %s205
      %p209 = scmp.eq.s32.totalorder %s22, 0
      %p210 = por %p208, %p209
      %p211 = scmp.ne.s32.totalorder %s203, %s205
      %p212 = scmp.eq.s32.totalorder %s27, 1
      %p213 = por %p211, %p212
      %p214 = scmp.ne.s32.totalorder %s205, %s206
      %p215 = scmp.eq.s32.totalorder %s27, 0
      %p216 = por %p214, %p215
      %p217 = scmp.ne.s32.totalorder %s205, %s206
      %p218 = scmp.eq.s32.totalorder %s28, 1
      %p219 = por %p217, %p218
      %p221 = scmp.ne.s32.totalorder %s206, %s220
      %p222 = scmp.eq.s32.totalorder %s28, 0
      %p223 = por %p221, %p222
      %s225 = sadd.s32 %s224, 1
      %p228 = scmp.eq.s32.totalorder %s22, 1
      %p229 = scmp.ne.s32.totalorder %s224, %s226
      %p230 = scmp.eq.s32.totalorder %s22, 0
      %p231 = por %p229, %p230
      %p232 = scmp.ne.s32.totalorder %s224, %s226
      %p233 = scmp.eq.s32.totalorder %s27, 1
      %p234 = por %p232, %p233
      %p235 = scmp.ne.s32.totalorder %s226, %s227
      %p236 = scmp.eq.s32.totalorder %s27, 0
      %p237 = por %p235, %p236
      %p238 = scmp.ne.s32.totalorder %s226, %s227
      %p239 = scmp.eq.s32.totalorder %s28, 1
      %p240 = por %p238, %p239
      %p242 = scmp.ne.s32.totalorder %s227, %s241
      %p243 = scmp.eq.s32.totalorder %s28, 0
      %p244 = por %p242, %p243
      %s245 = ssub.s32 %s22, %s29
      %p246 = scmp.eq.s32.totalorder %s245, 0
      %s248 = sadd.s32 %s247, 1
      %s249 = scalar_select %p246, %s247, %s248
      %p252 = pneg %p246
      %p253 = scmp.eq.s32.totalorder %s22, 1
      %p254 = por %p252, %p253
      %p255 = scmp.ne.s32.totalorder %s247, %s250
      %p256 = scmp.eq.s32.totalorder %s22, 0
      %p257 = por %p255, %p256
      %p258 = scmp.ne.s32.totalorder %s247, %s250
      %p259 = scmp.eq.s32.totalorder %s27, 1
      %p260 = por %p258, %p259
      %p261 = scmp.ne.s32.totalorder %s250, %s251
      %p262 = scmp.eq.s32.totalorder %s27, 0
      %p263 = por %p261, %p262
      %p264 = scmp.ne.s32.totalorder %s250, %s251
      %p265 = scmp.eq.s32.totalorder %s28, 1
      %p266 = por %p264, %p265
      %p268 = scmp.ne.s32.totalorder %s251, %s267
      %p269 = scmp.eq.s32.totalorder %s28, 0
      %p270 = por %p268, %p269
      %p271 = scmp.le.s32.totalorder 1, %s22
      %p272 = scmp.lt.s32.totalorder %s22, 3
      %p273 = pnand %p271, %p272
      %p274 = pneg %p273
      // Predicated region
      $region9: #{tpu_custom_call.1} parent=5 // pred_check
        _
      $region10: #{tpu_custom_call.1} parent=5 // pred_check_branch
        %276 = sbr.rel (%p273) target = $region12
      $region11: #{tpu_custom_call.1} parent=5 // pred_region
        %s277 = ssub.s32 %s22, 1
        // Predicated region
        $region13: #{tpu_custom_call.1} parent=11 // pred_check
          %p278 = pneg %p69
        $region14: #{tpu_custom_call.1} parent=11 // pred_check_branch
          %280 = sbr.rel (%p278) target = $region16
        $region15: #{tpu_custom_call.1} parent=11 // pred_region
          _
        $region16: #{tpu_custom_call.1} parent=11 // pred_fallthru
          _
        // Predicated region
        $region17: #{tpu_custom_call.1} parent=11 // pred_check
          %p281 = pneg %p90
        $region18: #{tpu_custom_call.1} parent=11 // pred_check_branch
          %283 = sbr.rel (%p281) target = $region20
        $region19: #{tpu_custom_call.1} parent=11 // pred_region
          _
        $region20: #{tpu_custom_call.1} parent=11 // pred_fallthru
          _
        // Predicated region
        $region21: #{tpu_custom_call.1} parent=11 // pred_check
          %p284 = pneg %p111
        $region22: #{tpu_custom_call.1} parent=11 // pred_check_branch
          %286 = sbr.rel (%p284) target = $region24
        $region23: #{tpu_custom_call.1} parent=11 // pred_region
          _
        $region24: #{tpu_custom_call.1} parent=11 // pred_fallthru
          _
        // Predicated region
        $region25: #{tpu_custom_call.1} parent=11 // pred_check
          %p287 = pneg %p132
        $region26: #{tpu_custom_call.1} parent=11 // pred_check_branch
          %289 = sbr.rel (%p287) target = $region28
        $region27: #{tpu_custom_call.1} parent=11 // pred_region
          _
        $region28: #{tpu_custom_call.1} parent=11 // pred_fallthru
          _
        // Predicated region
        $region29: #{tpu_custom_call.1} parent=11 // pred_check
          %p290 = pneg %p153
        $region30: #{tpu_custom_call.1} parent=11 // pred_check_branch
          %292 = sbr.rel (%p290) target = $region32
        $region31: #{tpu_custom_call.1} parent=11 // pred_region
          _
        $region32: #{tpu_custom_call.1} parent=11 // pred_fallthru
          _
        // Predicated region
        $region33: #{tpu_custom_call.1} parent=11 // pred_check
          %p293 = pneg %p174
        $region34: #{tpu_custom_call.1} parent=11 // pred_check_branch
          %295 = sbr.rel (%p293) target = $region36
        $region35: #{tpu_custom_call.1} parent=11 // pred_region
          _
        $region36: #{tpu_custom_call.1} parent=11 // pred_fallthru
          _
        // Predicated region
        $region37: #{tpu_custom_call.1} parent=11 // pred_check
          %p296 = pneg %p195
        $region38: #{tpu_custom_call.1} parent=11 // pred_check_branch
          %298 = sbr.rel (%p296) target = $region40
        $region39: #{tpu_custom_call.1} parent=11 // pred_region
          _
        $region40: #{tpu_custom_call.1} parent=11 // pred_fallthru
          _
        // Predicated region
        $region41: #{tpu_custom_call.1} parent=11 // pred_check
          %p299 = pneg %p216
        $region42: #{tpu_custom_call.1} parent=11 // pred_check_branch
          %301 = sbr.rel (%p299) target = $region44
        $region43: #{tpu_custom_call.1} parent=11 // pred_region
          _
        $region44: #{tpu_custom_call.1} parent=11 // pred_fallthru
          _
        // Predicated region
        $region45: #{tpu_custom_call.1} parent=11 // pred_check
          %p302 = pneg %p237
        $region46: #{tpu_custom_call.1} parent=11 // pred_check_branch
          %304 = sbr.rel (%p302) target = $region48
        $region47: #{tpu_custom_call.1} parent=11 // pred_region
          _
        $region48: #{tpu_custom_call.1} parent=11 // pred_fallthru
          _
      $region12: #{tpu_custom_call.1} parent=5 // pred_fallthru
        _
      %p305 = scmp.lt.s32.totalorder %s22, 2
      // Predicated region
      $region49: #{tpu_custom_call.1} parent=5 // pred_check
        %p306 = pneg %p305
      $region50: #{tpu_custom_call.1} parent=5 // pred_check_branch
        %308 = sbr.rel (%p306) target = $region52
      $region51: #{tpu_custom_call.1} parent=5 // pred_region
        // Predicated region
        $region53: #{tpu_custom_call.1} parent=51 // pred_check
          %p309 = pneg %p42
        $region54: #{tpu_custom_call.1} parent=51 // pred_check_branch
          %311 = sbr.rel (%p309) target = $region56
        $region55: #{tpu_custom_call.1} parent=51 // pred_region
          %s312 = sand.u32 %s32, 1
          %s313 = scalar_lea.sflag [#allocation7], %s312
          %s314 = sand.u32 %s32, 1
          %s315 = smul.addr %s314, 24
          %s316 = scalar_lea.vmem [#allocation6], %s315
          %318 = vsyncadd %s313, 0
          %s319 = smul.addr %s22, 6
          %s320 = smul.addr %s319, 4
          %s321 = scalar_lea.hbm %s0, %s320
          %s323 = sshll.u32 %s321, 4
          %s324 = int_to_ptr.hbm [resolvable:$true] %s323
          %s325 = sshll.u32 %s316, 4
          %s326 = int_to_ptr.vmem [resolvable:$true] %s325
          %328 = dma.hbm_to_vmem [thread:$0]  %s324, 384, %s326, %s313
        $region56: #{tpu_custom_call.1} parent=51 // pred_fallthru
          _
      $region52: #{tpu_custom_call.1} parent=5 // pred_fallthru
        _
      %p329 = scmp.le.s32.totalorder 1, %s22
      %p330 = scmp.lt.s32.totalorder %s22, 3
      %p331 = pnand %p329, %p330
      %p332 = pneg %p331
      // Predicated region
      $region57: #{tpu_custom_call.1} parent=5 // pred_check
        _
      $region58: #{tpu_custom_call.1} parent=5 // pred_check_branch
        %334 = sbr.rel (%p331) target = $region60
      $region59: #{tpu_custom_call.1} parent=5 // pred_region
        %s335 = ssub.s32 %s22, 1
        %s336 = sand.u32 %s35, 1
        %s337 = scalar_lea.sflag [#allocation7], %s336
        %s338 = sand.u32 %s35, 1
        %s339 = smul.addr %s338, 24
        %s340 = scalar_lea.vmem [#allocation6], %s339
        // Predicated region
        $region61: #{tpu_custom_call.1} parent=59 // pred_check
          %p341 = pneg %p48
        $region62: #{tpu_custom_call.1} parent=59 // pred_check_branch
          %343 = sbr.rel (%p341) target = $region64
        $region63: #{tpu_custom_call.1} parent=59 // pred_region
          %345 = dma.done %s337, 384
        $region64: #{tpu_custom_call.1} parent=59 // pred_fallthru
          _
        %s346 = sand.u32 %s35, 1
        %s347 = scalar_lea.sflag [#allocation7], %s346
        %s348 = sand.u32 %s35, 1
        %s349 = smul.addr %s348, 24
        %s350 = scalar_lea.vmem [#allocation6], %s349
        %p351 = pneg %p48
        %p352 = pneg %p45
        %p353 = pneg %p69
        %p354 = pneg %p66
        %p355 = pneg %p90
        %p356 = pneg %p87
        %p357 = pneg %p111
        %p358 = pneg %p108
        %p359 = pneg %p132
        %p360 = pneg %p129
        %p361 = pneg %p153
        %p362 = pneg %p150
        %p363 = pneg %p174
        %p364 = pneg %p171
        %p365 = pneg %p195
        %p366 = pneg %p192
        %p367 = pneg %p216
        %p368 = pneg %p213
        %p369 = pneg %p237
        %p370 = pneg %p234
        %p371 = pneg %p263
        %p372 = pneg %p260
        %s373 = sand.u32 %s250, 1
        %s374 = scalar_lea.sflag [#allocation8], %s373
        %s375 = sand.u32 %s250, 1
        %s376 = smul.addr %s375, 12
        %s377 = scalar_lea.vmem [#allocation9], %s376
        %v378 = vld [vmem:[%s1] ss:$4 sm:$0x7]
        %s379 = scalar_lea.vmem %s1, 1
        %v380 = vld [vmem:[%s379] ss:$4 sm:$0x7]
        %s381 = scalar_lea.vmem %s1, 2
        %v382 = vld [vmem:[%s381] ss:$4 sm:$0x7]
        %s383 = scalar_lea.vmem %s1, 3
        %v384 = vld [vmem:[%s383] ss:$4 sm:$0x7]
        %v385 = vld [vmem:[%s2] sm:$0xff]
        %v386 = vld [vmem:[%s2 + $0x8] sm:$0x3]
        %v387 = vld [vmem:[%s3] sm:$0xff]
        %v388 = vld [vmem:[%s3 + $0x8] sm:$0x3]
        %v389 = vld [vmem:[%s4] sm:$0xff]
        %v390 = vld [vmem:[%s4 + $0x8] sm:$0x3]
        %v391 = vld [vmem:[%s5] sm:$0xff]
        %v392 = vld [vmem:[%s5 + $0x8] sm:$0x3]
        %v393 = vld [vmem:[%s6] sm:$0xf]
        %v394 = vld [vmem:[%s7] sm:$0xf]
        %v395 = vld [vmem:[%s8] sm:$0xf]
        %v396 = vld [vmem:[%s9] sm:$0xf]
        %v397 = vld [vmem:[%s340] sm:$0xff]
        %v398 = vld [vmem:[%s340 + $0x8] sm:$0xff]
        %v400 = vperm.slane %v382, 0
        %v401 = vperm.slane %v382, 1
        %v402 = vperm.slane %v382, 2
        %v403 = vrot.slane %v401, 4
        %vm404 = vcmask 1043456
        %v405 = vsel %vm404, %v400, %v403
        %406 = vrot.lane.b32.xlu0 %v405, 95
        %v407 = vpop.permute.xlu0 %406
        %408 = vrot.lane.b32.xlu0 %v402, 95
        %v409 = vpop.permute.xlu0 %408
        %v410 = vrot.slane %v407, 4
        %v411 = vrot.slane %v409, 4
        %vm412 = vcmask 777216
        %v413 = vsel %vm412, %v410, %v407
        %v414 = vsel %vm404, %v410, %v411
        %v415 = vsel %vm412, %v414, %v409
        %v418 = vmul.f32 %v397, %v413
        %v419 = vmul.f32 %v398, %v415
        %422 = vst [vmem:[#allocation1] ss:$2 sm:$0xff] %v418
        %s423 = scalar_lea.vmem [#allocation1], 16
        %424 = vst [vmem:[%s423] ss:$2 sm:$0xff] %v419
        %v425 = vld.sshfl [vmem:[#allocation1] sm:$0xff pattern:$0x75316420]
        %v426 = vld.sshfl [vmem:[#allocation1 + $0x8] sm:$0xff pattern:$0x75316420]
        %v427 = vld.sshfl [vmem:[#allocation1 + $0x10] sm:$0xff pattern:$0x75316420]
        %v428 = vld.sshfl [vmem:[#allocation1 + $0x18] sm:$0xff pattern:$0x75316420]
        %429 = vrot.lane.b32.xlu0 %v425, 33
        %v430 = vpop.permute.xlu0 %429
        %431 = vrot.lane.b32.xlu0 %v426, 33
        %v432 = vpop.permute.xlu0 %431
        %433 = vrot.lane.b32.xlu0 %v427, 33
        %v434 = vpop.permute.xlu0 %433
        %435 = vrot.lane.b32.xlu0 %v428, 33
        %v436 = vpop.permute.xlu0 %435
        %vm437 = vcmask 269312
        %v438 = vsel %vm437, %v430, %v432
        %v439 = vsel %vm437, %v432, %v434
        %v440 = vsel %vm437, %v434, %v436
        %444 = vst [vmem:[#allocation2] sm:$0xf] %v438
        %445 = vst [vmem:[#allocation2 + $0x8] sm:$0xf] %v439
        %446 = vst [vmem:[#allocation2 + $0x10] sm:$0xf] %v440
        %v447 = vld [vmem:[%s340] sm:$0xff]
        %v448 = vld [vmem:[%s340 + $0x8] sm:$0xff]
        %s451 = scalar_lea.vmem [#allocation1], 1
        %452 = vst [vmem:[%s451] ss:$2 sm:$0xff] %v447
        %s453 = scalar_lea.vmem [#allocation1], 17
        %454 = vst [vmem:[%s453] ss:$2 sm:$0xff] %v448
        %v455 = vld.sshfl [vmem:[#allocation1] sm:$0xff pattern:$0x75316420]
        %v456 = vld.sshfl [vmem:[#allocation1 + $0x8] sm:$0xff pattern:$0x75316420]
        %v457 = vld.sshfl [vmem:[#allocation1 + $0x10] sm:$0xff pattern:$0x75316420]
        %v458 = vld.sshfl [vmem:[#allocation1 + $0x18] sm:$0xff pattern:$0x75316420]
        %459 = vrot.lane.b32.xlu0 %v455, 32
        %v460 = vpop.permute.xlu0 %459
        %461 = vrot.lane.b32.xlu0 %v456, 32
        %v462 = vpop.permute.xlu0 %461
        %463 = vrot.lane.b32.xlu0 %v457, 32
        %v464 = vpop.permute.xlu0 %463
        %465 = vrot.lane.b32.xlu0 %v458, 32
        %v466 = vpop.permute.xlu0 %465
        %vm467 = vcmask 261120
        %v468 = vsel %vm467, %v460, %v462
        %v469 = vsel %vm467, %v462, %v464
        %v470 = vsel %vm467, %v464, %v466
        %474 = vst [vmem:[#allocation2] sm:$0xf0] %v468
        %475 = vst [vmem:[#allocation2 + $0x8] sm:$0xf0] %v469
        %476 = vst [vmem:[#allocation2 + $0x10] sm:$0xf0] %v470
        %v477 = vld [vmem:[%s340] sm:$0xff]
        %v478 = vld [vmem:[%s340 + $0x8] sm:$0xff]
        %v480 = vperm.slane %v384, 0
        %v481 = vperm.slane %v384, 1
        %v482 = vperm.slane %v384, 2
        %v483 = vrot.slane %v481, 4
        %v484 = vsel %vm404, %v480, %v483
        %485 = vrot.lane.b32.xlu0 %v484, 97
        %v486 = vpop.permute.xlu0 %485
        %487 = vrot.lane.b32.xlu0 %v482, 97
        %v488 = vpop.permute.xlu0 %487
        %v489 = vrot.slane %v486, 4
        %v490 = vrot.slane %v488, 4
        %vm491 = vcmask 793600
        %v492 = vsel %vm491, %v489, %v486
        %v493 = vsel %vm404, %v489, %v490
        %v494 = vsel %vm491, %v493, %v488
        %v497 = vmul.f32 %v477, %v492
        %v498 = vmul.f32 %v478, %v494
        %501 = vst [vmem:[#allocation1] ss:$2 sm:$0xff] %v497
        %s502 = scalar_lea.vmem [#allocation1], 16
        %503 = vst [vmem:[%s502] ss:$2 sm:$0xff] %v498
        %v504 = vld.sshfl [vmem:[#allocation1] sm:$0xff pattern:$0x75316420]
        %v505 = vld.sshfl [vmem:[#allocation1 + $0x8] sm:$0xff pattern:$0x75316420]
        %v506 = vld.sshfl [vmem:[#allocation1 + $0x10] sm:$0xff pattern:$0x75316420]
        %v507 = vld.sshfl [vmem:[#allocation1 + $0x18] sm:$0xff pattern:$0x75316420]
        %508 = vrot.lane.b32.xlu0 %v504, 31
        %v509 = vpop.permute.xlu0 %508
        %510 = vrot.lane.b32.xlu0 %v505, 31
        %v511 = vpop.permute.xlu0 %510
        %512 = vrot.lane.b32.xlu0 %v506, 31
        %v513 = vpop.permute.xlu0 %512
        %514 = vrot.lane.b32.xlu0 %v507, 31
        %v515 = vpop.permute.xlu0 %514
        %vm516 = vcmask 252928
        %v517 = vsel %vm516, %v509, %v511
        %v518 = vsel %vm516, %v511, %v513
        %v519 = vsel %vm516, %v513, %v515
        %523 = vst [vmem:[#allocation2 + $0x18] sm:$0xf] %v517
        %524 = vst [vmem:[#allocation2 + $0x20] sm:$0xf] %v518
        %525 = vst [vmem:[#allocation2 + $0x28] sm:$0xf] %v519
        %v526 = vld [vmem:[%s340] sm:$0xff]
        %v527 = vld [vmem:[%s340 + $0x8] sm:$0xff]
        %528 = vrot.lane.b32.xlu0 %v405, 119
        %v529 = vpop.permute.xlu0 %528
        %530 = vrot.lane.b32.xlu0 %v402, 119
        %v531 = vpop.permute.xlu0 %530
        %v532 = vrot.slane %v529, 4
        %v533 = vrot.slane %v531, 4
        %vm534 = vcmask 973824
        %v535 = vsel %vm534, %v532, %v529
        %v536 = vsel %vm404, %v532, %v533
        %v537 = vsel %vm534, %v536, %v531
        %v540 = vmul.f32 %v526, %v535
        %v541 = vmul.f32 %v527, %v537
        %s544 = scalar_lea.vmem [#allocation1], 1
        %545 = vst [vmem:[%s544] ss:$2 sm:$0xff] %v540
        %s546 = scalar_lea.vmem [#allocation1], 17
        %547 = vst [vmem:[%s546] ss:$2 sm:$0xff] %v541
        %v548 = vld.sshfl [vmem:[#allocation1] sm:$0xff pattern:$0x75316420]
        %v549 = vld.sshfl [vmem:[#allocation1 + $0x8] sm:$0xff pattern:$0x75316420]
        %v550 = vld.sshfl [vmem:[#allocation1 + $0x10] sm:$0xff pattern:$0x75316420]
        %v551 = vld.sshfl [vmem:[#allocation1 + $0x18] sm:$0xff pattern:$0x75316420]
        %552 = vrot.lane.b32.xlu0 %v548, 9
        %v553 = vpop.permute.xlu0 %552
        %554 = vrot.lane.b32.xlu0 %v549, 9
        %v555 = vpop.permute.xlu0 %554
        %556 = vrot.lane.b32.xlu0 %v550, 9
        %v557 = vpop.permute.xlu0 %556
        %558 = vrot.lane.b32.xlu0 %v551, 9
        %v559 = vpop.permute.xlu0 %558
        %vm560 = vcmask 72704
        %v561 = vsel %vm560, %v553, %v555
        %v562 = vsel %vm560, %v555, %v557
        %v563 = vsel %vm560, %v557, %v559
        %567 = vst [vmem:[#allocation2 + $0x18] sm:$0xf0] %v561
        %568 = vst [vmem:[#allocation2 + $0x20] sm:$0xf0] %v562
        %569 = vst [vmem:[#allocation2 + $0x28] sm:$0xf0] %v563
        %v570 = vld [vmem:[%s340] sm:$0xff]
        %v571 = vld [vmem:[%s340 + $0x8] sm:$0xff]
        %574 = vst [vmem:[#allocation1] ss:$2 sm:$0xff] %v570
        %s575 = scalar_lea.vmem [#allocation1], 16
        %576 = vst [vmem:[%s575] ss:$2 sm:$0xff] %v571
        %v577 = vld.sshfl [vmem:[#allocation1] sm:$0xff pattern:$0x75316420]
        %v578 = vld.sshfl [vmem:[#allocation1 + $0x8] sm:$0xff pattern:$0x75316420]
        %v579 = vld.sshfl [vmem:[#allocation1 + $0x10] sm:$0xff pattern:$0x75316420]
        %v580 = vld.sshfl [vmem:[#allocation1 + $0x18] sm:$0xff pattern:$0x75316420]
        %581 = vrot.lane.b32.xlu0 %v577, 8
        %v582 = vpop.permute.xlu0 %581
        %583 = vrot.lane.b32.xlu0 %v578, 8
        %v584 = vpop.permute.xlu0 %583
        %585 = vrot.lane.b32.xlu0 %v579, 8
        %v586 = vpop.permute.xlu0 %585
        %587 = vrot.lane.b32.xlu0 %v580, 8
        %v588 = vpop.permute.xlu0 %587
        %vm589 = vcmask 64512
        %v590 = vsel %vm589, %v582, %v584
        %v591 = vsel %vm589, %v584, %v586
        %v592 = vsel %vm589, %v586, %v588
        %596 = vst [vmem:[#allocation2 + $0x30] sm:$0xf] %v590
        %597 = vst [vmem:[#allocation2 + $0x38] sm:$0xf] %v591
        %598 = vst [vmem:[#allocation2 + $0x40] sm:$0xf] %v592
        %v599 = vld [vmem:[%s340] sm:$0xff]
        %v600 = vld [vmem:[%s340 + $0x8] sm:$0xff]
        %601 = vrot.lane.b32.xlu0 %v484, 121
        %v602 = vpop.permute.xlu0 %601
        %603 = vrot.lane.b32.xlu0 %v482, 121
        %v604 = vpop.permute.xlu0 %603
        %v605 = vrot.slane %v602, 4
        %v606 = vrot.slane %v604, 4
        %vm607 = vcmask 990208
        %v608 = vsel %vm607, %v605, %v602
        %v609 = vsel %vm404, %v605, %v606
        %v610 = vsel %vm607, %v609, %v604
        %v613 = vmul.f32 %v599, %v608
        %v614 = vmul.f32 %v600, %v610
        %s617 = scalar_lea.vmem [#allocation1], 1
        %618 = vst [vmem:[%s617] ss:$2 sm:$0xff] %v613
        %s619 = scalar_lea.vmem [#allocation1], 17
        %620 = vst [vmem:[%s619] ss:$2 sm:$0xff] %v614
        %v621 = vld.sshfl [vmem:[#allocation1] sm:$0xff pattern:$0x75316420]
        %v622 = vld.sshfl [vmem:[#allocation1 + $0x8] sm:$0xff pattern:$0x75316420]
        %v623 = vld.sshfl [vmem:[#allocation1 + $0x10] sm:$0xff pattern:$0x75316420]
        %v624 = vld.sshfl [vmem:[#allocation1 + $0x18] sm:$0xff pattern:$0x75316420]
        %625 = vrot.lane.b32.xlu0 %v621, 7
        %v626 = vpop.permute.xlu0 %625
        %627 = vrot.lane.b32.xlu0 %v622, 7
        %v628 = vpop.permute.xlu0 %627
        %629 = vrot.lane.b32.xlu0 %v623, 7
        %v630 = vpop.permute.xlu0 %629
        %631 = vrot.lane.b32.xlu0 %v624, 7
        %v632 = vpop.permute.xlu0 %631
        %vm633 = vcmask 56320
        %v634 = vsel %vm633, %v626, %v628
        %v635 = vsel %vm633, %v628, %v630
        %v636 = vsel %vm633, %v630, %v632
        %640 = vst [vmem:[#allocation2 + $0x30] sm:$0xf0] %v634
        %641 = vst [vmem:[#allocation2 + $0x38] sm:$0xf0] %v635
        %642 = vst [vmem:[#allocation2 + $0x40] sm:$0xf0] %v636
        %v643 = vld [vmem:[%s340 + $0x4] sm:$0xff]
        %v644 = vld [vmem:[%s340 + $0xc] sm:$0xff]
        %645 = vrot.lane.b32.xlu0 %v405, 15
        %v646 = vpop.permute.xlu0 %645
        %647 = vrot.lane.b32.xlu0 %v402, 15
        %v648 = vpop.permute.xlu0 %647
        %v649 = vrot.slane %v646, 4
        %v650 = vrot.slane %v648, 4
        %vm651 = vcmask 121856
        %v652 = vsel %vm651, %v649, %v646
        %v653 = vsel %vm404, %v649, %v650
        %v654 = vsel %vm651, %v653, %v648
        %v657 = vmul.f32 %v643, %v652
        %v658 = vmul.f32 %v644, %v654
        %661 = vst [vmem:[#allocation1] ss:$2 sm:$0xff] %v657
        %s662 = scalar_lea.vmem [#allocation1], 16
        %663 = vst [vmem:[%s662] ss:$2 sm:$0xff] %v658
        %v664 = vld.sshfl [vmem:[#allocation1] sm:$0xff pattern:$0x75316420]
        %v665 = vld.sshfl [vmem:[#allocation1 + $0x8] sm:$0xff pattern:$0x75316420]
        %v666 = vld.sshfl [vmem:[#allocation1 + $0x10] sm:$0xff pattern:$0x75316420]
        %v667 = vld.sshfl [vmem:[#allocation1 + $0x18] sm:$0xff pattern:$0x75316420]
        %668 = vrot.lane.b32.xlu0 %v664, 113
        %v669 = vpop.permute.xlu0 %668
        %670 = vrot.lane.b32.xlu0 %v665, 113
        %v671 = vpop.permute.xlu0 %670
        %672 = vrot.lane.b32.xlu0 %v666, 113
        %v673 = vpop.permute.xlu0 %672
        %674 = vrot.lane.b32.xlu0 %v667, 113
        %v675 = vpop.permute.xlu0 %674
        %vm676 = vcmask 924672
        %v677 = vsel %vm676, %v669, %v671
        %v678 = vsel %vm676, %v671, %v673
        %v679 = vsel %vm676, %v673, %v675
        %683 = vst [vmem:[#allocation2 + $0x48] sm:$0xf] %v677
        %684 = vst [vmem:[#allocation2 + $0x50] sm:$0xf] %v678
        %685 = vst [vmem:[#allocation2 + $0x58] sm:$0xf] %v679
        %v686 = vld [vmem:[%s340 + $0x4] sm:$0xff]
        %v687 = vld [vmem:[%s340 + $0xc] sm:$0xff]
        %s690 = scalar_lea.vmem [#allocation1], 1
        %691 = vst [vmem:[%s690] ss:$2 sm:$0xff] %v686
        %s692 = scalar_lea.vmem [#allocation1], 17
        %693 = vst [vmem:[%s692] ss:$2 sm:$0xff] %v687
        %v694 = vld.sshfl [vmem:[#allocation1] sm:$0xff pattern:$0x75316420]
        %v695 = vld.sshfl [vmem:[#allocation1 + $0x8] sm:$0xff pattern:$0x75316420]
        %v696 = vld.sshfl [vmem:[#allocation1 + $0x10] sm:$0xff pattern:$0x75316420]
        %v697 = vld.sshfl [vmem:[#allocation1 + $0x18] sm:$0xff pattern:$0x75316420]
        %698 = vrot.lane.b32.xlu0 %v694, 112
        %v699 = vpop.permute.xlu0 %698
        %700 = vrot.lane.b32.xlu0 %v695, 112
        %v701 = vpop.permute.xlu0 %700
        %702 = vrot.lane.b32.xlu0 %v696, 112
        %v703 = vpop.permute.xlu0 %702
        %704 = vrot.lane.b32.xlu0 %v697, 112
        %v705 = vpop.permute.xlu0 %704
        %vm706 = vcmask 916480
        %v707 = vsel %vm706, %v699, %v701
        %v708 = vsel %vm706, %v701, %v703
        %v709 = vsel %vm706, %v703, %v705
        %713 = vst [vmem:[#allocation2 + $0x48] sm:$0xf0] %v707
        %714 = vst [vmem:[#allocation2 + $0x50] sm:$0xf0] %v708
        %715 = vst [vmem:[#allocation2 + $0x58] sm:$0xf0] %v709
        %v716 = vld [vmem:[%s340 + $0x4] sm:$0xff]
        %v717 = vld [vmem:[%s340 + $0xc] sm:$0xff]
        %718 = vrot.lane.b32.xlu0 %v484, 17
        %v719 = vpop.permute.xlu0 %718
        %720 = vrot.lane.b32.xlu0 %v482, 17
        %v721 = vpop.permute.xlu0 %720
        %v722 = vrot.slane %v719, 4
        %v723 = vrot.slane %v721, 4
        %vm724 = vcmask 138240
        %v725 = vsel %vm724, %v722, %v719
        %v726 = vsel %vm404, %v722, %v723
        %v727 = vsel %vm724, %v726, %v721
        %v730 = vmul.f32 %v716, %v725
        %v731 = vmul.f32 %v717, %v727
        %734 = vst [vmem:[#allocation1] ss:$2 sm:$0xff] %v730
        %s735 = scalar_lea.vmem [#allocation1], 16
        %736 = vst [vmem:[%s735] ss:$2 sm:$0xff] %v731
        %v737 = vld.sshfl [vmem:[#allocation1] sm:$0xff pattern:$0x75316420]
        %v738 = vld.sshfl [vmem:[#allocation1 + $0x8] sm:$0xff pattern:$0x75316420]
        %v739 = vld.sshfl [vmem:[#allocation1 + $0x10] sm:$0xff pattern:$0x75316420]
        %v740 = vld.sshfl [vmem:[#allocation1 + $0x18] sm:$0xff pattern:$0x75316420]
        %741 = vrot.lane.b32.xlu0 %v737, 111
        %v742 = vpop.permute.xlu0 %741
        %743 = vrot.lane.b32.xlu0 %v738, 111
        %v744 = vpop.permute.xlu0 %743
        %745 = vrot.lane.b32.xlu0 %v739, 111
        %v746 = vpop.permute.xlu0 %745
        %747 = vrot.lane.b32.xlu0 %v740, 111
        %v748 = vpop.permute.xlu0 %747
        %vm749 = vcmask 908288
        %v750 = vsel %vm749, %v742, %v744
        %v751 = vsel %vm749, %v744, %v746
        %v752 = vsel %vm749, %v746, %v748
        %756 = vst [vmem:[#allocation2 + $0x60] sm:$0xf] %v750
        %757 = vst [vmem:[#allocation2 + $0x68] sm:$0xf] %v751
        %758 = vst [vmem:[#allocation2 + $0x70] sm:$0xf] %v752
        %v759 = vld [vmem:[#allocation2] sm:$0xff]
        %v760 = vld [vmem:[#allocation2 + $0x8] sm:$0xff]
        %v761 = vld [vmem:[#allocation2 + $0x10] sm:$0xff]
        %v762 = vld [vmem:[#allocation2 + $0x18] sm:$0xff]
        %v763 = vld [vmem:[#allocation2 + $0x20] sm:$0xff]
        %v764 = vld [vmem:[#allocation2 + $0x28] sm:$0xff]
        %v765 = vld [vmem:[#allocation2 + $0x30] sm:$0xff]
        %v766 = vld [vmem:[#allocation2 + $0x38] sm:$0xff]
        %v767 = vld [vmem:[#allocation2 + $0x40] sm:$0xff]
        %v768 = vld [vmem:[#allocation2 + $0x48] sm:$0xff]
        %v769 = vld [vmem:[#allocation2 + $0x50] sm:$0xff]
        %v770 = vld [vmem:[#allocation2 + $0x58] sm:$0xff]
        %v771 = vld [vmem:[#allocation2 + $0x60] sm:$0xf]
        %v772 = vld [vmem:[#allocation2 + $0x68] sm:$0xf]
        %v773 = vld [vmem:[#allocation2 + $0x70] sm:$0xf]
        %775 = vset.pattern.permute.xlu0 0
        %776 = vperm.xlu0 %775, %v387
        %v777 = vpop.permute.xlu0 %776
        %780 = vset.pattern.permute.xlu0 0
        %781 = vperm.xlu0 %780, %v388
        %v782 = vpop.permute.xlu0 %781
        %vm784 = vcmask 293888
        %v786 = vsel %vm784, %v385, 0
        %v789 = vsel %vm784, %v386, 0
        %v792 = vsel %vm404, %v771, 0
        %v795 = vsel %vm404, %v772, 0
        %v798 = vsel %vm404, %v773, 0
        %800 = vmatpush.msra.mxu0 0.0
        %801 = vmatpush.msra.mxu0 0.0
        %802 = vmatpush.msra.mxu0 0.0
        %803 = vmatpush.msra.mxu0 0.0
        %804 = vmatpush.msra.mxu0 0.0
        %805 = vmatpush.msra.mxu0 0.0
        %806 = vmatpush.msra.mxu0 0.0
        %807 = vmatpush.msra.mxu0 0.0
        %808 = vmatpush.msra.mxu0 0.0
        %809 = vmatpush.msra.mxu0 0.0
        %810 = vmatpush.msra.mxu0 0.0
        %811 = vmatpush.msra.mxu0 %v792
        %812 = vmatpush.msra.mxu0 %v768
        %813 = vmatpush.msra.mxu0 %v765
        %814 = vmatpush.msra.mxu0 %v762
        %815 = vmatpush.msra.mxu0 %v759
        %816 = vmatmul.f32.gmra.mxu0 %v786
        %v817 = vpop.f32.mrf.mxu0
        %v818 = vadd.f32 %v777, %v817
        %819 = vmatmul.f32.gmra.mxu0 %v789
        %v820 = vpop.f32.mrf.mxu0
        %v821 = vadd.f32 %v782, %v820
        %822 = vdwg.mxu0
        %823 = vmatpush.msra.mxu0 0.0
        %824 = vmatpush.msra.mxu0 0.0
        %825 = vmatpush.msra.mxu0 0.0
        %826 = vmatpush.msra.mxu0 0.0
        %827 = vmatpush.msra.mxu0 0.0
        %828 = vmatpush.msra.mxu0 0.0
        %829 = vmatpush.msra.mxu0 0.0
        %830 = vmatpush.msra.mxu0 0.0
        %831 = vmatpush.msra.mxu0 0.0
        %832 = vmatpush.msra.mxu0 0.0
        %833 = vmatpush.msra.mxu0 0.0
        %834 = vmatpush.msra.mxu0 %v795
        %835 = vmatpush.msra.mxu0 %v769
        %836 = vmatpush.msra.mxu0 %v766
        %837 = vmatpush.msra.mxu0 %v763
        %838 = vmatpush.msra.mxu0 %v760
        %839 = vmatmul.f32.gmra.mxu0 %v786
        %v840 = vpop.f32.mrf.mxu0
        %v841 = vadd.f32 %v777, %v840
        %842 = vmatmul.f32.gmra.mxu0 %v789
        %v843 = vpop.f32.mrf.mxu0
        %v844 = vadd.f32 %v782, %v843
        %845 = vdwg.mxu0
        %846 = vmatpush.msra.mxu0 0.0
        %847 = vmatpush.msra.mxu0 0.0
        %848 = vmatpush.msra.mxu0 0.0
        %849 = vmatpush.msra.mxu0 0.0
        %850 = vmatpush.msra.mxu0 0.0
        %851 = vmatpush.msra.mxu0 0.0
        %852 = vmatpush.msra.mxu0 0.0
        %853 = vmatpush.msra.mxu0 0.0
        %854 = vmatpush.msra.mxu0 0.0
        %855 = vmatpush.msra.mxu0 0.0
        %856 = vmatpush.msra.mxu0 0.0
        %857 = vmatpush.msra.mxu0 %v798
        %858 = vmatpush.msra.mxu0 %v770
        %859 = vmatpush.msra.mxu0 %v767
        %860 = vmatpush.msra.mxu0 %v764
        %861 = vmatpush.msra.mxu0 %v761
        %862 = vmatmul.f32.gmra.mxu0 %v786
        %v863 = vpop.f32.mrf.mxu0
        %v864 = vadd.f32 %v777, %v863
        %865 = vmatmul.f32.gmra.mxu0 %v789
        %v866 = vpop.f32.mrf.mxu0
        %v867 = vadd.f32 %v782, %v866
        %868 = vdwg.mxu0
        %869 = vst [vmem:[#allocation4] sm:$0xff] %v818
        %870 = vst [vmem:[#allocation4 + $0x8] sm:$0xff] %v841
        %871 = vst [vmem:[#allocation4 + $0x10] sm:$0xff] %v864
        %872 = vst [vmem:[#allocation4 + $0x18] sm:$0x3] %v821
        %873 = vst [vmem:[#allocation4 + $0x20] sm:$0x3] %v844
        %874 = vst [vmem:[#allocation4 + $0x28] sm:$0x3] %v867
        %v875 = vld [vmem:[#allocation4] sm:$0x3]
        %v876 = vld [vmem:[#allocation4 + $0x8] sm:$0x3]
        %v877 = vld [vmem:[#allocation4 + $0x10] sm:$0x3]
        %v879 = vperm.slane %v380, 0
        %v880 = vperm.slane %v380, 1
        %v881 = vperm.slane %v380, 2
        %v885 = vmul.f32 %v875, %v879
        %v886 = vmul.f32 %v876, %v880
        %v887 = vmul.f32 %v877, %v881
        %vm888 = vcmask 1041408
        %v889 = vsel %vm888, %v885, 0.0
        %v890 = vsel %vm888, %v886, 0.0
        %v891 = vadd.f32 %v889, %v890
        %v892 = vsel %vm888, %v887, 0.0
        %v893 = vadd.f32 %v891, %v892
        %894 = vadd.xlane.f32.xlu0 %v893
        %v895 = vpop.xlane.xlu0 %894
        %v896 = vsel %vm888, %v895, 0.0
        %v897 = vrot.slane %v896, 4
        %v898 = vadd.f32 %v896, %v897
        %v899 = vrot.slane %v898, 2
        %v900 = vadd.f32 %v898, %v899
        %v901 = vrot.slane %v900, 1
        %v902 = vadd.f32 %v900, %v901
        %v903 = vrcp.pop 512.0
        %v904 = vmul.f32 512.0, %v903
        %v905 = vsub.f32 1.0, %v904
        %v906 = vmul.f32 %v903, %v905
        %v907 = vadd.f32 %v903, %v906
        %vm908 = vweird.f32 %v903
        %v909 = vsel %vm908, %v903, %v907
        %v910 = vmul.f32 %v902, %v909
        %v911 = vsub.f32 %v875, %v910
        %v912 = vsub.f32 %v876, %v910
        %v913 = vsub.f32 %v877, %v910
        %v914 = vmul.f32 %v911, %v879
        %v915 = vmul.f32 %v912, %v880
        %v916 = vmul.f32 %v913, %v881
        %v917 = vmul.f32 %v914, %v914
        %v918 = vmul.f32 %v915, %v915
        %v919 = vmul.f32 %v916, %v916
        %v920 = vsel %vm888, %v917, 0.0
        %v921 = vsel %vm888, %v918, 0.0
        %v922 = vadd.f32 %v920, %v921
        %v923 = vsel %vm888, %v919, 0.0
        %v924 = vadd.f32 %v922, %v923
        %925 = vadd.xlane.f32.xlu0 %v924
        %v926 = vpop.xlane.xlu0 %925
        %v927 = vsel %vm888, %v926, 0.0
        %v928 = vrot.slane %v927, 4
        %v929 = vadd.f32 %v927, %v928
        %v930 = vrot.slane %v929, 2
        %v931 = vadd.f32 %v929, %v930
        %v932 = vrot.slane %v931, 1
        %v933 = vadd.f32 %v931, %v932
        %v934 = vmul.f32 %v933, %v909
        %v935 = vadd.f32 %v934, 1e-05
        %v936 = vrsqrt.pop %v935
        %v937 = vmul.f32 %v936, %v935
        %v938 = vmul.f32 %v937, %v936
        %v939 = vmul.f32 0.5, %v938
        %v940 = vsub.f32 1.5, %v939
        %v941 = vmul.f32 %v936, %v940
        %vm942 = vweird.f32 %v935
        %vm943 = vweird.f32 %v936
        %vm944 = vmor %vm942, %vm943
        %v945 = vsel %vm944, %v936, %v941
        %v946 = vmul.f32 %v911, %v945
        %v947 = vmul.f32 %v912, %v945
        %v948 = vmul.f32 %v913, %v945
        %950 = vset.pattern.permute.xlu0 0
        %951 = vperm.xlu0 %950, %v389
        %v952 = vpop.permute.xlu0 %951
        %v954 = vmul.f32 %v946, %v952
        %v955 = vmul.f32 %v947, %v952
        %v956 = vmul.f32 %v948, %v952
        %958 = vset.pattern.permute.xlu0 0
        %959 = vperm.xlu0 %958, %v391
        %v960 = vpop.permute.xlu0 %959
        %v962 = vadd.f32 %v954, %v960
        %v963 = vadd.f32 %v955, %v960
        %v964 = vadd.f32 %v956, %v960
        %v965 = vtanh.pop %v962
        %v966 = vtanh.pop %v963
        %v967 = vtanh.pop %v964
        %v968 = vld [vmem:[#allocation4] sm:$0xc]
        %v969 = vld [vmem:[#allocation4 + $0x8] sm:$0xc]
        %v970 = vld [vmem:[#allocation4 + $0x10] sm:$0xc]
        %v971 = vmul.f32 %v968, %v879
        %v972 = vmul.f32 %v969, %v880
        %v973 = vmul.f32 %v970, %v881
        %vm974 = vcmask 1043458
        %v975 = vsel %vm974, %v971, 0.0
        %v976 = vsel %vm974, %v972, 0.0
        %v977 = vadd.f32 %v975, %v976
        %v978 = vsel %vm974, %v973, 0.0
        %v979 = vadd.f32 %v977, %v978
        %980 = vadd.xlane.f32.xlu0 %v979
        %v981 = vpop.xlane.xlu0 %980
        %v983 = vrot.slane %v981, 2
        %v985 = vsel %vm888, %v983, 0.0
        %v986 = vrot.slane %v985, 4
        %v987 = vadd.f32 %v985, %v986
        %v988 = vrot.slane %v987, 2
        %v989 = vadd.f32 %v987, %v988
        %v990 = vrot.slane %v989, 1
        %v991 = vadd.f32 %v989, %v990
        %v992 = vmul.f32 %v991, %v909
        %v993 = vsub.f32 %v968, %v992
        %v994 = vsub.f32 %v969, %v992
        %v995 = vsub.f32 %v970, %v992
        %v996 = vmul.f32 %v993, %v879
        %v997 = vmul.f32 %v994, %v880
        %v998 = vmul.f32 %v995, %v881
        %v999 = vmul.f32 %v996, %v996
        %v1000 = vmul.f32 %v997, %v997
        %v1001 = vmul.f32 %v998, %v998
        %v1002 = vsel %vm974, %v999, 0.0
        %v1003 = vsel %vm974, %v1000, 0.0
        %v1004 = vadd.f32 %v1002, %v1003
        %v1005 = vsel %vm974, %v1001, 0.0
        %v1006 = vadd.f32 %v1004, %v1005
        %1007 = vadd.xlane.f32.xlu0 %v1006
        %v1008 = vpop.xlane.xlu0 %1007
        %v1010 = vrot.slane %v1008, 2
        %v1012 = vsel %vm888, %v1010, 0.0
        %v1013 = vrot.slane %v1012, 4
        %v1014 = vadd.f32 %v1012, %v1013
        %v1015 = vrot.slane %v1014, 2
        %v1016 = vadd.f32 %v1014, %v1015
        %v1017 = vrot.slane %v1016, 1
        %v1018 = vadd.f32 %v1016, %v1017
        %v1019 = vmul.f32 %v1018, %v909
        %v1020 = vadd.f32 %v1019, 1e-05
        %v1021 = vrsqrt.pop %v1020
        %v1022 = vmul.f32 %v1021, %v1020
        %v1023 = vmul.f32 %v1022, %v1021
        %v1024 = vmul.f32 0.5, %v1023
        %v1025 = vsub.f32 1.5, %v1024
        %v1026 = vmul.f32 %v1021, %v1025
        %vm1027 = vweird.f32 %v1020
        %vm1028 = vweird.f32 %v1021
        %vm1029 = vmor %vm1027, %vm1028
        %v1030 = vsel %vm1029, %v1021, %v1026
        %v1031 = vmul.f32 %v993, %v1030
        %v1032 = vmul.f32 %v994, %v1030
        %v1033 = vmul.f32 %v995, %v1030
        %v1034 = vmul.f32 %v1031, %v952
        %v1035 = vmul.f32 %v1032, %v952
        %v1036 = vmul.f32 %v1033, %v952
        %v1037 = vadd.f32 %v1034, %v960
        %v1038 = vadd.f32 %v1035, %v960
        %v1039 = vadd.f32 %v1036, %v960
        %v1040 = vtanh.pop %v1037
        %v1041 = vtanh.pop %v1038
        %v1042 = vtanh.pop %v1039
        %v1043 = vld [vmem:[#allocation4] sm:$0x30]
        %v1044 = vld [vmem:[#allocation4 + $0x8] sm:$0x30]
        %v1045 = vld [vmem:[#allocation4 + $0x10] sm:$0x30]
        %v1046 = vmul.f32 %v1043, %v879
        %v1047 = vmul.f32 %v1044, %v880
        %v1048 = vmul.f32 %v1045, %v881
        %vm1049 = vcmask 1045508
        %v1050 = vsel %vm1049, %v1046, 0.0
        %v1051 = vsel %vm1049, %v1047, 0.0
        %v1052 = vadd.f32 %v1050, %v1051
        %v1053 = vsel %vm1049, %v1048, 0.0
        %v1054 = vadd.f32 %v1052, %v1053
        %1055 = vadd.xlane.f32.xlu0 %v1054
        %v1056 = vpop.xlane.xlu0 %1055
        %v1058 = vrot.slane %v1056, 4
        %v1060 = vsel %vm888, %v1058, 0.0
        %v1061 = vrot.slane %v1060, 4
        %v1062 = vadd.f32 %v1060, %v1061
        %v1063 = vrot.slane %v1062, 2
        %v1064 = vadd.f32 %v1062, %v1063
        %v1065 = vrot.slane %v1064, 1
        %v1066 = vadd.f32 %v1064, %v1065
        %v1067 = vmul.f32 %v1066, %v909
        %v1068 = vsub.f32 %v1043, %v1067
        %v1069 = vsub.f32 %v1044, %v1067
        %v1070 = vsub.f32 %v1045, %v1067
        %v1071 = vmul.f32 %v1068, %v879
        %v1072 = vmul.f32 %v1069, %v880
        %v1073 = vmul.f32 %v1070, %v881
        %v1074 = vmul.f32 %v1071, %v1071
        %v1075 = vmul.f32 %v1072, %v1072
        %v1076 = vmul.f32 %v1073, %v1073
        %v1077 = vsel %vm1049, %v1074, 0.0
        %v1078 = vsel %vm1049, %v1075, 0.0
        %v1079 = vadd.f32 %v1077, %v1078
        %v1080 = vsel %vm1049, %v1076, 0.0
        %v1081 = vadd.f32 %v1079, %v1080
        %1082 = vadd.xlane.f32.xlu0 %v1081
        %v1083 = vpop.xlane.xlu0 %1082
        %v1085 = vrot.slane %v1083, 4
        %v1087 = vsel %vm888, %v1085, 0.0
        %v1088 = vrot.slane %v1087, 4
        %v1089 = vadd.f32 %v1087, %v1088
        %v1090 = vrot.slane %v1089, 2
        %v1091 = vadd.f32 %v1089, %v1090
        %v1092 = vrot.slane %v1091, 1
        %v1093 = vadd.f32 %v1091, %v1092
        %v1094 = vmul.f32 %v1093, %v909
        %v1095 = vadd.f32 %v1094, 1e-05
        %v1096 = vrsqrt.pop %v1095
        %v1097 = vmul.f32 %v1096, %v1095
        %v1098 = vmul.f32 %v1097, %v1096
        %v1099 = vmul.f32 0.5, %v1098
        %v1100 = vsub.f32 1.5, %v1099
        %v1101 = vmul.f32 %v1096, %v1100
        %vm1102 = vweird.f32 %v1095
        %vm1103 = vweird.f32 %v1096
        %vm1104 = vmor %vm1102, %vm1103
        %v1105 = vsel %vm1104, %v1096, %v1101
        %v1106 = vmul.f32 %v1068, %v1105
        %v1107 = vmul.f32 %v1069, %v1105
        %v1108 = vmul.f32 %v1070, %v1105
        %v1109 = vmul.f32 %v1106, %v952
        %v1110 = vmul.f32 %v1107, %v952
        %v1111 = vmul.f32 %v1108, %v952
        %v1112 = vadd.f32 %v1109, %v960
        %v1113 = vadd.f32 %v1110, %v960
        %v1114 = vadd.f32 %v1111, %v960
        %v1115 = vtanh.pop %v1112
        %v1116 = vtanh.pop %v1113
        %v1117 = vtanh.pop %v1114
        %v1118 = vld [vmem:[#allocation4] sm:$0xc0]
        %v1119 = vld [vmem:[#allocation4 + $0x8] sm:$0xc0]
        %v1120 = vld [vmem:[#allocation4 + $0x10] sm:$0xc0]
        %v1121 = vmul.f32 %v1118, %v879
        %v1122 = vmul.f32 %v1119, %v880
        %v1123 = vmul.f32 %v1120, %v881
        %vm1124 = vcmask 1047558
        %v1125 = vsel %vm1124, %v1121, 0.0
        %v1126 = vsel %vm1124, %v1122, 0.0
        %v1127 = vadd.f32 %v1125, %v1126
        %v1128 = vsel %vm1124, %v1123, 0.0
        %v1129 = vadd.f32 %v1127, %v1128
        %1130 = vadd.xlane.f32.xlu0 %v1129
        %v1131 = vpop.xlane.xlu0 %1130
        %v1133 = vrot.slane %v1131, 6
        %v1135 = vsel %vm888, %v1133, 0.0
        %v1136 = vrot.slane %v1135, 4
        %v1137 = vadd.f32 %v1135, %v1136
        %v1138 = vrot.slane %v1137, 2
        %v1139 = vadd.f32 %v1137, %v1138
        %v1140 = vrot.slane %v1139, 1
        %v1141 = vadd.f32 %v1139, %v1140
        %v1142 = vmul.f32 %v1141, %v909
        %v1143 = vsub.f32 %v1118, %v1142
        %v1144 = vsub.f32 %v1119, %v1142
        %v1145 = vsub.f32 %v1120, %v1142
        %v1146 = vmul.f32 %v1143, %v879
        %v1147 = vmul.f32 %v1144, %v880
        %v1148 = vmul.f32 %v1145, %v881
        %v1149 = vmul.f32 %v1146, %v1146
        %v1150 = vmul.f32 %v1147, %v1147
        %v1151 = vmul.f32 %v1148, %v1148
        %v1152 = vsel %vm1124, %v1149, 0.0
        %v1153 = vsel %vm1124, %v1150, 0.0
        %v1154 = vadd.f32 %v1152, %v1153
        %v1155 = vsel %vm1124, %v1151, 0.0
        %v1156 = vadd.f32 %v1154, %v1155
        %1157 = vadd.xlane.f32.xlu0 %v1156
        %v1158 = vpop.xlane.xlu0 %1157
        %v1160 = vrot.slane %v1158, 6
        %v1162 = vsel %vm888, %v1160, 0.0
        %v1163 = vrot.slane %v1162, 4
        %v1164 = vadd.f32 %v1162, %v1163
        %v1165 = vrot.slane %v1164, 2
        %v1166 = vadd.f32 %v1164, %v1165
        %v1167 = vrot.slane %v1166, 1
        %v1168 = vadd.f32 %v1166, %v1167
        %v1169 = vmul.f32 %v1168, %v909
        %v1170 = vadd.f32 %v1169, 1e-05
        %v1171 = vrsqrt.pop %v1170
        %v1172 = vmul.f32 %v1171, %v1170
        %v1173 = vmul.f32 %v1172, %v1171
        %v1174 = vmul.f32 0.5, %v1173
        %v1175 = vsub.f32 1.5, %v1174
        %v1176 = vmul.f32 %v1171, %v1175
        %vm1177 = vweird.f32 %v1170
        %vm1178 = vweird.f32 %v1171
        %vm1179 = vmor %vm1177, %vm1178
        %v1180 = vsel %vm1179, %v1171, %v1176
        %v1181 = vmul.f32 %v1143, %v1180
        %v1182 = vmul.f32 %v1144, %v1180
        %v1183 = vmul.f32 %v1145, %v1180
        %v1184 = vmul.f32 %v1181, %v952
        %v1185 = vmul.f32 %v1182, %v952
        %v1186 = vmul.f32 %v1183, %v952
        %v1187 = vadd.f32 %v1184, %v960
        %v1188 = vadd.f32 %v1185, %v960
        %v1189 = vadd.f32 %v1186, %v960
        %v1190 = vtanh.pop %v1187
        %v1191 = vtanh.pop %v1188
        %v1192 = vtanh.pop %v1189
        %v1193 = vld [vmem:[#allocation4 + $0x18] sm:$0x3]
        %v1194 = vld [vmem:[#allocation4 + $0x20] sm:$0x3]
        %v1195 = vld [vmem:[#allocation4 + $0x28] sm:$0x3]
        %v1196 = vmul.f32 %v1193, %v879
        %v1197 = vmul.f32 %v1194, %v880
        %v1198 = vmul.f32 %v1195, %v881
        %v1199 = vsel %vm888, %v1196, 0.0
        %v1200 = vsel %vm888, %v1197, 0.0
        %v1201 = vadd.f32 %v1199, %v1200
        %v1202 = vsel %vm888, %v1198, 0.0
        %v1203 = vadd.f32 %v1201, %v1202
        %1204 = vadd.xlane.f32.xlu0 %v1203
        %v1205 = vpop.xlane.xlu0 %1204
        %v1206 = vsel %vm888, %v1205, 0.0
        %v1207 = vrot.slane %v1206, 4
        %v1208 = vadd.f32 %v1206, %v1207
        %v1209 = vrot.slane %v1208, 2
        %v1210 = vadd.f32 %v1208, %v1209
        %v1211 = vrot.slane %v1210, 1
        %v1212 = vadd.f32 %v1210, %v1211
        %v1213 = vmul.f32 %v1212, %v909
        %v1214 = vsub.f32 %v1193, %v1213
        %v1215 = vsub.f32 %v1194, %v1213
        %v1216 = vsub.f32 %v1195, %v1213
        %v1217 = vmul.f32 %v1214, %v879
        %v1218 = vmul.f32 %v1215, %v880
        %v1219 = vmul.f32 %v1216, %v881
        %v1220 = vmul.f32 %v1217, %v1217
        %v1221 = vmul.f32 %v1218, %v1218
        %v1222 = vmul.f32 %v1219, %v1219
        %v1223 = vsel %vm888, %v1220, 0.0
        %v1224 = vsel %vm888, %v1221, 0.0
        %v1225 = vadd.f32 %v1223, %v1224
        %v1226 = vsel %vm888, %v1222, 0.0
        %v1227 = vadd.f32 %v1225, %v1226
        %1228 = vadd.xlane.f32.xlu0 %v1227
        %v1229 = vpop.xlane.xlu0 %1228
        %v1230 = vsel %vm888, %v1229, 0.0
        %v1231 = vrot.slane %v1230, 4
        %v1232 = vadd.f32 %v1230, %v1231
        %v1233 = vrot.slane %v1232, 2
        %v1234 = vadd.f32 %v1232, %v1233
        %v1235 = vrot.slane %v1234, 1
        %v1236 = vadd.f32 %v1234, %v1235
        %v1237 = vmul.f32 %v1236, %v909
        %v1238 = vadd.f32 %v1237, 1e-05
        %v1239 = vrsqrt.pop %v1238
        %v1240 = vmul.f32 %v1239, %v1238
        %v1241 = vmul.f32 %v1240, %v1239
        %v1242 = vmul.f32 0.5, %v1241
        %v1243 = vsub.f32 1.5, %v1242
        %v1244 = vmul.f32 %v1239, %v1243
        %vm1245 = vweird.f32 %v1238
        %vm1246 = vweird.f32 %v1239
        %vm1247 = vmor %vm1245, %vm1246
        %v1248 = vsel %vm1247, %v1239, %v1244
        %v1249 = vmul.f32 %v1214, %v1248
        %v1250 = vmul.f32 %v1215, %v1248
        %v1251 = vmul.f32 %v1216, %v1248
        %1253 = vset.pattern.permute.xlu0 0
        %1254 = vperm.xlu0 %1253, %v390
        %v1255 = vpop.permute.xlu0 %1254
        %v1257 = vmul.f32 %v1249, %v1255
        %v1258 = vmul.f32 %v1250, %v1255
        %v1259 = vmul.f32 %v1251, %v1255
        %1261 = vset.pattern.permute.xlu0 0
        %1262 = vperm.xlu0 %1261, %v392
        %v1263 = vpop.permute.xlu0 %1262
        %v1265 = vadd.f32 %v1257, %v1263
        %v1266 = vadd.f32 %v1258, %v1263
        %v1267 = vadd.f32 %v1259, %v1263
        %v1268 = vtanh.pop %v1265
        %v1269 = vtanh.pop %v1266
        %v1270 = vtanh.pop %v1267
        %v1271 = vadd.f32 %v1115, 0.0
        %v1272 = vadd.f32 %v1116, 0.0
        %v1273 = vadd.f32 %v1117, 0.0
        %1277 = vst [vmem:[#allocation1] sm:$0xff] %v1271
        %1278 = vst [vmem:[#allocation1 + $0x9] sm:$0xff] %v1272
        %1279 = vst [vmem:[#allocation1 + $0x12] sm:$0xff] %v1273
        %s1280 = scalar_lea.vmem [#allocation1], 5
        %v1281 = vld [vmem:[%s1280] ss:$9 sm:$0xff]
        %v1283 = vadd.f32 %v378, %v1281
        %v1284 = vmax.f32 %v1283, 0.0
        %v1285 = vmin.f32 %v1284, 15.0
        %v1286 = vsub.f32 %v1285, %v378
        %v1287 = vlaneseq
        %vm1288 = vcmp.ge.s32.totalorder %v1287, 0
        %vm1289 = vcmp.lt.s32.totalorder %v1287, 384
        %vm1290 = vmand %vm1288, %vm1289
        %s1291 = scalar_lea.vmem [#allocation5], 5
        %1292 = vst.msk [vmem:[%s1291] ss:$8 sm:$0x7] %vm1290, %v1286
        %1293 = vst.msk [vmem:[%s1291] ss:$8 sm:$0x0] %vm1290, %v1286
        %v1297 = vrot.slane %v1190, 1
        %v1298 = vrot.slane %v1191, 1
        %v1299 = vrot.slane %v1192, 1
        %v1303 = vadd.f32 %v1271, %v1297
        %v1304 = vadd.f32 %v1272, %v1298
        %v1305 = vadd.f32 %v1273, %v1299
        %1309 = vst [vmem:[#allocation1] sm:$0xff] %v1303
        %1310 = vst [vmem:[#allocation1 + $0x9] sm:$0xff] %v1304
        %1311 = vst [vmem:[#allocation1 + $0x12] sm:$0xff] %v1305
        %s1312 = scalar_lea.vmem [#allocation1], 5
        %v1313 = vld [vmem:[%s1312] ss:$9 sm:$0xff]
        %v1315 = vadd.f32 %v378, %v1313
        %v1316 = vmax.f32 %v1315, 0.0
        %v1317 = vmin.f32 %v1316, 15.0
        %v1318 = vsub.f32 %v1317, %v378
        %s1319 = scalar_lea.vmem [#allocation5], 6
        %1320 = vst.msk [vmem:[%s1319] ss:$8 sm:$0x7] %vm1290, %v1318
        %1321 = vst.msk [vmem:[%s1319] ss:$8 sm:$0x0] %vm1290, %v1318
        %v1322 = vrot.slane %v1190, 2
        %v1323 = vrot.slane %v1191, 2
        %v1324 = vrot.slane %v1192, 2
        %v1328 = vadd.f32 %v1303, %v1322
        %v1329 = vadd.f32 %v1304, %v1323
        %v1330 = vadd.f32 %v1305, %v1324
        %1334 = vst [vmem:[#allocation1] sm:$0xff] %v1328
        %1335 = vst [vmem:[#allocation1 + $0x9] sm:$0xff] %v1329
        %1336 = vst [vmem:[#allocation1 + $0x12] sm:$0xff] %v1330
        %s1337 = scalar_lea.vmem [#allocation1], 5
        %v1338 = vld [vmem:[%s1337] ss:$9 sm:$0xff]
        %v1340 = vadd.f32 %v378, %v1338
        %v1341 = vmax.f32 %v1340, 0.0
        %v1342 = vmin.f32 %v1341, 15.0
        %v1343 = vsub.f32 %v1342, %v378
        %s1344 = scalar_lea.vmem [#allocation5], 7
        %1345 = vst.msk [vmem:[%s1344] ss:$8 sm:$0x7] %vm1290, %v1343
        %1346 = vst.msk [vmem:[%s1344] ss:$8 sm:$0x0] %vm1290, %v1343
        %v1350 = vrot.slane %v1268, 3
        %v1351 = vrot.slane %v1269, 3
        %v1352 = vrot.slane %v1270, 3
        %v1356 = vadd.f32 %v1328, %v1350
        %v1357 = vadd.f32 %v1329, %v1351
        %v1358 = vadd.f32 %v1330, %v1352
        %1362 = vst [vmem:[#allocation1] sm:$0xff] %v1356
        %1363 = vst [vmem:[#allocation1 + $0x9] sm:$0xff] %v1357
        %1364 = vst [vmem:[#allocation1 + $0x12] sm:$0xff] %v1358
        %s1365 = scalar_lea.vmem [#allocation1], 5
        %v1366 = vld [vmem:[%s1365] ss:$9 sm:$0xff]
        %v1368 = vadd.f32 %v378, %v1366
        %v1369 = vmax.f32 %v1368, 0.0
        %v1370 = vmin.f32 %v1369, 15.0
        %v1371 = vsub.f32 %v1370, %v378
        %s1372 = scalar_lea.vmem [#allocation5], 24
        %1373 = vst.msk [vmem:[%s1372] ss:$8 sm:$0x7] %vm1290, %v1371
        %1374 = vst.msk [vmem:[%s1372] ss:$8 sm:$0x0] %vm1290, %v1371
        %v1375 = vadd.f32 %v1040, 0.0
        %v1376 = vadd.f32 %v1041, 0.0
        %v1377 = vadd.f32 %v1042, 0.0
        %1381 = vst [vmem:[#allocation1] sm:$0xff] %v1375
        %1382 = vst [vmem:[#allocation1 + $0x9] sm:$0xff] %v1376
        %1383 = vst [vmem:[#allocation1 + $0x12] sm:$0xff] %v1377
        %s1384 = scalar_lea.vmem [#allocation1], 3
        %v1385 = vld [vmem:[%s1384] ss:$9 sm:$0xff]
        %v1387 = vadd.f32 %v378, %v1385
        %v1388 = vmax.f32 %v1387, 0.0
        %v1389 = vmin.f32 %v1388, 15.0
        %v1390 = vsub.f32 %v1389, %v378
        %s1391 = scalar_lea.vmem [#allocation5], 3
        %1392 = vst.msk [vmem:[%s1391] ss:$8 sm:$0x7] %vm1290, %v1390
        %1393 = vst.msk [vmem:[%s1391] ss:$8 sm:$0x0] %vm1290, %v1390
        %v1397 = vrot.slane %v1040, 7
        %v1398 = vrot.slane %v1041, 7
        %v1399 = vrot.slane %v1042, 7
        %v1403 = vadd.f32 %v1375, %v1397
        %v1404 = vadd.f32 %v1376, %v1398
        %v1405 = vadd.f32 %v1377, %v1399
        %1409 = vst [vmem:[#allocation1] sm:$0xff] %v1403
        %1410 = vst [vmem:[#allocation1 + $0x9] sm:$0xff] %v1404
        %1411 = vst [vmem:[#allocation1 + $0x12] sm:$0xff] %v1405
        %s1412 = scalar_lea.vmem [#allocation1], 3
        %v1413 = vld [vmem:[%s1412] ss:$9 sm:$0xff]
        %v1415 = vadd.f32 %v378, %v1413
        %v1416 = vmax.f32 %v1415, 0.0
        %v1417 = vmin.f32 %v1416, 15.0
        %v1418 = vsub.f32 %v1417, %v378
        %s1419 = scalar_lea.vmem [#allocation5], 2
        %1420 = vst.msk [vmem:[%s1419] ss:$8 sm:$0x7] %vm1290, %v1418
        %1421 = vst.msk [vmem:[%s1419] ss:$8 sm:$0x0] %vm1290, %v1418
        %v1425 = vrot.slane %v965, 6
        %v1426 = vrot.slane %v966, 6
        %v1427 = vrot.slane %v967, 6
        %v1431 = vadd.f32 %v1403, %v1425
        %v1432 = vadd.f32 %v1404, %v1426
        %v1433 = vadd.f32 %v1405, %v1427
        %1437 = vst [vmem:[#allocation1] sm:$0xff] %v1431
        %1438 = vst [vmem:[#allocation1 + $0x9] sm:$0xff] %v1432
        %1439 = vst [vmem:[#allocation1 + $0x12] sm:$0xff] %v1433
        %s1440 = scalar_lea.vmem [#allocation1], 3
        %v1441 = vld [vmem:[%s1440] ss:$9 sm:$0xff]
        %v1443 = vadd.f32 %v378, %v1441
        %v1444 = vmax.f32 %v1443, 0.0
        %v1445 = vmin.f32 %v1444, 15.0
        %v1446 = vsub.f32 %v1445, %v378
        %s1447 = scalar_lea.vmem [#allocation5], 1
        %1448 = vst.msk [vmem:[%s1447] ss:$8 sm:$0x7] %vm1290, %v1446
        %1449 = vst.msk [vmem:[%s1447] ss:$8 sm:$0x0] %vm1290, %v1446
        %v1450 = vrot.slane %v965, 5
        %v1451 = vrot.slane %v966, 5
        %v1452 = vrot.slane %v967, 5
        %v1456 = vadd.f32 %v1431, %v1450
        %v1457 = vadd.f32 %v1432, %v1451
        %v1458 = vadd.f32 %v1433, %v1452
        %1462 = vst [vmem:[#allocation1] sm:$0xff] %v1456
        %1463 = vst [vmem:[#allocation1 + $0x9] sm:$0xff] %v1457
        %1464 = vst [vmem:[#allocation1 + $0x12] sm:$0xff] %v1458
        %s1465 = scalar_lea.vmem [#allocation1], 3
        %v1466 = vld [vmem:[%s1465] ss:$9 sm:$0xff]
        %v1468 = vadd.f32 %v378, %v1466
        %v1469 = vmax.f32 %v1468, 0.0
        %v1470 = vmin.f32 %v1469, 15.0
        %v1471 = vsub.f32 %v1470, %v378
        %1472 = vst.msk [vmem:[#allocation5] ss:$8 sm:$0x7] %vm1290, %v1471
        %1473 = vst.msk [vmem:[#allocation5] ss:$8 sm:$0x0] %vm1290, %v1471
        %v1474 = vld [vmem:[#allocation5] ss:$8 sm:$0x7]
        %v1475 = vsub.f32 %v1474, -4.0
        %v1476 = vand.u32 2147483647, %v1475
        %v1477 = vsub.f32 1.0, %v1476
        %v1478 = vmax.f32 %v1477, 0.0
        %v1479 = vld [vmem:[%s340] sm:$0xff]
        %v1480 = vld [vmem:[%s340 + $0x8] sm:$0xff]
        %v1482 = vperm.slane %v1478, 0
        %v1483 = vperm.slane %v1478, 1
        %v1484 = vperm.slane %v1478, 2
        %1490 = vst [vmem:[#allocation1] ss:$2 sm:$0xff] %v1479
        %s1491 = scalar_lea.vmem [#allocation1], 16
        %1492 = vst [vmem:[%s1491] ss:$2 sm:$0xff] %v1480
        %v1493 = vld.sshfl [vmem:[#allocation1] sm:$0xff pattern:$0x75316420]
        %v1494 = vld.sshfl [vmem:[#allocation1 + $0x8] sm:$0xff pattern:$0x75316420]
        %v1495 = vld.sshfl [vmem:[#allocation1 + $0x10] sm:$0xff pattern:$0x75316420]
        %v1496 = vld.sshfl [vmem:[#allocation1 + $0x18] sm:$0xff pattern:$0x75316420]
        %1497 = vrot.lane.b32.xlu0 %v1493, 108
        %v1498 = vpop.permute.xlu0 %1497
        %1499 = vrot.lane.b32.xlu0 %v1494, 108
        %v1500 = vpop.permute.xlu0 %1499
        %1501 = vrot.lane.b32.xlu0 %v1495, 108
        %v1502 = vpop.permute.xlu0 %1501
        %1503 = vrot.lane.b32.xlu0 %v1496, 108
        %v1504 = vpop.permute.xlu0 %1503
        %vm1505 = vcmask 883712
        %v1506 = vsel %vm1505, %v1498, %v1500
        %v1507 = vsel %vm1505, %v1500, %v1502
        %v1508 = vsel %vm1505, %v1502, %v1504
        %v1512 = vmul.f32 %v1482, %v1506
        %v1513 = vmul.f32 %v1483, %v1507
        %v1514 = vmul.f32 %v1484, %v1508
        %v1515 = vadd.f32 %v1512, 0.0
        %v1516 = vadd.f32 %v1513, 0.0
        %v1517 = vadd.f32 %v1514, 0.0
        %v1518 = vsub.f32 %v1474, -3.0
        %v1519 = vand.u32 2147483647, %v1518
        %v1520 = vsub.f32 1.0, %v1519
        %v1521 = vmax.f32 %v1520, 0.0
        %v1522 = vld [vmem:[%s340] sm:$0xff]
        %v1523 = vld [vmem:[%s340 + $0x8] sm:$0xff]
        %v1525 = vperm.slane %v1521, 0
        %v1526 = vperm.slane %v1521, 1
        %v1527 = vperm.slane %v1521, 2
        %1533 = vst [vmem:[#allocation1] ss:$2 sm:$0xff] %v1522
        %s1534 = scalar_lea.vmem [#allocation1], 16
        %1535 = vst [vmem:[%s1534] ss:$2 sm:$0xff] %v1523
        %v1536 = vld.sshfl [vmem:[#allocation1] sm:$0xff pattern:$0x75316420]
        %v1537 = vld.sshfl [vmem:[#allocation1 + $0x8] sm:$0xff pattern:$0x75316420]
        %v1538 = vld.sshfl [vmem:[#allocation1 + $0x10] sm:$0xff pattern:$0x75316420]
        %v1539 = vld.sshfl [vmem:[#allocation1 + $0x18] sm:$0xff pattern:$0x75316420]
        %1540 = vrot.lane.b32.xlu0 %v1536, 84
        %v1541 = vpop.permute.xlu0 %1540
        %1542 = vrot.lane.b32.xlu0 %v1537, 84
        %v1543 = vpop.permute.xlu0 %1542
        %1544 = vrot.lane.b32.xlu0 %v1538, 84
        %v1545 = vpop.permute.xlu0 %1544
        %1546 = vrot.lane.b32.xlu0 %v1539, 84
        %v1547 = vpop.permute.xlu0 %1546
        %vm1548 = vcmask 687104
        %v1549 = vsel %vm1548, %v1541, %v1543
        %v1550 = vsel %vm1548, %v1543, %v1545
        %v1551 = vsel %vm1548, %v1545, %v1547
        %v1555 = vmul.f32 %v1525, %v1549
        %v1556 = vmul.f32 %v1526, %v1550
        %v1557 = vmul.f32 %v1527, %v1551
        %v1558 = vadd.f32 %v1515, %v1555
        %v1559 = vadd.f32 %v1516, %v1556
        %v1560 = vadd.f32 %v1517, %v1557
        %v1561 = vsub.f32 %v1474, -2.0
        %v1562 = vand.u32 2147483647, %v1561
        %v1563 = vsub.f32 1.0, %v1562
        %v1564 = vmax.f32 %v1563, 0.0
        %v1565 = vld [vmem:[%s340] sm:$0xff]
        %v1566 = vld [vmem:[%s340 + $0x8] sm:$0xff]
        %v1568 = vperm.slane %v1564, 0
        %v1569 = vperm.slane %v1564, 1
        %v1570 = vperm.slane %v1564, 2
        %1576 = vst [vmem:[#allocation1] ss:$2 sm:$0xff] %v1565
        %s1577 = scalar_lea.vmem [#allocation1], 16
        %1578 = vst [vmem:[%s1577] ss:$2 sm:$0xff] %v1566
        %v1579 = vld.sshfl [vmem:[#allocation1] sm:$0xff pattern:$0x75316420]
        %v1580 = vld.sshfl [vmem:[#allocation1 + $0x8] sm:$0xff pattern:$0x75316420]
        %v1581 = vld.sshfl [vmem:[#allocation1 + $0x10] sm:$0xff pattern:$0x75316420]
        %v1582 = vld.sshfl [vmem:[#allocation1 + $0x18] sm:$0xff pattern:$0x75316420]
        %1583 = vrot.lane.b32.xlu0 %v1579, 60
        %v1584 = vpop.permute.xlu0 %1583
        %1585 = vrot.lane.b32.xlu0 %v1580, 60
        %v1586 = vpop.permute.xlu0 %1585
        %1587 = vrot.lane.b32.xlu0 %v1581, 60
        %v1588 = vpop.permute.xlu0 %1587
        %1589 = vrot.lane.b32.xlu0 %v1582, 60
        %v1590 = vpop.permute.xlu0 %1589
        %vm1591 = vcmask 490496
        %v1592 = vsel %vm1591, %v1584, %v1586
        %v1593 = vsel %vm1591, %v1586, %v1588
        %v1594 = vsel %vm1591, %v1588, %v1590
        %v1598 = vmul.f32 %v1568, %v1592
        %v1599 = vmul.f32 %v1569, %v1593
        %v1600 = vmul.f32 %v1570, %v1594
        %v1601 = vadd.f32 %v1558, %v1598
        %v1602 = vadd.f32 %v1559, %v1599
        %v1603 = vadd.f32 %v1560, %v1600
        %v1604 = vsub.f32 %v1474, -1.0
        %v1605 = vand.u32 2147483647, %v1604
        %v1606 = vsub.f32 1.0, %v1605
        %v1607 = vmax.f32 %v1606, 0.0
        %v1608 = vld [vmem:[%s340] sm:$0xff]
        %v1609 = vld [vmem:[%s340 + $0x8] sm:$0xff]
        %v1611 = vperm.slane %v1607, 0
        %v1612 = vperm.slane %v1607, 1
        %v1613 = vperm.slane %v1607, 2
        %1619 = vst [vmem:[#allocation1] ss:$2 sm:$0xff] %v1608
        %s1620 = scalar_lea.vmem [#allocation1], 16
        %1621 = vst [vmem:[%s1620] ss:$2 sm:$0xff] %v1609
        %v1622 = vld.sshfl [vmem:[#allocation1] sm:$0xff pattern:$0x75316420]
        %v1623 = vld.sshfl [vmem:[#allocation1 + $0x8] sm:$0xff pattern:$0x75316420]
        %v1624 = vld.sshfl [vmem:[#allocation1 + $0x10] sm:$0xff pattern:$0x75316420]
        %v1625 = vld.sshfl [vmem:[#allocation1 + $0x18] sm:$0xff pattern:$0x75316420]
        %1626 = vrot.lane.b32.xlu0 %v1622, 36
        %v1627 = vpop.permute.xlu0 %1626
        %1628 = vrot.lane.b32.xlu0 %v1623, 36
        %v1629 = vpop.permute.xlu0 %1628
        %1630 = vrot.lane.b32.xlu0 %v1624, 36
        %v1631 = vpop.permute.xlu0 %1630
        %1632 = vrot.lane.b32.xlu0 %v1625, 36
        %v1633 = vpop.permute.xlu0 %1632
        %v1634 = vsel %vm784, %v1627, %v1629
        %v1635 = vsel %vm784, %v1629, %v1631
        %v1636 = vsel %vm784, %v1631, %v1633
        %v1640 = vmul.f32 %v1611, %v1634
        %v1641 = vmul.f32 %v1612, %v1635
        %v1642 = vmul.f32 %v1613, %v1636
        %v1643 = vadd.f32 %v1601, %v1640
        %v1644 = vadd.f32 %v1602, %v1641
        %v1645 = vadd.f32 %v1603, %v1642
        %v1646 = vand.u32 2147483647, %v1474
        %v1647 = vsub.f32 1.0, %v1646
        %v1648 = vmax.f32 %v1647, 0.0
        %v1649 = vld [vmem:[%s340] sm:$0xff]
        %v1650 = vld [vmem:[%s340 + $0x8] sm:$0xff]
        %v1652 = vperm.slane %v1648, 0
        %v1653 = vperm.slane %v1648, 1
        %v1654 = vperm.slane %v1648, 2
        %1660 = vst [vmem:[#allocation1] ss:$2 sm:$0xff] %v1649
        %s1661 = scalar_lea.vmem [#allocation1], 16
        %1662 = vst [vmem:[%s1661] ss:$2 sm:$0xff] %v1650
        %v1663 = vld.sshfl [vmem:[#allocation1] sm:$0xff pattern:$0x75316420]
        %v1664 = vld.sshfl [vmem:[#allocation1 + $0x8] sm:$0xff pattern:$0x75316420]
        %v1665 = vld.sshfl [vmem:[#allocation1 + $0x10] sm:$0xff pattern:$0x75316420]
        %v1666 = vld.sshfl [vmem:[#allocation1 + $0x18] sm:$0xff pattern:$0x75316420]
        %1667 = vrot.lane.b32.xlu0 %v1663, 12
        %v1668 = vpop.permute.xlu0 %1667
        %1669 = vrot.lane.b32.xlu0 %v1664, 12
        %v1670 = vpop.permute.xlu0 %1669
        %1671 = vrot.lane.b32.xlu0 %v1665, 12
        %v1672 = vpop.permute.xlu0 %1671
        %1673 = vrot.lane.b32.xlu0 %v1666, 12
        %v1674 = vpop.permute.xlu0 %1673
        %vm1675 = vcmask 97280
        %v1676 = vsel %vm1675, %v1668, %v1670
        %v1677 = vsel %vm1675, %v1670, %v1672
        %v1678 = vsel %vm1675, %v1672, %v1674
        %v1682 = vmul.f32 %v1652, %v1676
        %v1683 = vmul.f32 %v1653, %v1677
        %v1684 = vmul.f32 %v1654, %v1678
        %v1685 = vadd.f32 %v1643, %v1682
        %v1686 = vadd.f32 %v1644, %v1683
        %v1687 = vadd.f32 %v1645, %v1684
        %v1688 = vsub.f32 %v1474, 1.0
        %v1689 = vand.u32 2147483647, %v1688
        %v1690 = vsub.f32 1.0, %v1689
        %v1691 = vmax.f32 %v1690, 0.0
        %v1692 = vld [vmem:[%s340 + $0x4] sm:$0xff]
        %v1693 = vld [vmem:[%s340 + $0xc] sm:$0xff]
        %v1695 = vperm.slane %v1691, 0
        %v1696 = vperm.slane %v1691, 1
        %v1697 = vperm.slane %v1691, 2
        %1703 = vst [vmem:[#allocation1] ss:$2 sm:$0xff] %v1692
        %s1704 = scalar_lea.vmem [#allocation1], 16
        %1705 = vst [vmem:[%s1704] ss:$2 sm:$0xff] %v1693
        %v1706 = vld.sshfl [vmem:[#allocation1] sm:$0xff pattern:$0x75316420]
        %v1707 = vld.sshfl [vmem:[#allocation1 + $0x8] sm:$0xff pattern:$0x75316420]
        %v1708 = vld.sshfl [vmem:[#allocation1 + $0x10] sm:$0xff pattern:$0x75316420]
        %v1709 = vld.sshfl [vmem:[#allocation1 + $0x18] sm:$0xff pattern:$0x75316420]
        %1710 = vrot.lane.b32.xlu0 %v1706, 116
        %v1711 = vpop.permute.xlu0 %1710
        %1712 = vrot.lane.b32.xlu0 %v1707, 116
        %v1713 = vpop.permute.xlu0 %1712
        %1714 = vrot.lane.b32.xlu0 %v1708, 116
        %v1715 = vpop.permute.xlu0 %1714
        %1716 = vrot.lane.b32.xlu0 %v1709, 116
        %v1717 = vpop.permute.xlu0 %1716
        %vm1718 = vcmask 949248
        %v1719 = vsel %vm1718, %v1711, %v1713
        %v1720 = vsel %vm1718, %v1713, %v1715
        %v1721 = vsel %vm1718, %v1715, %v1717
        %v1725 = vmul.f32 %v1695, %v1719
        %v1726 = vmul.f32 %v1696, %v1720
        %v1727 = vmul.f32 %v1697, %v1721
        %v1728 = vadd.f32 %v1685, %v1725
        %v1729 = vadd.f32 %v1686, %v1726
        %v1730 = vadd.f32 %v1687, %v1727
        %v1731 = vsub.f32 %v1474, 2.0
        %v1732 = vand.u32 2147483647, %v1731
        %v1733 = vsub.f32 1.0, %v1732
        %v1734 = vmax.f32 %v1733, 0.0
        %v1735 = vld [vmem:[%s340 + $0x4] sm:$0xff]
        %v1736 = vld [vmem:[%s340 + $0xc] sm:$0xff]
        %v1738 = vperm.slane %v1734, 0
        %v1739 = vperm.slane %v1734, 1
        %v1740 = vperm.slane %v1734, 2
        %1746 = vst [vmem:[#allocation1] ss:$2 sm:$0xff] %v1735
        %s1747 = scalar_lea.vmem [#allocation1], 16
        %1748 = vst [vmem:[%s1747] ss:$2 sm:$0xff] %v1736
        %v1749 = vld.sshfl [vmem:[#allocation1] sm:$0xff pattern:$0x75316420]
        %v1750 = vld.sshfl [vmem:[#allocation1 + $0x8] sm:$0xff pattern:$0x75316420]
        %v1751 = vld.sshfl [vmem:[#allocation1 + $0x10] sm:$0xff pattern:$0x75316420]
        %v1752 = vld.sshfl [vmem:[#allocation1 + $0x18] sm:$0xff pattern:$0x75316420]
        %1753 = vrot.lane.b32.xlu0 %v1749, 92
        %v1754 = vpop.permute.xlu0 %1753
        %1755 = vrot.lane.b32.xlu0 %v1750, 92
        %v1756 = vpop.permute.xlu0 %1755
        %1757 = vrot.lane.b32.xlu0 %v1751, 92
        %v1758 = vpop.permute.xlu0 %1757
        %1759 = vrot.lane.b32.xlu0 %v1752, 92
        %v1760 = vpop.permute.xlu0 %1759
        %vm1761 = vcmask 752640
        %v1762 = vsel %vm1761, %v1754, %v1756
        %v1763 = vsel %vm1761, %v1756, %v1758
        %v1764 = vsel %vm1761, %v1758, %v1760
        %v1768 = vmul.f32 %v1738, %v1762
        %v1769 = vmul.f32 %v1739, %v1763
        %v1770 = vmul.f32 %v1740, %v1764
        %v1771 = vadd.f32 %v1728, %v1768
        %v1772 = vadd.f32 %v1729, %v1769
        %v1773 = vadd.f32 %v1730, %v1770
        %v1774 = vsub.f32 %v1474, 3.0
        %v1775 = vand.u32 2147483647, %v1774
        %v1776 = vsub.f32 1.0, %v1775
        %v1777 = vmax.f32 %v1776, 0.0
        %v1778 = vld [vmem:[%s340 + $0x4] sm:$0xff]
        %v1779 = vld [vmem:[%s340 + $0xc] sm:$0xff]
        %v1781 = vperm.slane %v1777, 0
        %v1782 = vperm.slane %v1777, 1
        %v1783 = vperm.slane %v1777, 2
        %1789 = vst [vmem:[#allocation1] ss:$2 sm:$0xff] %v1778
        %s1790 = scalar_lea.vmem [#allocation1], 16
        %1791 = vst [vmem:[%s1790] ss:$2 sm:$0xff] %v1779
        %v1792 = vld.sshfl [vmem:[#allocation1] sm:$0xff pattern:$0x75316420]
        %v1793 = vld.sshfl [vmem:[#allocation1 + $0x8] sm:$0xff pattern:$0x75316420]
        %v1794 = vld.sshfl [vmem:[#allocation1 + $0x10] sm:$0xff pattern:$0x75316420]
        %v1795 = vld.sshfl [vmem:[#allocation1 + $0x18] sm:$0xff pattern:$0x75316420]
        %1796 = vrot.lane.b32.xlu0 %v1792, 68
        %v1797 = vpop.permute.xlu0 %1796
        %1798 = vrot.lane.b32.xlu0 %v1793, 68
        %v1799 = vpop.permute.xlu0 %1798
        %1800 = vrot.lane.b32.xlu0 %v1794, 68
        %v1801 = vpop.permute.xlu0 %1800
        %1802 = vrot.lane.b32.xlu0 %v1795, 68
        %v1803 = vpop.permute.xlu0 %1802
        %vm1804 = vcmask 556032
        %v1805 = vsel %vm1804, %v1797, %v1799
        %v1806 = vsel %vm1804, %v1799, %v1801
        %v1807 = vsel %vm1804, %v1801, %v1803
        %v1811 = vmul.f32 %v1781, %v1805
        %v1812 = vmul.f32 %v1782, %v1806
        %v1813 = vmul.f32 %v1783, %v1807
        %v1814 = vadd.f32 %v1771, %v1811
        %v1815 = vadd.f32 %v1772, %v1812
        %v1816 = vadd.f32 %v1773, %v1813
        %v1817 = vsub.f32 %v1474, 4.0
        %v1818 = vand.u32 2147483647, %v1817
        %v1819 = vsub.f32 1.0, %v1818
        %v1820 = vmax.f32 %v1819, 0.0
        %v1821 = vld [vmem:[%s340 + $0x4] sm:$0xff]
        %v1822 = vld [vmem:[%s340 + $0xc] sm:$0xff]
        %v1824 = vperm.slane %v1820, 0
        %v1825 = vperm.slane %v1820, 1
        %v1826 = vperm.slane %v1820, 2
        %1832 = vst [vmem:[#allocation1] ss:$2 sm:$0xff] %v1821
        %s1833 = scalar_lea.vmem [#allocation1], 16
        %1834 = vst [vmem:[%s1833] ss:$2 sm:$0xff] %v1822
        %v1835 = vld.sshfl [vmem:[#allocation1] sm:$0xff pattern:$0x75316420]
        %v1836 = vld.sshfl [vmem:[#allocation1 + $0x8] sm:$0xff pattern:$0x75316420]
        %v1837 = vld.sshfl [vmem:[#allocation1 + $0x10] sm:$0xff pattern:$0x75316420]
        %v1838 = vld.sshfl [vmem:[#allocation1 + $0x18] sm:$0xff pattern:$0x75316420]
        %1839 = vrot.lane.b32.xlu0 %v1835, 44
        %v1840 = vpop.permute.xlu0 %1839
        %1841 = vrot.lane.b32.xlu0 %v1836, 44
        %v1842 = vpop.permute.xlu0 %1841
        %1843 = vrot.lane.b32.xlu0 %v1837, 44
        %v1844 = vpop.permute.xlu0 %1843
        %1845 = vrot.lane.b32.xlu0 %v1838, 44
        %v1846 = vpop.permute.xlu0 %1845
        %vm1847 = vcmask 359424
        %v1848 = vsel %vm1847, %v1840, %v1842
        %v1849 = vsel %vm1847, %v1842, %v1844
        %v1850 = vsel %vm1847, %v1844, %v1846
        %v1854 = vmul.f32 %v1824, %v1848
        %v1855 = vmul.f32 %v1825, %v1849
        %v1856 = vmul.f32 %v1826, %v1850
        %v1857 = vadd.f32 %v1814, %v1854
        %v1858 = vadd.f32 %v1815, %v1855
        %v1859 = vadd.f32 %v1816, %v1856
        %v1860 = vsub.f32 %v1474, 5.0
        %v1861 = vand.u32 2147483647, %v1860
        %v1862 = vsub.f32 1.0, %v1861
        %v1863 = vmax.f32 %v1862, 0.0
        %v1864 = vld [vmem:[%s340 + $0x4] sm:$0xff]
        %v1865 = vld [vmem:[%s340 + $0xc] sm:$0xff]
        %v1867 = vperm.slane %v1863, 0
        %v1868 = vperm.slane %v1863, 1
        %v1869 = vperm.slane %v1863, 2
        %1875 = vst [vmem:[#allocation1] ss:$2 sm:$0xff] %v1864
        %s1876 = scalar_lea.vmem [#allocation1], 16
        %1877 = vst [vmem:[%s1876] ss:$2 sm:$0xff] %v1865
        %v1878 = vld.sshfl [vmem:[#allocation1] sm:$0xff pattern:$0x75316420]
        %v1879 = vld.sshfl [vmem:[#allocation1 + $0x8] sm:$0xff pattern:$0x75316420]
        %v1880 = vld.sshfl [vmem:[#allocation1 + $0x10] sm:$0xff pattern:$0x75316420]
        %v1881 = vld.sshfl [vmem:[#allocation1 + $0x18] sm:$0xff pattern:$0x75316420]
        %1882 = vrot.lane.b32.xlu0 %v1878, 20
        %v1883 = vpop.permute.xlu0 %1882
        %1884 = vrot.lane.b32.xlu0 %v1879, 20
        %v1885 = vpop.permute.xlu0 %1884
        %1886 = vrot.lane.b32.xlu0 %v1880, 20
        %v1887 = vpop.permute.xlu0 %1886
        %1888 = vrot.lane.b32.xlu0 %v1881, 20
        %v1889 = vpop.permute.xlu0 %1888
        %vm1890 = vcmask 162816
        %v1891 = vsel %vm1890, %v1883, %v1885
        %v1892 = vsel %vm1890, %v1885, %v1887
        %v1893 = vsel %vm1890, %v1887, %v1889
        %v1897 = vmul.f32 %v1867, %v1891
        %v1898 = vmul.f32 %v1868, %v1892
        %v1899 = vmul.f32 %v1869, %v1893
        %v1900 = vadd.f32 %v1857, %v1897
        %v1901 = vadd.f32 %v1858, %v1898
        %v1902 = vadd.f32 %v1859, %v1899
        %1903 = vst [vmem:[#allocation3] sm:$0xf] %v1900
        %1904 = vst [vmem:[#allocation3 + $0x8] sm:$0xf] %v1901
        %1905 = vst [vmem:[#allocation3 + $0x10] sm:$0xf] %v1902
        %v1906 = vld [vmem:[%s1447] ss:$8 sm:$0x7]
        %v1907 = vsub.f32 %v1906, -3.0
        %v1908 = vand.u32 2147483647, %v1907
        %v1909 = vsub.f32 1.0, %v1908
        %v1910 = vmax.f32 %v1909, 0.0
        %v1911 = vld [vmem:[%s340] sm:$0xff]
        %v1912 = vld [vmem:[%s340 + $0x8] sm:$0xff]
        %v1914 = vperm.slane %v1910, 0
        %v1915 = vperm.slane %v1910, 1
        %v1916 = vperm.slane %v1910, 2
        %1922 = vst [vmem:[#allocation1] ss:$2 sm:$0xff] %v1911
        %s1923 = scalar_lea.vmem [#allocation1], 16
        %1924 = vst [vmem:[%s1923] ss:$2 sm:$0xff] %v1912
        %v1925 = vld.sshfl [vmem:[#allocation1] sm:$0xff pattern:$0x75316420]
        %v1926 = vld.sshfl [vmem:[#allocation1 + $0x8] sm:$0xff pattern:$0x75316420]
        %v1927 = vld.sshfl [vmem:[#allocation1 + $0x10] sm:$0xff pattern:$0x75316420]
        %v1928 = vld.sshfl [vmem:[#allocation1 + $0x18] sm:$0xff pattern:$0x75316420]
        %1929 = vrot.lane.b32.xlu0 %v1925, 83
        %v1930 = vpop.permute.xlu0 %1929
        %1931 = vrot.lane.b32.xlu0 %v1926, 83
        %v1932 = vpop.permute.xlu0 %1931
        %1933 = vrot.lane.b32.xlu0 %v1927, 83
        %v1934 = vpop.permute.xlu0 %1933
        %1935 = vrot.lane.b32.xlu0 %v1928, 83
        %v1936 = vpop.permute.xlu0 %1935
        %vm1937 = vcmask 678912
        %v1938 = vsel %vm1937, %v1930, %v1932
        %v1939 = vsel %vm1937, %v1932, %v1934
        %v1940 = vsel %vm1937, %v1934, %v1936
        %v1944 = vmul.f32 %v1914, %v1938
        %v1945 = vmul.f32 %v1915, %v1939
        %v1946 = vmul.f32 %v1916, %v1940
        %v1947 = vadd.f32 %v1944, 0.0
        %v1948 = vadd.f32 %v1945, 0.0
        %v1949 = vadd.f32 %v1946, 0.0
        %v1950 = vsub.f32 %v1906, -2.0
        %v1951 = vand.u32 2147483647, %v1950
        %v1952 = vsub.f32 1.0, %v1951
        %v1953 = vmax.f32 %v1952, 0.0
        %v1954 = vld [vmem:[%s340] sm:$0xff]
        %v1955 = vld [vmem:[%s340 + $0x8] sm:$0xff]
        %v1957 = vperm.slane %v1953, 0
        %v1958 = vperm.slane %v1953, 1
        %v1959 = vperm.slane %v1953, 2
        %1965 = vst [vmem:[#allocation1] ss:$2 sm:$0xff] %v1954
        %s1966 = scalar_lea.vmem [#allocation1], 16
        %1967 = vst [vmem:[%s1966] ss:$2 sm:$0xff] %v1955
        %v1968 = vld.sshfl [vmem:[#allocation1] sm:$0xff pattern:$0x75316420]
        %v1969 = vld.sshfl [vmem:[#allocation1 + $0x8] sm:$0xff pattern:$0x75316420]
        %v1970 = vld.sshfl [vmem:[#allocation1 + $0x10] sm:$0xff pattern:$0x75316420]
        %v1971 = vld.sshfl [vmem:[#allocation1 + $0x18] sm:$0xff pattern:$0x75316420]
        %1972 = vrot.lane.b32.xlu0 %v1968, 59
        %v1973 = vpop.permute.xlu0 %1972
        %1974 = vrot.lane.b32.xlu0 %v1969, 59
        %v1975 = vpop.permute.xlu0 %1974
        %1976 = vrot.lane.b32.xlu0 %v1970, 59
        %v1977 = vpop.permute.xlu0 %1976
        %1978 = vrot.lane.b32.xlu0 %v1971, 59
        %v1979 = vpop.permute.xlu0 %1978
        %vm1980 = vcmask 482304
        %v1981 = vsel %vm1980, %v1973, %v1975
        %v1982 = vsel %vm1980, %v1975, %v1977
        %v1983 = vsel %vm1980, %v1977, %v1979
        %v1987 = vmul.f32 %v1957, %v1981
        %v1988 = vmul.f32 %v1958, %v1982
        %v1989 = vmul.f32 %v1959, %v1983
        %v1990 = vadd.f32 %v1947, %v1987
        %v1991 = vadd.f32 %v1948, %v1988
        %v1992 = vadd.f32 %v1949, %v1989
        %v1993 = vsub.f32 %v1906, -1.0
        %v1994 = vand.u32 2147483647, %v1993
        %v1995 = vsub.f32 1.0, %v1994
        %v1996 = vmax.f32 %v1995, 0.0
        %v1997 = vld [vmem:[%s340] sm:$0xff]
        %v1998 = vld [vmem:[%s340 + $0x8] sm:$0xff]
        %v2000 = vperm.slane %v1996, 0
        %v2001 = vperm.slane %v1996, 1
        %v2002 = vperm.slane %v1996, 2
        %2008 = vst [vmem:[#allocation1] ss:$2 sm:$0xff] %v1997
        %s2009 = scalar_lea.vmem [#allocation1], 16
        %2010 = vst [vmem:[%s2009] ss:$2 sm:$0xff] %v1998
        %v2011 = vld.sshfl [vmem:[#allocation1] sm:$0xff pattern:$0x75316420]
        %v2012 = vld.sshfl [vmem:[#allocation1 + $0x8] sm:$0xff pattern:$0x75316420]
        %v2013 = vld.sshfl [vmem:[#allocation1 + $0x10] sm:$0xff pattern:$0x75316420]
        %v2014 = vld.sshfl [vmem:[#allocation1 + $0x18] sm:$0xff pattern:$0x75316420]
        %2015 = vrot.lane.b32.xlu0 %v2011, 35
        %v2016 = vpop.permute.xlu0 %2015
        %2017 = vrot.lane.b32.xlu0 %v2012, 35
        %v2018 = vpop.permute.xlu0 %2017
        %2019 = vrot.lane.b32.xlu0 %v2013, 35
        %v2020 = vpop.permute.xlu0 %2019
        %2021 = vrot.lane.b32.xlu0 %v2014, 35
        %v2022 = vpop.permute.xlu0 %2021
        %vm2023 = vcmask 285696
        %v2024 = vsel %vm2023, %v2016, %v2018
        %v2025 = vsel %vm2023, %v2018, %v2020
        %v2026 = vsel %vm2023, %v2020, %v2022
        %v2030 = vmul.f32 %v2000, %v2024
        %v2031 = vmul.f32 %v2001, %v2025
        %v2032 = vmul.f32 %v2002, %v2026
        %v2033 = vadd.f32 %v1990, %v2030
        %v2034 = vadd.f32 %v1991, %v2031
        %v2035 = vadd.f32 %v1992, %v2032
        %v2036 = vand.u32 2147483647, %v1906
        %v2037 = vsub.f32 1.0, %v2036
        %v2038 = vmax.f32 %v2037, 0.0
        %v2039 = vld [vmem:[%s340] sm:$0xff]
        %v2040 = vld [vmem:[%s340 + $0x8] sm:$0xff]
        %v2042 = vperm.slane %v2038, 0
        %v2043 = vperm.slane %v2038, 1
        %v2044 = vperm.slane %v2038, 2
        %2050 = vst [vmem:[#allocation1] ss:$2 sm:$0xff] %v2039
        %s2051 = scalar_lea.vmem [#allocation1], 16
        %2052 = vst [vmem:[%s2051] ss:$2 sm:$0xff] %v2040
        %v2053 = vld.sshfl [vmem:[#allocation1] sm:$0xff pattern:$0x75316420]
        %v2054 = vld.sshfl [vmem:[#allocation1 + $0x8] sm:$0xff pattern:$0x75316420]
        %v2055 = vld.sshfl [vmem:[#allocation1 + $0x10] sm:$0xff pattern:$0x75316420]
        %v2056 = vld.sshfl [vmem:[#allocation1 + $0x18] sm:$0xff pattern:$0x75316420]
        %2057 = vrot.lane.b32.xlu0 %v2053, 11
        %v2058 = vpop.permute.xlu0 %2057
        %2059 = vrot.lane.b32.xlu0 %v2054, 11
        %v2060 = vpop.permute.xlu0 %2059
        %2061 = vrot.lane.b32.xlu0 %v2055, 11
        %v2062 = vpop.permute.xlu0 %2061
        %2063 = vrot.lane.b32.xlu0 %v2056, 11
        %v2064 = vpop.permute.xlu0 %2063
        %vm2065 = vcmask 89088
        %v2066 = vsel %vm2065, %v2058, %v2060
        %v2067 = vsel %vm2065, %v2060, %v2062
        %v2068 = vsel %vm2065, %v2062, %v2064
        %v2072 = vmul.f32 %v2042, %v2066
        %v2073 = vmul.f32 %v2043, %v2067
        %v2074 = vmul.f32 %v2044, %v2068
        %v2075 = vadd.f32 %v2033, %v2072
        %v2076 = vadd.f32 %v2034, %v2073
        %v2077 = vadd.f32 %v2035, %v2074
        %v2078 = vsub.f32 %v1906, 1.0
        %v2079 = vand.u32 2147483647, %v2078
        %v2080 = vsub.f32 1.0, %v2079
        %v2081 = vmax.f32 %v2080, 0.0
        %v2082 = vld [vmem:[%s340 + $0x4] sm:$0xff]
        %v2083 = vld [vmem:[%s340 + $0xc] sm:$0xff]
        %v2085 = vperm.slane %v2081, 0
        %v2086 = vperm.slane %v2081, 1
        %v2087 = vperm.slane %v2081, 2
        %2093 = vst [vmem:[#allocation1] ss:$2 sm:$0xff] %v2082
        %s2094 = scalar_lea.vmem [#allocation1], 16
        %2095 = vst [vmem:[%s2094] ss:$2 sm:$0xff] %v2083
        %v2096 = vld.sshfl [vmem:[#allocation1] sm:$0xff pattern:$0x75316420]
        %v2097 = vld.sshfl [vmem:[#allocation1 + $0x8] sm:$0xff pattern:$0x75316420]
        %v2098 = vld.sshfl [vmem:[#allocation1 + $0x10] sm:$0xff pattern:$0x75316420]
        %v2099 = vld.sshfl [vmem:[#allocation1 + $0x18] sm:$0xff pattern:$0x75316420]
        %2100 = vrot.lane.b32.xlu0 %v2096, 115
        %v2101 = vpop.permute.xlu0 %2100
        %2102 = vrot.lane.b32.xlu0 %v2097, 115
        %v2103 = vpop.permute.xlu0 %2102
        %2104 = vrot.lane.b32.xlu0 %v2098, 115
        %v2105 = vpop.permute.xlu0 %2104
        %2106 = vrot.lane.b32.xlu0 %v2099, 115
        %v2107 = vpop.permute.xlu0 %2106
        %vm2108 = vcmask 941056
        %v2109 = vsel %vm2108, %v2101, %v2103
        %v2110 = vsel %vm2108, %v2103, %v2105
        %v2111 = vsel %vm2108, %v2105, %v2107
        %v2115 = vmul.f32 %v2085, %v2109
        %v2116 = vmul.f32 %v2086, %v2110
        %v2117 = vmul.f32 %v2087, %v2111
        %v2118 = vadd.f32 %v2075, %v2115
        %v2119 = vadd.f32 %v2076, %v2116
        %v2120 = vadd.f32 %v2077, %v2117
        %v2121 = vsub.f32 %v1906, 2.0
        %v2122 = vand.u32 2147483647, %v2121
        %v2123 = vsub.f32 1.0, %v2122
        %v2124 = vmax.f32 %v2123, 0.0
        %v2125 = vld [vmem:[%s340 + $0x4] sm:$0xff]
        %v2126 = vld [vmem:[%s340 + $0xc] sm:$0xff]
        %v2128 = vperm.slane %v2124, 0
        %v2129 = vperm.slane %v2124, 1
        %v2130 = vperm.slane %v2124, 2
        %2136 = vst [vmem:[#allocation1] ss:$2 sm:$0xff] %v2125
        %s2137 = scalar_lea.vmem [#allocation1], 16
        %2138 = vst [vmem:[%s2137] ss:$2 sm:$0xff] %v2126
        %v2139 = vld.sshfl [vmem:[#allocation1] sm:$0xff pattern:$0x75316420]
        %v2140 = vld.sshfl [vmem:[#allocation1 + $0x8] sm:$0xff pattern:$0x75316420]
        %v2141 = vld.sshfl [vmem:[#allocation1 + $0x10] sm:$0xff pattern:$0x75316420]
        %v2142 = vld.sshfl [vmem:[#allocation1 + $0x18] sm:$0xff pattern:$0x75316420]
        %2143 = vrot.lane.b32.xlu0 %v2139, 91
        %v2144 = vpop.permute.xlu0 %2143
        %2145 = vrot.lane.b32.xlu0 %v2140, 91
        %v2146 = vpop.permute.xlu0 %2145
        %2147 = vrot.lane.b32.xlu0 %v2141, 91
        %v2148 = vpop.permute.xlu0 %2147
        %2149 = vrot.lane.b32.xlu0 %v2142, 91
        %v2150 = vpop.permute.xlu0 %2149
        %vm2151 = vcmask 744448
        %v2152 = vsel %vm2151, %v2144, %v2146
        %v2153 = vsel %vm2151, %v2146, %v2148
        %v2154 = vsel %vm2151, %v2148, %v2150
        %v2158 = vmul.f32 %v2128, %v2152
        %v2159 = vmul.f32 %v2129, %v2153
        %v2160 = vmul.f32 %v2130, %v2154
        %v2161 = vadd.f32 %v2118, %v2158
        %v2162 = vadd.f32 %v2119, %v2159
        %v2163 = vadd.f32 %v2120, %v2160
        %v2164 = vsub.f32 %v1906, 3.0
        %v2165 = vand.u32 2147483647, %v2164
        %v2166 = vsub.f32 1.0, %v2165
        %v2167 = vmax.f32 %v2166, 0.0
        %v2168 = vld [vmem:[%s340 + $0x4] sm:$0xff]
        %v2169 = vld [vmem:[%s340 + $0xc] sm:$0xff]
        %v2171 = vperm.slane %v2167, 0
        %v2172 = vperm.slane %v2167, 1
        %v2173 = vperm.slane %v2167, 2
        %2179 = vst [vmem:[#allocation1] ss:$2 sm:$0xff] %v2168
        %s2180 = scalar_lea.vmem [#allocation1], 16
        %2181 = vst [vmem:[%s2180] ss:$2 sm:$0xff] %v2169
        %v2182 = vld.sshfl [vmem:[#allocation1] sm:$0xff pattern:$0x75316420]
        %v2183 = vld.sshfl [vmem:[#allocation1 + $0x8] sm:$0xff pattern:$0x75316420]
        %v2184 = vld.sshfl [vmem:[#allocation1 + $0x10] sm:$0xff pattern:$0x75316420]
        %v2185 = vld.sshfl [vmem:[#allocation1 + $0x18] sm:$0xff pattern:$0x75316420]
        %2186 = vrot.lane.b32.xlu0 %v2182, 67
        %v2187 = vpop.permute.xlu0 %2186
        %2188 = vrot.lane.b32.xlu0 %v2183, 67
        %v2189 = vpop.permute.xlu0 %2188
        %2190 = vrot.lane.b32.xlu0 %v2184, 67
        %v2191 = vpop.permute.xlu0 %2190
        %2192 = vrot.lane.b32.xlu0 %v2185, 67
        %v2193 = vpop.permute.xlu0 %2192
        %vm2194 = vcmask 547840
        %v2195 = vsel %vm2194, %v2187, %v2189
        %v2196 = vsel %vm2194, %v2189, %v2191
        %v2197 = vsel %vm2194, %v2191, %v2193
        %v2201 = vmul.f32 %v2171, %v2195
        %v2202 = vmul.f32 %v2172, %v2196
        %v2203 = vmul.f32 %v2173, %v2197
        %v2204 = vadd.f32 %v2161, %v2201
        %v2205 = vadd.f32 %v2162, %v2202
        %v2206 = vadd.f32 %v2163, %v2203
        %v2207 = vsub.f32 %v1906, 4.0
        %v2208 = vand.u32 2147483647, %v2207
        %v2209 = vsub.f32 1.0, %v2208
        %v2210 = vmax.f32 %v2209, 0.0
        %v2211 = vld [vmem:[%s340 + $0x4] sm:$0xff]
        %v2212 = vld [vmem:[%s340 + $0xc] sm:$0xff]
        %v2214 = vperm.slane %v2210, 0
        %v2215 = vperm.slane %v2210, 1
        %v2216 = vperm.slane %v2210, 2
        %2222 = vst [vmem:[#allocation1] ss:$2 sm:$0xff] %v2211
        %s2223 = scalar_lea.vmem [#allocation1], 16
        %2224 = vst [vmem:[%s2223] ss:$2 sm:$0xff] %v2212
        %v2225 = vld.sshfl [vmem:[#allocation1] sm:$0xff pattern:$0x75316420]
        %v2226 = vld.sshfl [vmem:[#allocation1 + $0x8] sm:$0xff pattern:$0x75316420]
        %v2227 = vld.sshfl [vmem:[#allocation1 + $0x10] sm:$0xff pattern:$0x75316420]
        %v2228 = vld.sshfl [vmem:[#allocation1 + $0x18] sm:$0xff pattern:$0x75316420]
        %2229 = vrot.lane.b32.xlu0 %v2225, 43
        %v2230 = vpop.permute.xlu0 %2229
        %2231 = vrot.lane.b32.xlu0 %v2226, 43
        %v2232 = vpop.permute.xlu0 %2231
        %2233 = vrot.lane.b32.xlu0 %v2227, 43
        %v2234 = vpop.permute.xlu0 %2233
        %2235 = vrot.lane.b32.xlu0 %v2228, 43
        %v2236 = vpop.permute.xlu0 %2235
        %vm2237 = vcmask 351232
        %v2238 = vsel %vm2237, %v2230, %v2232
        %v2239 = vsel %vm2237, %v2232, %v2234
        %v2240 = vsel %vm2237, %v2234, %v2236
        %v2244 = vmul.f32 %v2214, %v2238
        %v2245 = vmul.f32 %v2215, %v2239
        %v2246 = vmul.f32 %v2216, %v2240
        %v2247 = vadd.f32 %v2204, %v2244
        %v2248 = vadd.f32 %v2205, %v2245
        %v2249 = vadd.f32 %v2206, %v2246
        %v2253 = vrot.slane %v2247, 4
        %v2254 = vrot.slane %v2248, 4
        %v2255 = vrot.slane %v2249, 4
        %2259 = vst [vmem:[#allocation3] sm:$0xf0] %v2253
        %2260 = vst [vmem:[#allocation3 + $0x8] sm:$0xf0] %v2254
        %2261 = vst [vmem:[#allocation3 + $0x10] sm:$0xf0] %v2255
        %v2262 = vld [vmem:[%s1419] ss:$8 sm:$0x7]
        %v2263 = vsub.f32 %v2262, -2.0
        %v2264 = vand.u32 2147483647, %v2263
        %v2265 = vsub.f32 1.0, %v2264
        %v2266 = vmax.f32 %v2265, 0.0
        %v2267 = vld [vmem:[%s340] sm:$0xff]
        %v2268 = vld [vmem:[%s340 + $0x8] sm:$0xff]
        %v2270 = vperm.slane %v2266, 0
        %v2271 = vperm.slane %v2266, 1
        %v2272 = vperm.slane %v2266, 2
        %2278 = vst [vmem:[#allocation1] ss:$2 sm:$0xff] %v2267
        %s2279 = scalar_lea.vmem [#allocation1], 16
        %2280 = vst [vmem:[%s2279] ss:$2 sm:$0xff] %v2268
        %v2281 = vld.sshfl [vmem:[#allocation1] sm:$0xff pattern:$0x75316420]
        %v2282 = vld.sshfl [vmem:[#allocation1 + $0x8] sm:$0xff pattern:$0x75316420]
        %v2283 = vld.sshfl [vmem:[#allocation1 + $0x10] sm:$0xff pattern:$0x75316420]
        %v2284 = vld.sshfl [vmem:[#allocation1 + $0x18] sm:$0xff pattern:$0x75316420]
        %2285 = vrot.lane.b32.xlu0 %v2281, 58
        %v2286 = vpop.permute.xlu0 %2285
        %2287 = vrot.lane.b32.xlu0 %v2282, 58
        %v2288 = vpop.permute.xlu0 %2287
        %2289 = vrot.lane.b32.xlu0 %v2283, 58
        %v2290 = vpop.permute.xlu0 %2289
        %2291 = vrot.lane.b32.xlu0 %v2284, 58
        %v2292 = vpop.permute.xlu0 %2291
        %vm2293 = vcmask 474112
        %v2294 = vsel %vm2293, %v2286, %v2288
        %v2295 = vsel %vm2293, %v2288, %v2290
        %v2296 = vsel %vm2293, %v2290, %v2292
        %v2300 = vmul.f32 %v2270, %v2294
        %v2301 = vmul.f32 %v2271, %v2295
        %v2302 = vmul.f32 %v2272, %v2296
        %v2303 = vadd.f32 %v2300, 0.0
        %v2304 = vadd.f32 %v2301, 0.0
        %v2305 = vadd.f32 %v2302, 0.0
        %v2306 = vsub.f32 %v2262, -1.0
        %v2307 = vand.u32 2147483647, %v2306
        %v2308 = vsub.f32 1.0, %v2307
        %v2309 = vmax.f32 %v2308, 0.0
        %v2310 = vld [vmem:[%s340] sm:$0xff]
        %v2311 = vld [vmem:[%s340 + $0x8] sm:$0xff]
        %v2313 = vperm.slane %v2309, 0
        %v2314 = vperm.slane %v2309, 1
        %v2315 = vperm.slane %v2309, 2
        %2321 = vst [vmem:[#allocation1] ss:$2 sm:$0xff] %v2310
        %s2322 = scalar_lea.vmem [#allocation1], 16
        %2323 = vst [vmem:[%s2322] ss:$2 sm:$0xff] %v2311
        %v2324 = vld.sshfl [vmem:[#allocation1] sm:$0xff pattern:$0x75316420]
        %v2325 = vld.sshfl [vmem:[#allocation1 + $0x8] sm:$0xff pattern:$0x75316420]
        %v2326 = vld.sshfl [vmem:[#allocation1 + $0x10] sm:$0xff pattern:$0x75316420]
        %v2327 = vld.sshfl [vmem:[#allocation1 + $0x18] sm:$0xff pattern:$0x75316420]
        %2328 = vrot.lane.b32.xlu0 %v2324, 34
        %v2329 = vpop.permute.xlu0 %2328
        %2330 = vrot.lane.b32.xlu0 %v2325, 34
        %v2331 = vpop.permute.xlu0 %2330
        %2332 = vrot.lane.b32.xlu0 %v2326, 34
        %v2333 = vpop.permute.xlu0 %2332
        %2334 = vrot.lane.b32.xlu0 %v2327, 34
        %v2335 = vpop.permute.xlu0 %2334
        %vm2336 = vcmask 277504
        %v2337 = vsel %vm2336, %v2329, %v2331
        %v2338 = vsel %vm2336, %v2331, %v2333
        %v2339 = vsel %vm2336, %v2333, %v2335
        %v2343 = vmul.f32 %v2313, %v2337
        %v2344 = vmul.f32 %v2314, %v2338
        %v2345 = vmul.f32 %v2315, %v2339
        %v2346 = vadd.f32 %v2303, %v2343
        %v2347 = vadd.f32 %v2304, %v2344
        %v2348 = vadd.f32 %v2305, %v2345
        %v2349 = vand.u32 2147483647, %v2262
        %v2350 = vsub.f32 1.0, %v2349
        %v2351 = vmax.f32 %v2350, 0.0
        %v2352 = vld [vmem:[%s340] sm:$0xff]
        %v2353 = vld [vmem:[%s340 + $0x8] sm:$0xff]
        %v2355 = vperm.slane %v2351, 0
        %v2356 = vperm.slane %v2351, 1
        %v2357 = vperm.slane %v2351, 2
        %2363 = vst [vmem:[#allocation1] ss:$2 sm:$0xff] %v2352
        %s2364 = scalar_lea.vmem [#allocation1], 16
        %2365 = vst [vmem:[%s2364] ss:$2 sm:$0xff] %v2353
        %v2366 = vld.sshfl [vmem:[#allocation1] sm:$0xff pattern:$0x75316420]
        %v2367 = vld.sshfl [vmem:[#allocation1 + $0x8] sm:$0xff pattern:$0x75316420]
        %v2368 = vld.sshfl [vmem:[#allocation1 + $0x10] sm:$0xff pattern:$0x75316420]
        %v2369 = vld.sshfl [vmem:[#allocation1 + $0x18] sm:$0xff pattern:$0x75316420]
        %2370 = vrot.lane.b32.xlu0 %v2366, 10
        %v2371 = vpop.permute.xlu0 %2370
        %2372 = vrot.lane.b32.xlu0 %v2367, 10
        %v2373 = vpop.permute.xlu0 %2372
        %2374 = vrot.lane.b32.xlu0 %v2368, 10
        %v2375 = vpop.permute.xlu0 %2374
        %2376 = vrot.lane.b32.xlu0 %v2369, 10
        %v2377 = vpop.permute.xlu0 %2376
        %vm2378 = vcmask 80896
        %v2379 = vsel %vm2378, %v2371, %v2373
        %v2380 = vsel %vm2378, %v2373, %v2375
        %v2381 = vsel %vm2378, %v2375, %v2377
        %v2385 = vmul.f32 %v2355, %v2379
        %v2386 = vmul.f32 %v2356, %v2380
        %v2387 = vmul.f32 %v2357, %v2381
        %v2388 = vadd.f32 %v2346, %v2385
        %v2389 = vadd.f32 %v2347, %v2386
        %v2390 = vadd.f32 %v2348, %v2387
        %v2391 = vsub.f32 %v2262, 1.0
        %v2392 = vand.u32 2147483647, %v2391
        %v2393 = vsub.f32 1.0, %v2392
        %v2394 = vmax.f32 %v2393, 0.0
        %v2395 = vld [vmem:[%s340 + $0x4] sm:$0xff]
        %v2396 = vld [vmem:[%s340 + $0xc] sm:$0xff]
        %v2398 = vperm.slane %v2394, 0
        %v2399 = vperm.slane %v2394, 1
        %v2400 = vperm.slane %v2394, 2
        %2406 = vst [vmem:[#allocation1] ss:$2 sm:$0xff] %v2395
        %s2407 = scalar_lea.vmem [#allocation1], 16
        %2408 = vst [vmem:[%s2407] ss:$2 sm:$0xff] %v2396
        %v2409 = vld.sshfl [vmem:[#allocation1] sm:$0xff pattern:$0x75316420]
        %v2410 = vld.sshfl [vmem:[#allocation1 + $0x8] sm:$0xff pattern:$0x75316420]
        %v2411 = vld.sshfl [vmem:[#allocation1 + $0x10] sm:$0xff pattern:$0x75316420]
        %v2412 = vld.sshfl [vmem:[#allocation1 + $0x18] sm:$0xff pattern:$0x75316420]
        %2413 = vrot.lane.b32.xlu0 %v2409, 114
        %v2414 = vpop.permute.xlu0 %2413
        %2415 = vrot.lane.b32.xlu0 %v2410, 114
        %v2416 = vpop.permute.xlu0 %2415
        %2417 = vrot.lane.b32.xlu0 %v2411, 114
        %v2418 = vpop.permute.xlu0 %2417
        %2419 = vrot.lane.b32.xlu0 %v2412, 114
        %v2420 = vpop.permute.xlu0 %2419
        %vm2421 = vcmask 932864
        %v2422 = vsel %vm2421, %v2414, %v2416
        %v2423 = vsel %vm2421, %v2416, %v2418
        %v2424 = vsel %vm2421, %v2418, %v2420
        %v2428 = vmul.f32 %v2398, %v2422
        %v2429 = vmul.f32 %v2399, %v2423
        %v2430 = vmul.f32 %v2400, %v2424
        %v2431 = vadd.f32 %v2388, %v2428
        %v2432 = vadd.f32 %v2389, %v2429
        %v2433 = vadd.f32 %v2390, %v2430
        %v2434 = vsub.f32 %v2262, 2.0
        %v2435 = vand.u32 2147483647, %v2434
        %v2436 = vsub.f32 1.0, %v2435
        %v2437 = vmax.f32 %v2436, 0.0
        %v2438 = vld [vmem:[%s340 + $0x4] sm:$0xff]
        %v2439 = vld [vmem:[%s340 + $0xc] sm:$0xff]
        %v2441 = vperm.slane %v2437, 0
        %v2442 = vperm.slane %v2437, 1
        %v2443 = vperm.slane %v2437, 2
        %2449 = vst [vmem:[#allocation1] ss:$2 sm:$0xff] %v2438
        %s2450 = scalar_lea.vmem [#allocation1], 16
        %2451 = vst [vmem:[%s2450] ss:$2 sm:$0xff] %v2439
        %v2452 = vld.sshfl [vmem:[#allocation1] sm:$0xff pattern:$0x75316420]
        %v2453 = vld.sshfl [vmem:[#allocation1 + $0x8] sm:$0xff pattern:$0x75316420]
        %v2454 = vld.sshfl [vmem:[#allocation1 + $0x10] sm:$0xff pattern:$0x75316420]
        %v2455 = vld.sshfl [vmem:[#allocation1 + $0x18] sm:$0xff pattern:$0x75316420]
        %2456 = vrot.lane.b32.xlu0 %v2452, 90
        %v2457 = vpop.permute.xlu0 %2456
        %2458 = vrot.lane.b32.xlu0 %v2453, 90
        %v2459 = vpop.permute.xlu0 %2458
        %2460 = vrot.lane.b32.xlu0 %v2454, 90
        %v2461 = vpop.permute.xlu0 %2460
        %2462 = vrot.lane.b32.xlu0 %v2455, 90
        %v2463 = vpop.permute.xlu0 %2462
        %vm2464 = vcmask 736256
        %v2465 = vsel %vm2464, %v2457, %v2459
        %v2466 = vsel %vm2464, %v2459, %v2461
        %v2467 = vsel %vm2464, %v2461, %v2463
        %v2471 = vmul.f32 %v2441, %v2465
        %v2472 = vmul.f32 %v2442, %v2466
        %v2473 = vmul.f32 %v2443, %v2467
        %v2474 = vadd.f32 %v2431, %v2471
        %v2475 = vadd.f32 %v2432, %v2472
        %v2476 = vadd.f32 %v2433, %v2473
        %v2477 = vsub.f32 %v2262, 3.0
        %v2478 = vand.u32 2147483647, %v2477
        %v2479 = vsub.f32 1.0, %v2478
        %v2480 = vmax.f32 %v2479, 0.0
        %v2481 = vld [vmem:[%s340 + $0x4] sm:$0xff]
        %v2482 = vld [vmem:[%s340 + $0xc] sm:$0xff]
        %v2484 = vperm.slane %v2480, 0
        %v2485 = vperm.slane %v2480, 1
        %v2486 = vperm.slane %v2480, 2
        %2492 = vst [vmem:[#allocation1] ss:$2 sm:$0xff] %v2481
        %s2493 = scalar_lea.vmem [#allocation1], 16
        %2494 = vst [vmem:[%s2493] ss:$2 sm:$0xff] %v2482
        %v2495 = vld.sshfl [vmem:[#allocation1] sm:$0xff pattern:$0x75316420]
        %v2496 = vld.sshfl [vmem:[#allocation1 + $0x8] sm:$0xff pattern:$0x75316420]
        %v2497 = vld.sshfl [vmem:[#allocation1 + $0x10] sm:$0xff pattern:$0x75316420]
        %v2498 = vld.sshfl [vmem:[#allocation1 + $0x18] sm:$0xff pattern:$0x75316420]
        %2499 = vrot.lane.b32.xlu0 %v2495, 66
        %v2500 = vpop.permute.xlu0 %2499
        %2501 = vrot.lane.b32.xlu0 %v2496, 66
        %v2502 = vpop.permute.xlu0 %2501
        %2503 = vrot.lane.b32.xlu0 %v2497, 66
        %v2504 = vpop.permute.xlu0 %2503
        %2505 = vrot.lane.b32.xlu0 %v2498, 66
        %v2506 = vpop.permute.xlu0 %2505
        %vm2507 = vcmask 539648
        %v2508 = vsel %vm2507, %v2500, %v2502
        %v2509 = vsel %vm2507, %v2502, %v2504
        %v2510 = vsel %vm2507, %v2504, %v2506
        %v2514 = vmul.f32 %v2484, %v2508
        %v2515 = vmul.f32 %v2485, %v2509
        %v2516 = vmul.f32 %v2486, %v2510
        %v2517 = vadd.f32 %v2474, %v2514
        %v2518 = vadd.f32 %v2475, %v2515
        %v2519 = vadd.f32 %v2476, %v2516
        %2520 = vst [vmem:[#allocation3 + $0x18] sm:$0xf] %v2517
        %2521 = vst [vmem:[#allocation3 + $0x20] sm:$0xf] %v2518
        %2522 = vst [vmem:[#allocation3 + $0x28] sm:$0xf] %v2519
        %v2523 = vld [vmem:[%s1391] ss:$8 sm:$0x7]
        %v2524 = vsub.f32 %v2523, -1.0
        %v2525 = vand.u32 2147483647, %v2524
        %v2526 = vsub.f32 1.0, %v2525
        %v2527 = vmax.f32 %v2526, 0.0
        %v2528 = vld [vmem:[%s340] sm:$0xff]
        %v2529 = vld [vmem:[%s340 + $0x8] sm:$0xff]
        %v2531 = vperm.slane %v2527, 0
        %v2532 = vperm.slane %v2527, 1
        %v2533 = vperm.slane %v2527, 2
        %2539 = vst [vmem:[#allocation1] ss:$2 sm:$0xff] %v2528
        %s2540 = scalar_lea.vmem [#allocation1], 16
        %2541 = vst [vmem:[%s2540] ss:$2 sm:$0xff] %v2529
        %v2542 = vld.sshfl [vmem:[#allocation1] sm:$0xff pattern:$0x75316420]
        %v2543 = vld.sshfl [vmem:[#allocation1 + $0x8] sm:$0xff pattern:$0x75316420]
        %v2544 = vld.sshfl [vmem:[#allocation1 + $0x10] sm:$0xff pattern:$0x75316420]
        %v2545 = vld.sshfl [vmem:[#allocation1 + $0x18] sm:$0xff pattern:$0x75316420]
        %2546 = vrot.lane.b32.xlu0 %v2542, 33
        %v2547 = vpop.permute.xlu0 %2546
        %2548 = vrot.lane.b32.xlu0 %v2543, 33
        %v2549 = vpop.permute.xlu0 %2548
        %2550 = vrot.lane.b32.xlu0 %v2544, 33
        %v2551 = vpop.permute.xlu0 %2550
        %2552 = vrot.lane.b32.xlu0 %v2545, 33
        %v2553 = vpop.permute.xlu0 %2552
        %v2554 = vsel %vm437, %v2547, %v2549
        %v2555 = vsel %vm437, %v2549, %v2551
        %v2556 = vsel %vm437, %v2551, %v2553
        %v2560 = vmul.f32 %v2531, %v2554
        %v2561 = vmul.f32 %v2532, %v2555
        %v2562 = vmul.f32 %v2533, %v2556
        %v2563 = vadd.f32 %v2560, 0.0
        %v2564 = vadd.f32 %v2561, 0.0
        %v2565 = vadd.f32 %v2562, 0.0
        %v2566 = vand.u32 2147483647, %v2523
        %v2567 = vsub.f32 1.0, %v2566
        %v2568 = vmax.f32 %v2567, 0.0
        %v2569 = vld [vmem:[%s340] sm:$0xff]
        %v2570 = vld [vmem:[%s340 + $0x8] sm:$0xff]
        %v2572 = vperm.slane %v2568, 0
        %v2573 = vperm.slane %v2568, 1
        %v2574 = vperm.slane %v2568, 2
        %2580 = vst [vmem:[#allocation1] ss:$2 sm:$0xff] %v2569
        %s2581 = scalar_lea.vmem [#allocation1], 16
        %2582 = vst [vmem:[%s2581] ss:$2 sm:$0xff] %v2570
        %v2583 = vld.sshfl [vmem:[#allocation1] sm:$0xff pattern:$0x75316420]
        %v2584 = vld.sshfl [vmem:[#allocation1 + $0x8] sm:$0xff pattern:$0x75316420]
        %v2585 = vld.sshfl [vmem:[#allocation1 + $0x10] sm:$0xff pattern:$0x75316420]
        %v2586 = vld.sshfl [vmem:[#allocation1 + $0x18] sm:$0xff pattern:$0x75316420]
        %2587 = vrot.lane.b32.xlu0 %v2583, 9
        %v2588 = vpop.permute.xlu0 %2587
        %2589 = vrot.lane.b32.xlu0 %v2584, 9
        %v2590 = vpop.permute.xlu0 %2589
        %2591 = vrot.lane.b32.xlu0 %v2585, 9
        %v2592 = vpop.permute.xlu0 %2591
        %2593 = vrot.lane.b32.xlu0 %v2586, 9
        %v2594 = vpop.permute.xlu0 %2593
        %v2595 = vsel %vm560, %v2588, %v2590
        %v2596 = vsel %vm560, %v2590, %v2592
        %v2597 = vsel %vm560, %v2592, %v2594
        %v2601 = vmul.f32 %v2572, %v2595
        %v2602 = vmul.f32 %v2573, %v2596
        %v2603 = vmul.f32 %v2574, %v2597
        %v2604 = vadd.f32 %v2563, %v2601
        %v2605 = vadd.f32 %v2564, %v2602
        %v2606 = vadd.f32 %v2565, %v2603
        %v2607 = vsub.f32 %v2523, 1.0
        %v2608 = vand.u32 2147483647, %v2607
        %v2609 = vsub.f32 1.0, %v2608
        %v2610 = vmax.f32 %v2609, 0.0
        %v2611 = vld [vmem:[%s340 + $0x4] sm:$0xff]
        %v2612 = vld [vmem:[%s340 + $0xc] sm:$0xff]
        %v2614 = vperm.slane %v2610, 0
        %v2615 = vperm.slane %v2610, 1
        %v2616 = vperm.slane %v2610, 2
        %2622 = vst [vmem:[#allocation1] ss:$2 sm:$0xff] %v2611
        %s2623 = scalar_lea.vmem [#allocation1], 16
        %2624 = vst [vmem:[%s2623] ss:$2 sm:$0xff] %v2612
        %v2625 = vld.sshfl [vmem:[#allocation1] sm:$0xff pattern:$0x75316420]
        %v2626 = vld.sshfl [vmem:[#allocation1 + $0x8] sm:$0xff pattern:$0x75316420]
        %v2627 = vld.sshfl [vmem:[#allocation1 + $0x10] sm:$0xff pattern:$0x75316420]
        %v2628 = vld.sshfl [vmem:[#allocation1 + $0x18] sm:$0xff pattern:$0x75316420]
        %2629 = vrot.lane.b32.xlu0 %v2625, 113
        %v2630 = vpop.permute.xlu0 %2629
        %2631 = vrot.lane.b32.xlu0 %v2626, 113
        %v2632 = vpop.permute.xlu0 %2631
        %2633 = vrot.lane.b32.xlu0 %v2627, 113
        %v2634 = vpop.permute.xlu0 %2633
        %2635 = vrot.lane.b32.xlu0 %v2628, 113
        %v2636 = vpop.permute.xlu0 %2635
        %v2637 = vsel %vm676, %v2630, %v2632
        %v2638 = vsel %vm676, %v2632, %v2634
        %v2639 = vsel %vm676, %v2634, %v2636
        %v2643 = vmul.f32 %v2614, %v2637
        %v2644 = vmul.f32 %v2615, %v2638
        %v2645 = vmul.f32 %v2616, %v2639
        %v2646 = vadd.f32 %v2604, %v2643
        %v2647 = vadd.f32 %v2605, %v2644
        %v2648 = vadd.f32 %v2606, %v2645
        %v2649 = vsub.f32 %v2523, 2.0
        %v2650 = vand.u32 2147483647, %v2649
        %v2651 = vsub.f32 1.0, %v2650
        %v2652 = vmax.f32 %v2651, 0.0
        %v2653 = vld [vmem:[%s340 + $0x4] sm:$0xff]
        %v2654 = vld [vmem:[%s340 + $0xc] sm:$0xff]
        %v2656 = vperm.slane %v2652, 0
        %v2657 = vperm.slane %v2652, 1
        %v2658 = vperm.slane %v2652, 2
        %2664 = vst [vmem:[#allocation1] ss:$2 sm:$0xff] %v2653
        %s2665 = scalar_lea.vmem [#allocation1], 16
        %2666 = vst [vmem:[%s2665] ss:$2 sm:$0xff] %v2654
        %v2667 = vld.sshfl [vmem:[#allocation1] sm:$0xff pattern:$0x75316420]
        %v2668 = vld.sshfl [vmem:[#allocation1 + $0x8] sm:$0xff pattern:$0x75316420]
        %v2669 = vld.sshfl [vmem:[#allocation1 + $0x10] sm:$0xff pattern:$0x75316420]
        %v2670 = vld.sshfl [vmem:[#allocation1 + $0x18] sm:$0xff pattern:$0x75316420]
        %2671 = vrot.lane.b32.xlu0 %v2667, 89
        %v2672 = vpop.permute.xlu0 %2671
        %2673 = vrot.lane.b32.xlu0 %v2668, 89
        %v2674 = vpop.permute.xlu0 %2673
        %2675 = vrot.lane.b32.xlu0 %v2669, 89
        %v2676 = vpop.permute.xlu0 %2675
        %2677 = vrot.lane.b32.xlu0 %v2670, 89
        %v2678 = vpop.permute.xlu0 %2677
        %vm2679 = vcmask 728064
        %v2680 = vsel %vm2679, %v2672, %v2674
        %v2681 = vsel %vm2679, %v2674, %v2676
        %v2682 = vsel %vm2679, %v2676, %v2678
        %v2686 = vmul.f32 %v2656, %v2680
        %v2687 = vmul.f32 %v2657, %v2681
        %v2688 = vmul.f32 %v2658, %v2682
        %v2689 = vadd.f32 %v2646, %v2686
        %v2690 = vadd.f32 %v2647, %v2687
        %v2691 = vadd.f32 %v2648, %v2688
        %v2695 = vrot.slane %v2689, 4
        %v2696 = vrot.slane %v2690, 4
        %v2697 = vrot.slane %v2691, 4
        %2701 = vst [vmem:[#allocation3 + $0x18] sm:$0xf0] %v2695
        %2702 = vst [vmem:[#allocation3 + $0x20] sm:$0xf0] %v2696
        %2703 = vst [vmem:[#allocation3 + $0x28] sm:$0xf0] %v2697
        %v2704 = vld [vmem:[%s340] sm:$0xff]
        %v2705 = vld [vmem:[%s340 + $0x8] sm:$0xff]
        %2708 = vst [vmem:[#allocation1] ss:$2 sm:$0xff] %v2704
        %s2709 = scalar_lea.vmem [#allocation1], 16
        %2710 = vst [vmem:[%s2709] ss:$2 sm:$0xff] %v2705
        %v2711 = vld.sshfl [vmem:[#allocation1] sm:$0xff pattern:$0x75316420]
        %v2712 = vld.sshfl [vmem:[#allocation1 + $0x8] sm:$0xff pattern:$0x75316420]
        %v2713 = vld.sshfl [vmem:[#allocation1 + $0x10] sm:$0xff pattern:$0x75316420]
        %v2714 = vld.sshfl [vmem:[#allocation1 + $0x18] sm:$0xff pattern:$0x75316420]
        %2715 = vrot.lane.b32.xlu0 %v2711, 8
        %v2716 = vpop.permute.xlu0 %2715
        %2717 = vrot.lane.b32.xlu0 %v2712, 8
        %v2718 = vpop.permute.xlu0 %2717
        %2719 = vrot.lane.b32.xlu0 %v2713, 8
        %v2720 = vpop.permute.xlu0 %2719
        %2721 = vrot.lane.b32.xlu0 %v2714, 8
        %v2722 = vpop.permute.xlu0 %2721
        %v2723 = vsel %vm589, %v2716, %v2718
        %v2724 = vsel %vm589, %v2718, %v2720
        %v2725 = vsel %vm589, %v2720, %v2722
        %2729 = vst [vmem:[#allocation3 + $0x30] sm:$0xf] %v2723
        %2730 = vst [vmem:[#allocation3 + $0x38] sm:$0xf] %v2724
        %2731 = vst [vmem:[#allocation3 + $0x40] sm:$0xf] %v2725
        %v2732 = vld [vmem:[%s1291] ss:$8 sm:$0x7]
        %v2733 = vsub.f32 %v2732, -1.0
        %v2734 = vand.u32 2147483647, %v2733
        %v2735 = vsub.f32 1.0, %v2734
        %v2736 = vmax.f32 %v2735, 0.0
        %v2737 = vld [vmem:[%s340] sm:$0xff]
        %v2738 = vld [vmem:[%s340 + $0x8] sm:$0xff]
        %v2740 = vperm.slane %v2736, 0
        %v2741 = vperm.slane %v2736, 1
        %v2742 = vperm.slane %v2736, 2
        %2748 = vst [vmem:[#allocation1] ss:$2 sm:$0xff] %v2737
        %s2749 = scalar_lea.vmem [#allocation1], 16
        %2750 = vst [vmem:[%s2749] ss:$2 sm:$0xff] %v2738
        %v2751 = vld.sshfl [vmem:[#allocation1] sm:$0xff pattern:$0x75316420]
        %v2752 = vld.sshfl [vmem:[#allocation1 + $0x8] sm:$0xff pattern:$0x75316420]
        %v2753 = vld.sshfl [vmem:[#allocation1 + $0x10] sm:$0xff pattern:$0x75316420]
        %v2754 = vld.sshfl [vmem:[#allocation1 + $0x18] sm:$0xff pattern:$0x75316420]
        %2755 = vrot.lane.b32.xlu0 %v2751, 31
        %v2756 = vpop.permute.xlu0 %2755
        %2757 = vrot.lane.b32.xlu0 %v2752, 31
        %v2758 = vpop.permute.xlu0 %2757
        %2759 = vrot.lane.b32.xlu0 %v2753, 31
        %v2760 = vpop.permute.xlu0 %2759
        %2761 = vrot.lane.b32.xlu0 %v2754, 31
        %v2762 = vpop.permute.xlu0 %2761
        %v2763 = vsel %vm516, %v2756, %v2758
        %v2764 = vsel %vm516, %v2758, %v2760
        %v2765 = vsel %vm516, %v2760, %v2762
        %v2769 = vmul.f32 %v2740, %v2763
        %v2770 = vmul.f32 %v2741, %v2764
        %v2771 = vmul.f32 %v2742, %v2765
        %v2772 = vadd.f32 %v2769, 0.0
        %v2773 = vadd.f32 %v2770, 0.0
        %v2774 = vadd.f32 %v2771, 0.0
        %v2775 = vand.u32 2147483647, %v2732
        %v2776 = vsub.f32 1.0, %v2775
        %v2777 = vmax.f32 %v2776, 0.0
        %v2778 = vld [vmem:[%s340] sm:$0xff]
        %v2779 = vld [vmem:[%s340 + $0x8] sm:$0xff]
        %v2781 = vperm.slane %v2777, 0
        %v2782 = vperm.slane %v2777, 1
        %v2783 = vperm.slane %v2777, 2
        %2789 = vst [vmem:[#allocation1] ss:$2 sm:$0xff] %v2778
        %s2790 = scalar_lea.vmem [#allocation1], 16
        %2791 = vst [vmem:[%s2790] ss:$2 sm:$0xff] %v2779
        %v2792 = vld.sshfl [vmem:[#allocation1] sm:$0xff pattern:$0x75316420]
        %v2793 = vld.sshfl [vmem:[#allocation1 + $0x8] sm:$0xff pattern:$0x75316420]
        %v2794 = vld.sshfl [vmem:[#allocation1 + $0x10] sm:$0xff pattern:$0x75316420]
        %v2795 = vld.sshfl [vmem:[#allocation1 + $0x18] sm:$0xff pattern:$0x75316420]
        %2796 = vrot.lane.b32.xlu0 %v2792, 7
        %v2797 = vpop.permute.xlu0 %2796
        %2798 = vrot.lane.b32.xlu0 %v2793, 7
        %v2799 = vpop.permute.xlu0 %2798
        %2800 = vrot.lane.b32.xlu0 %v2794, 7
        %v2801 = vpop.permute.xlu0 %2800
        %2802 = vrot.lane.b32.xlu0 %v2795, 7
        %v2803 = vpop.permute.xlu0 %2802
        %v2804 = vsel %vm633, %v2797, %v2799
        %v2805 = vsel %vm633, %v2799, %v2801
        %v2806 = vsel %vm633, %v2801, %v2803
        %v2810 = vmul.f32 %v2781, %v2804
        %v2811 = vmul.f32 %v2782, %v2805
        %v2812 = vmul.f32 %v2783, %v2806
        %v2813 = vadd.f32 %v2772, %v2810
        %v2814 = vadd.f32 %v2773, %v2811
        %v2815 = vadd.f32 %v2774, %v2812
        %v2816 = vsub.f32 %v2732, 1.0
        %v2817 = vand.u32 2147483647, %v2816
        %v2818 = vsub.f32 1.0, %v2817
        %v2819 = vmax.f32 %v2818, 0.0
        %v2820 = vld [vmem:[%s340 + $0x4] sm:$0xff]
        %v2821 = vld [vmem:[%s340 + $0xc] sm:$0xff]
        %v2823 = vperm.slane %v2819, 0
        %v2824 = vperm.slane %v2819, 1
        %v2825 = vperm.slane %v2819, 2
        %2831 = vst [vmem:[#allocation1] ss:$2 sm:$0xff] %v2820
        %s2832 = scalar_lea.vmem [#allocation1], 16
        %2833 = vst [vmem:[%s2832] ss:$2 sm:$0xff] %v2821
        %v2834 = vld.sshfl [vmem:[#allocation1] sm:$0xff pattern:$0x75316420]
        %v2835 = vld.sshfl [vmem:[#allocation1 + $0x8] sm:$0xff pattern:$0x75316420]
        %v2836 = vld.sshfl [vmem:[#allocation1 + $0x10] sm:$0xff pattern:$0x75316420]
        %v2837 = vld.sshfl [vmem:[#allocation1 + $0x18] sm:$0xff pattern:$0x75316420]
        %2838 = vrot.lane.b32.xlu0 %v2834, 111
        %v2839 = vpop.permute.xlu0 %2838
        %2840 = vrot.lane.b32.xlu0 %v2835, 111
        %v2841 = vpop.permute.xlu0 %2840
        %2842 = vrot.lane.b32.xlu0 %v2836, 111
        %v2843 = vpop.permute.xlu0 %2842
        %2844 = vrot.lane.b32.xlu0 %v2837, 111
        %v2845 = vpop.permute.xlu0 %2844
        %v2846 = vsel %vm749, %v2839, %v2841
        %v2847 = vsel %vm749, %v2841, %v2843
        %v2848 = vsel %vm749, %v2843, %v2845
        %v2852 = vmul.f32 %v2823, %v2846
        %v2853 = vmul.f32 %v2824, %v2847
        %v2854 = vmul.f32 %v2825, %v2848
        %v2855 = vadd.f32 %v2813, %v2852
        %v2856 = vadd.f32 %v2814, %v2853
        %v2857 = vadd.f32 %v2815, %v2854
        %v2858 = vsub.f32 %v2732, 2.0
        %v2859 = vand.u32 2147483647, %v2858
        %v2860 = vsub.f32 1.0, %v2859
        %v2861 = vmax.f32 %v2860, 0.0
        %v2862 = vld [vmem:[%s340 + $0x4] sm:$0xff]
        %v2863 = vld [vmem:[%s340 + $0xc] sm:$0xff]
        %v2865 = vperm.slane %v2861, 0
        %v2866 = vperm.slane %v2861, 1
        %v2867 = vperm.slane %v2861, 2
        %2873 = vst [vmem:[#allocation1] ss:$2 sm:$0xff] %v2862
        %s2874 = scalar_lea.vmem [#allocation1], 16
        %2875 = vst [vmem:[%s2874] ss:$2 sm:$0xff] %v2863
        %v2876 = vld.sshfl [vmem:[#allocation1] sm:$0xff pattern:$0x75316420]
        %v2877 = vld.sshfl [vmem:[#allocation1 + $0x8] sm:$0xff pattern:$0x75316420]
        %v2878 = vld.sshfl [vmem:[#allocation1 + $0x10] sm:$0xff pattern:$0x75316420]
        %v2879 = vld.sshfl [vmem:[#allocation1 + $0x18] sm:$0xff pattern:$0x75316420]
        %2880 = vrot.lane.b32.xlu0 %v2876, 87
        %v2881 = vpop.permute.xlu0 %2880
        %2882 = vrot.lane.b32.xlu0 %v2877, 87
        %v2883 = vpop.permute.xlu0 %2882
        %2884 = vrot.lane.b32.xlu0 %v2878, 87
        %v2885 = vpop.permute.xlu0 %2884
        %2886 = vrot.lane.b32.xlu0 %v2879, 87
        %v2887 = vpop.permute.xlu0 %2886
        %vm2888 = vcmask 711680
        %v2889 = vsel %vm2888, %v2881, %v2883
        %v2890 = vsel %vm2888, %v2883, %v2885
        %v2891 = vsel %vm2888, %v2885, %v2887
        %v2895 = vmul.f32 %v2865, %v2889
        %v2896 = vmul.f32 %v2866, %v2890
        %v2897 = vmul.f32 %v2867, %v2891
        %v2898 = vadd.f32 %v2855, %v2895
        %v2899 = vadd.f32 %v2856, %v2896
        %v2900 = vadd.f32 %v2857, %v2897
        %v2904 = vrot.slane %v2898, 4
        %v2905 = vrot.slane %v2899, 4
        %v2906 = vrot.slane %v2900, 4
        %2910 = vst [vmem:[#allocation3 + $0x30] sm:$0xf0] %v2904
        %2911 = vst [vmem:[#allocation3 + $0x38] sm:$0xf0] %v2905
        %2912 = vst [vmem:[#allocation3 + $0x40] sm:$0xf0] %v2906
        %v2913 = vld [vmem:[%s1319] ss:$8 sm:$0x7]
        %v2914 = vsub.f32 %v2913, -2.0
        %v2915 = vand.u32 2147483647, %v2914
        %v2916 = vsub.f32 1.0, %v2915
        %v2917 = vmax.f32 %v2916, 0.0
        %v2918 = vld [vmem:[%s340] sm:$0xff]
        %v2919 = vld [vmem:[%s340 + $0x8] sm:$0xff]
        %v2921 = vperm.slane %v2917, 0
        %v2922 = vperm.slane %v2917, 1
        %v2923 = vperm.slane %v2917, 2
        %2929 = vst [vmem:[#allocation1] ss:$2 sm:$0xff] %v2918
        %s2930 = scalar_lea.vmem [#allocation1], 16
        %2931 = vst [vmem:[%s2930] ss:$2 sm:$0xff] %v2919
        %v2932 = vld.sshfl [vmem:[#allocation1] sm:$0xff pattern:$0x75316420]
        %v2933 = vld.sshfl [vmem:[#allocation1 + $0x8] sm:$0xff pattern:$0x75316420]
        %v2934 = vld.sshfl [vmem:[#allocation1 + $0x10] sm:$0xff pattern:$0x75316420]
        %v2935 = vld.sshfl [vmem:[#allocation1 + $0x18] sm:$0xff pattern:$0x75316420]
        %2936 = vrot.lane.b32.xlu0 %v2932, 54
        %v2937 = vpop.permute.xlu0 %2936
        %2938 = vrot.lane.b32.xlu0 %v2933, 54
        %v2939 = vpop.permute.xlu0 %2938
        %2940 = vrot.lane.b32.xlu0 %v2934, 54
        %v2941 = vpop.permute.xlu0 %2940
        %2942 = vrot.lane.b32.xlu0 %v2935, 54
        %v2943 = vpop.permute.xlu0 %2942
        %vm2944 = vcmask 441344
        %v2945 = vsel %vm2944, %v2937, %v2939
        %v2946 = vsel %vm2944, %v2939, %v2941
        %v2947 = vsel %vm2944, %v2941, %v2943
        %v2951 = vmul.f32 %v2921, %v2945
        %v2952 = vmul.f32 %v2922, %v2946
        %v2953 = vmul.f32 %v2923, %v2947
        %v2954 = vadd.f32 %v2951, 0.0
        %v2955 = vadd.f32 %v2952, 0.0
        %v2956 = vadd.f32 %v2953, 0.0
        %v2957 = vsub.f32 %v2913, -1.0
        %v2958 = vand.u32 2147483647, %v2957
        %v2959 = vsub.f32 1.0, %v2958
        %v2960 = vmax.f32 %v2959, 0.0
        %v2961 = vld [vmem:[%s340] sm:$0xff]
        %v2962 = vld [vmem:[%s340 + $0x8] sm:$0xff]
        %v2964 = vperm.slane %v2960, 0
        %v2965 = vperm.slane %v2960, 1
        %v2966 = vperm.slane %v2960, 2
        %2972 = vst [vmem:[#allocation1] ss:$2 sm:$0xff] %v2961
        %s2973 = scalar_lea.vmem [#allocation1], 16
        %2974 = vst [vmem:[%s2973] ss:$2 sm:$0xff] %v2962
        %v2975 = vld.sshfl [vmem:[#allocation1] sm:$0xff pattern:$0x75316420]
        %v2976 = vld.sshfl [vmem:[#allocation1 + $0x8] sm:$0xff pattern:$0x75316420]
        %v2977 = vld.sshfl [vmem:[#allocation1 + $0x10] sm:$0xff pattern:$0x75316420]
        %v2978 = vld.sshfl [vmem:[#allocation1 + $0x18] sm:$0xff pattern:$0x75316420]
        %2979 = vrot.lane.b32.xlu0 %v2975, 30
        %v2980 = vpop.permute.xlu0 %2979
        %2981 = vrot.lane.b32.xlu0 %v2976, 30
        %v2982 = vpop.permute.xlu0 %2981
        %2983 = vrot.lane.b32.xlu0 %v2977, 30
        %v2984 = vpop.permute.xlu0 %2983
        %2985 = vrot.lane.b32.xlu0 %v2978, 30
        %v2986 = vpop.permute.xlu0 %2985
        %vm2987 = vcmask 244736
        %v2988 = vsel %vm2987, %v2980, %v2982
        %v2989 = vsel %vm2987, %v2982, %v2984
        %v2990 = vsel %vm2987, %v2984, %v2986
        %v2994 = vmul.f32 %v2964, %v2988
        %v2995 = vmul.f32 %v2965, %v2989
        %v2996 = vmul.f32 %v2966, %v2990
        %v2997 = vadd.f32 %v2954, %v2994
        %v2998 = vadd.f32 %v2955, %v2995
        %v2999 = vadd.f32 %v2956, %v2996
        %v3000 = vand.u32 2147483647, %v2913
        %v3001 = vsub.f32 1.0, %v3000
        %v3002 = vmax.f32 %v3001, 0.0
        %v3003 = vld [vmem:[%s340] sm:$0xff]
        %v3004 = vld [vmem:[%s340 + $0x8] sm:$0xff]
        %v3006 = vperm.slane %v3002, 0
        %v3007 = vperm.slane %v3002, 1
        %v3008 = vperm.slane %v3002, 2
        %3014 = vst [vmem:[#allocation1] ss:$2 sm:$0xff] %v3003
        %s3015 = scalar_lea.vmem [#allocation1], 16
        %3016 = vst [vmem:[%s3015] ss:$2 sm:$0xff] %v3004
        %v3017 = vld.sshfl [vmem:[#allocation1] sm:$0xff pattern:$0x75316420]
        %v3018 = vld.sshfl [vmem:[#allocation1 + $0x8] sm:$0xff pattern:$0x75316420]
        %v3019 = vld.sshfl [vmem:[#allocation1 + $0x10] sm:$0xff pattern:$0x75316420]
        %v3020 = vld.sshfl [vmem:[#allocation1 + $0x18] sm:$0xff pattern:$0x75316420]
        %3021 = vrot.lane.b32.xlu0 %v3017, 6
        %v3022 = vpop.permute.xlu0 %3021
        %3023 = vrot.lane.b32.xlu0 %v3018, 6
        %v3024 = vpop.permute.xlu0 %3023
        %3025 = vrot.lane.b32.xlu0 %v3019, 6
        %v3026 = vpop.permute.xlu0 %3025
        %3027 = vrot.lane.b32.xlu0 %v3020, 6
        %v3028 = vpop.permute.xlu0 %3027
        %vm3029 = vcmask 48128
        %v3030 = vsel %vm3029, %v3022, %v3024
        %v3031 = vsel %vm3029, %v3024, %v3026
        %v3032 = vsel %vm3029, %v3026, %v3028
        %v3036 = vmul.f32 %v3006, %v3030
        %v3037 = vmul.f32 %v3007, %v3031
        %v3038 = vmul.f32 %v3008, %v3032
        %v3039 = vadd.f32 %v2997, %v3036
        %v3040 = vadd.f32 %v2998, %v3037
        %v3041 = vadd.f32 %v2999, %v3038
        %v3042 = vsub.f32 %v2913, 1.0
        %v3043 = vand.u32 2147483647, %v3042
        %v3044 = vsub.f32 1.0, %v3043
        %v3045 = vmax.f32 %v3044, 0.0
        %v3046 = vld [vmem:[%s340 + $0x4] sm:$0xff]
        %v3047 = vld [vmem:[%s340 + $0xc] sm:$0xff]
        %v3049 = vperm.slane %v3045, 0
        %v3050 = vperm.slane %v3045, 1
        %v3051 = vperm.slane %v3045, 2
        %3057 = vst [vmem:[#allocation1] ss:$2 sm:$0xff] %v3046
        %s3058 = scalar_lea.vmem [#allocation1], 16
        %3059 = vst [vmem:[%s3058] ss:$2 sm:$0xff] %v3047
        %v3060 = vld.sshfl [vmem:[#allocation1] sm:$0xff pattern:$0x75316420]
        %v3061 = vld.sshfl [vmem:[#allocation1 + $0x8] sm:$0xff pattern:$0x75316420]
        %v3062 = vld.sshfl [vmem:[#allocation1 + $0x10] sm:$0xff pattern:$0x75316420]
        %v3063 = vld.sshfl [vmem:[#allocation1 + $0x18] sm:$0xff pattern:$0x75316420]
        %3064 = vrot.lane.b32.xlu0 %v3060, 110
        %v3065 = vpop.permute.xlu0 %3064
        %3066 = vrot.lane.b32.xlu0 %v3061, 110
        %v3067 = vpop.permute.xlu0 %3066
        %3068 = vrot.lane.b32.xlu0 %v3062, 110
        %v3069 = vpop.permute.xlu0 %3068
        %3070 = vrot.lane.b32.xlu0 %v3063, 110
        %v3071 = vpop.permute.xlu0 %3070
        %vm3072 = vcmask 900096
        %v3073 = vsel %vm3072, %v3065, %v3067
        %v3074 = vsel %vm3072, %v3067, %v3069
        %v3075 = vsel %vm3072, %v3069, %v3071
        %v3079 = vmul.f32 %v3049, %v3073
        %v3080 = vmul.f32 %v3050, %v3074
        %v3081 = vmul.f32 %v3051, %v3075
        %v3082 = vadd.f32 %v3039, %v3079
        %v3083 = vadd.f32 %v3040, %v3080
        %v3084 = vadd.f32 %v3041, %v3081
        %v3085 = vsub.f32 %v2913, 2.0
        %v3086 = vand.u32 2147483647, %v3085
        %v3087 = vsub.f32 1.0, %v3086
        %v3088 = vmax.f32 %v3087, 0.0
        %v3089 = vld [vmem:[%s340 + $0x4] sm:$0xff]
        %v3090 = vld [vmem:[%s340 + $0xc] sm:$0xff]
        %v3092 = vperm.slane %v3088, 0
        %v3093 = vperm.slane %v3088, 1
        %v3094 = vperm.slane %v3088, 2
        %3100 = vst [vmem:[#allocation1] ss:$2 sm:$0xff] %v3089
        %s3101 = scalar_lea.vmem [#allocation1], 16
        %3102 = vst [vmem:[%s3101] ss:$2 sm:$0xff] %v3090
        %v3103 = vld.sshfl [vmem:[#allocation1] sm:$0xff pattern:$0x75316420]
        %v3104 = vld.sshfl [vmem:[#allocation1 + $0x8] sm:$0xff pattern:$0x75316420]
        %v3105 = vld.sshfl [vmem:[#allocation1 + $0x10] sm:$0xff pattern:$0x75316420]
        %v3106 = vld.sshfl [vmem:[#allocation1 + $0x18] sm:$0xff pattern:$0x75316420]
        %3107 = vrot.lane.b32.xlu0 %v3103, 86
        %v3108 = vpop.permute.xlu0 %3107
        %3109 = vrot.lane.b32.xlu0 %v3104, 86
        %v3110 = vpop.permute.xlu0 %3109
        %3111 = vrot.lane.b32.xlu0 %v3105, 86
        %v3112 = vpop.permute.xlu0 %3111
        %3113 = vrot.lane.b32.xlu0 %v3106, 86
        %v3114 = vpop.permute.xlu0 %3113
        %vm3115 = vcmask 703488
        %v3116 = vsel %vm3115, %v3108, %v3110
        %v3117 = vsel %vm3115, %v3110, %v3112
        %v3118 = vsel %vm3115, %v3112, %v3114
        %v3122 = vmul.f32 %v3092, %v3116
        %v3123 = vmul.f32 %v3093, %v3117
        %v3124 = vmul.f32 %v3094, %v3118
        %v3125 = vadd.f32 %v3082, %v3122
        %v3126 = vadd.f32 %v3083, %v3123
        %v3127 = vadd.f32 %v3084, %v3124
        %v3128 = vsub.f32 %v2913, 3.0
        %v3129 = vand.u32 2147483647, %v3128
        %v3130 = vsub.f32 1.0, %v3129
        %v3131 = vmax.f32 %v3130, 0.0
        %v3132 = vld [vmem:[%s340 + $0x4] sm:$0xff]
        %v3133 = vld [vmem:[%s340 + $0xc] sm:$0xff]
        %v3135 = vperm.slane %v3131, 0
        %v3136 = vperm.slane %v3131, 1
        %v3137 = vperm.slane %v3131, 2
        %3143 = vst [vmem:[#allocation1] ss:$2 sm:$0xff] %v3132
        %s3144 = scalar_lea.vmem [#allocation1], 16
        %3145 = vst [vmem:[%s3144] ss:$2 sm:$0xff] %v3133
        %v3146 = vld.sshfl [vmem:[#allocation1] sm:$0xff pattern:$0x75316420]
        %v3147 = vld.sshfl [vmem:[#allocation1 + $0x8] sm:$0xff pattern:$0x75316420]
        %v3148 = vld.sshfl [vmem:[#allocation1 + $0x10] sm:$0xff pattern:$0x75316420]
        %v3149 = vld.sshfl [vmem:[#allocation1 + $0x18] sm:$0xff pattern:$0x75316420]
        %3150 = vrot.lane.b32.xlu0 %v3146, 62
        %v3151 = vpop.permute.xlu0 %3150
        %3152 = vrot.lane.b32.xlu0 %v3147, 62
        %v3153 = vpop.permute.xlu0 %3152
        %3154 = vrot.lane.b32.xlu0 %v3148, 62
        %v3155 = vpop.permute.xlu0 %3154
        %3156 = vrot.lane.b32.xlu0 %v3149, 62
        %v3157 = vpop.permute.xlu0 %3156
        %vm3158 = vcmask 506880
        %v3159 = vsel %vm3158, %v3151, %v3153
        %v3160 = vsel %vm3158, %v3153, %v3155
        %v3161 = vsel %vm3158, %v3155, %v3157
        %v3165 = vmul.f32 %v3135, %v3159
        %v3166 = vmul.f32 %v3136, %v3160
        %v3167 = vmul.f32 %v3137, %v3161
        %v3168 = vadd.f32 %v3125, %v3165
        %v3169 = vadd.f32 %v3126, %v3166
        %v3170 = vadd.f32 %v3127, %v3167
        %3171 = vst [vmem:[#allocation3 + $0x48] sm:$0xf] %v3168
        %3172 = vst [vmem:[#allocation3 + $0x50] sm:$0xf] %v3169
        %3173 = vst [vmem:[#allocation3 + $0x58] sm:$0xf] %v3170
        %v3174 = vld [vmem:[%s1344] ss:$8 sm:$0x7]
        %v3175 = vsub.f32 %v3174, -3.0
        %v3176 = vand.u32 2147483647, %v3175
        %v3177 = vsub.f32 1.0, %v3176
        %v3178 = vmax.f32 %v3177, 0.0
        %v3179 = vld [vmem:[%s340] sm:$0xff]
        %v3180 = vld [vmem:[%s340 + $0x8] sm:$0xff]
        %v3182 = vperm.slane %v3178, 0
        %v3183 = vperm.slane %v3178, 1
        %v3184 = vperm.slane %v3178, 2
        %3190 = vst [vmem:[#allocation1] ss:$2 sm:$0xff] %v3179
        %s3191 = scalar_lea.vmem [#allocation1], 16
        %3192 = vst [vmem:[%s3191] ss:$2 sm:$0xff] %v3180
        %v3193 = vld.sshfl [vmem:[#allocation1] sm:$0xff pattern:$0x75316420]
        %v3194 = vld.sshfl [vmem:[#allocation1 + $0x8] sm:$0xff pattern:$0x75316420]
        %v3195 = vld.sshfl [vmem:[#allocation1 + $0x10] sm:$0xff pattern:$0x75316420]
        %v3196 = vld.sshfl [vmem:[#allocation1 + $0x18] sm:$0xff pattern:$0x75316420]
        %3197 = vrot.lane.b32.xlu0 %v3193, 77
        %v3198 = vpop.permute.xlu0 %3197
        %3199 = vrot.lane.b32.xlu0 %v3194, 77
        %v3200 = vpop.permute.xlu0 %3199
        %3201 = vrot.lane.b32.xlu0 %v3195, 77
        %v3202 = vpop.permute.xlu0 %3201
        %3203 = vrot.lane.b32.xlu0 %v3196, 77
        %v3204 = vpop.permute.xlu0 %3203
        %vm3205 = vcmask 629760
        %v3206 = vsel %vm3205, %v3198, %v3200
        %v3207 = vsel %vm3205, %v3200, %v3202
        %v3208 = vsel %vm3205, %v3202, %v3204
        %v3212 = vmul.f32 %v3182, %v3206
        %v3213 = vmul.f32 %v3183, %v3207
        %v3214 = vmul.f32 %v3184, %v3208
        %v3215 = vadd.f32 %v3212, 0.0
        %v3216 = vadd.f32 %v3213, 0.0
        %v3217 = vadd.f32 %v3214, 0.0
        %v3218 = vsub.f32 %v3174, -2.0
        %v3219 = vand.u32 2147483647, %v3218
        %v3220 = vsub.f32 1.0, %v3219
        %v3221 = vmax.f32 %v3220, 0.0
        %v3222 = vld [vmem:[%s340] sm:$0xff]
        %v3223 = vld [vmem:[%s340 + $0x8] sm:$0xff]
        %v3225 = vperm.slane %v3221, 0
        %v3226 = vperm.slane %v3221, 1
        %v3227 = vperm.slane %v3221, 2
        %3233 = vst [vmem:[#allocation1] ss:$2 sm:$0xff] %v3222
        %s3234 = scalar_lea.vmem [#allocation1], 16
        %3235 = vst [vmem:[%s3234] ss:$2 sm:$0xff] %v3223
        %v3236 = vld.sshfl [vmem:[#allocation1] sm:$0xff pattern:$0x75316420]
        %v3237 = vld.sshfl [vmem:[#allocation1 + $0x8] sm:$0xff pattern:$0x75316420]
        %v3238 = vld.sshfl [vmem:[#allocation1 + $0x10] sm:$0xff pattern:$0x75316420]
        %v3239 = vld.sshfl [vmem:[#allocation1 + $0x18] sm:$0xff pattern:$0x75316420]
        %3240 = vrot.lane.b32.xlu0 %v3236, 53
        %v3241 = vpop.permute.xlu0 %3240
        %3242 = vrot.lane.b32.xlu0 %v3237, 53
        %v3243 = vpop.permute.xlu0 %3242
        %3244 = vrot.lane.b32.xlu0 %v3238, 53
        %v3245 = vpop.permute.xlu0 %3244
        %3246 = vrot.lane.b32.xlu0 %v3239, 53
        %v3247 = vpop.permute.xlu0 %3246
        %vm3248 = vcmask 433152
        %v3249 = vsel %vm3248, %v3241, %v3243
        %v3250 = vsel %vm3248, %v3243, %v3245
        %v3251 = vsel %vm3248, %v3245, %v3247
        %v3255 = vmul.f32 %v3225, %v3249
        %v3256 = vmul.f32 %v3226, %v3250
        %v3257 = vmul.f32 %v3227, %v3251
        %v3258 = vadd.f32 %v3215, %v3255
        %v3259 = vadd.f32 %v3216, %v3256
        %v3260 = vadd.f32 %v3217, %v3257
        %v3261 = vsub.f32 %v3174, -1.0
        %v3262 = vand.u32 2147483647, %v3261
        %v3263 = vsub.f32 1.0, %v3262
        %v3264 = vmax.f32 %v3263, 0.0
        %v3265 = vld [vmem:[%s340] sm:$0xff]
        %v3266 = vld [vmem:[%s340 + $0x8] sm:$0xff]
        %v3268 = vperm.slane %v3264, 0
        %v3269 = vperm.slane %v3264, 1
        %v3270 = vperm.slane %v3264, 2
        %3276 = vst [vmem:[#allocation1] ss:$2 sm:$0xff] %v3265
        %s3277 = scalar_lea.vmem [#allocation1], 16
        %3278 = vst [vmem:[%s3277] ss:$2 sm:$0xff] %v3266
        %v3279 = vld.sshfl [vmem:[#allocation1] sm:$0xff pattern:$0x75316420]
        %v3280 = vld.sshfl [vmem:[#allocation1 + $0x8] sm:$0xff pattern:$0x75316420]
        %v3281 = vld.sshfl [vmem:[#allocation1 + $0x10] sm:$0xff pattern:$0x75316420]
        %v3282 = vld.sshfl [vmem:[#allocation1 + $0x18] sm:$0xff pattern:$0x75316420]
        %3283 = vrot.lane.b32.xlu0 %v3279, 29
        %v3284 = vpop.permute.xlu0 %3283
        %3285 = vrot.lane.b32.xlu0 %v3280, 29
        %v3286 = vpop.permute.xlu0 %3285
        %3287 = vrot.lane.b32.xlu0 %v3281, 29
        %v3288 = vpop.permute.xlu0 %3287
        %3289 = vrot.lane.b32.xlu0 %v3282, 29
        %v3290 = vpop.permute.xlu0 %3289
        %vm3291 = vcmask 236544
        %v3292 = vsel %vm3291, %v3284, %v3286
        %v3293 = vsel %vm3291, %v3286, %v3288
        %v3294 = vsel %vm3291, %v3288, %v3290
        %v3298 = vmul.f32 %v3268, %v3292
        %v3299 = vmul.f32 %v3269, %v3293
        %v3300 = vmul.f32 %v3270, %v3294
        %v3301 = vadd.f32 %v3258, %v3298
        %v3302 = vadd.f32 %v3259, %v3299
        %v3303 = vadd.f32 %v3260, %v3300
        %v3304 = vand.u32 2147483647, %v3174
        %v3305 = vsub.f32 1.0, %v3304
        %v3306 = vmax.f32 %v3305, 0.0
        %v3307 = vld [vmem:[%s340] sm:$0xff]
        %v3308 = vld [vmem:[%s340 + $0x8] sm:$0xff]
        %v3310 = vperm.slane %v3306, 0
        %v3311 = vperm.slane %v3306, 1
        %v3312 = vperm.slane %v3306, 2
        %3318 = vst [vmem:[#allocation1] ss:$2 sm:$0xff] %v3307
        %s3319 = scalar_lea.vmem [#allocation1], 16
        %3320 = vst [vmem:[%s3319] ss:$2 sm:$0xff] %v3308
        %v3321 = vld.sshfl [vmem:[#allocation1] sm:$0xff pattern:$0x75316420]
        %v3322 = vld.sshfl [vmem:[#allocation1 + $0x8] sm:$0xff pattern:$0x75316420]
        %v3323 = vld.sshfl [vmem:[#allocation1 + $0x10] sm:$0xff pattern:$0x75316420]
        %v3324 = vld.sshfl [vmem:[#allocation1 + $0x18] sm:$0xff pattern:$0x75316420]
        %3325 = vrot.lane.b32.xlu0 %v3321, 5
        %v3326 = vpop.permute.xlu0 %3325
        %3327 = vrot.lane.b32.xlu0 %v3322, 5
        %v3328 = vpop.permute.xlu0 %3327
        %3329 = vrot.lane.b32.xlu0 %v3323, 5
        %v3330 = vpop.permute.xlu0 %3329
        %3331 = vrot.lane.b32.xlu0 %v3324, 5
        %v3332 = vpop.permute.xlu0 %3331
        %vm3333 = vcmask 39936
        %v3334 = vsel %vm3333, %v3326, %v3328
        %v3335 = vsel %vm3333, %v3328, %v3330
        %v3336 = vsel %vm3333, %v3330, %v3332
        %v3340 = vmul.f32 %v3310, %v3334
        %v3341 = vmul.f32 %v3311, %v3335
        %v3342 = vmul.f32 %v3312, %v3336
        %v3343 = vadd.f32 %v3301, %v3340
        %v3344 = vadd.f32 %v3302, %v3341
        %v3345 = vadd.f32 %v3303, %v3342
        %v3346 = vsub.f32 %v3174, 1.0
        %v3347 = vand.u32 2147483647, %v3346
        %v3348 = vsub.f32 1.0, %v3347
        %v3349 = vmax.f32 %v3348, 0.0
        %v3350 = vld [vmem:[%s340 + $0x4] sm:$0xff]
        %v3351 = vld [vmem:[%s340 + $0xc] sm:$0xff]
        %v3353 = vperm.slane %v3349, 0
        %v3354 = vperm.slane %v3349, 1
        %v3355 = vperm.slane %v3349, 2
        %3361 = vst [vmem:[#allocation1] ss:$2 sm:$0xff] %v3350
        %s3362 = scalar_lea.vmem [#allocation1], 16
        %3363 = vst [vmem:[%s3362] ss:$2 sm:$0xff] %v3351
        %v3364 = vld.sshfl [vmem:[#allocation1] sm:$0xff pattern:$0x75316420]
        %v3365 = vld.sshfl [vmem:[#allocation1 + $0x8] sm:$0xff pattern:$0x75316420]
        %v3366 = vld.sshfl [vmem:[#allocation1 + $0x10] sm:$0xff pattern:$0x75316420]
        %v3367 = vld.sshfl [vmem:[#allocation1 + $0x18] sm:$0xff pattern:$0x75316420]
        %3368 = vrot.lane.b32.xlu0 %v3364, 109
        %v3369 = vpop.permute.xlu0 %3368
        %3370 = vrot.lane.b32.xlu0 %v3365, 109
        %v3371 = vpop.permute.xlu0 %3370
        %3372 = vrot.lane.b32.xlu0 %v3366, 109
        %v3373 = vpop.permute.xlu0 %3372
        %3374 = vrot.lane.b32.xlu0 %v3367, 109
        %v3375 = vpop.permute.xlu0 %3374
        %vm3376 = vcmask 891904
        %v3377 = vsel %vm3376, %v3369, %v3371
        %v3378 = vsel %vm3376, %v3371, %v3373
        %v3379 = vsel %vm3376, %v3373, %v3375
        %v3383 = vmul.f32 %v3353, %v3377
        %v3384 = vmul.f32 %v3354, %v3378
        %v3385 = vmul.f32 %v3355, %v3379
        %v3386 = vadd.f32 %v3343, %v3383
        %v3387 = vadd.f32 %v3344, %v3384
        %v3388 = vadd.f32 %v3345, %v3385
        %v3389 = vsub.f32 %v3174, 2.0
        %v3390 = vand.u32 2147483647, %v3389
        %v3391 = vsub.f32 1.0, %v3390
        %v3392 = vmax.f32 %v3391, 0.0
        %v3393 = vld [vmem:[%s340 + $0x4] sm:$0xff]
        %v3394 = vld [vmem:[%s340 + $0xc] sm:$0xff]
        %v3396 = vperm.slane %v3392, 0
        %v3397 = vperm.slane %v3392, 1
        %v3398 = vperm.slane %v3392, 2
        %3404 = vst [vmem:[#allocation1] ss:$2 sm:$0xff] %v3393
        %s3405 = scalar_lea.vmem [#allocation1], 16
        %3406 = vst [vmem:[%s3405] ss:$2 sm:$0xff] %v3394
        %v3407 = vld.sshfl [vmem:[#allocation1] sm:$0xff pattern:$0x75316420]
        %v3408 = vld.sshfl [vmem:[#allocation1 + $0x8] sm:$0xff pattern:$0x75316420]
        %v3409 = vld.sshfl [vmem:[#allocation1 + $0x10] sm:$0xff pattern:$0x75316420]
        %v3410 = vld.sshfl [vmem:[#allocation1 + $0x18] sm:$0xff pattern:$0x75316420]
        %3411 = vrot.lane.b32.xlu0 %v3407, 85
        %v3412 = vpop.permute.xlu0 %3411
        %3413 = vrot.lane.b32.xlu0 %v3408, 85
        %v3414 = vpop.permute.xlu0 %3413
        %3415 = vrot.lane.b32.xlu0 %v3409, 85
        %v3416 = vpop.permute.xlu0 %3415
        %3417 = vrot.lane.b32.xlu0 %v3410, 85
        %v3418 = vpop.permute.xlu0 %3417
        %vm3419 = vcmask 695296
        %v3420 = vsel %vm3419, %v3412, %v3414
        %v3421 = vsel %vm3419, %v3414, %v3416
        %v3422 = vsel %vm3419, %v3416, %v3418
        %v3426 = vmul.f32 %v3396, %v3420
        %v3427 = vmul.f32 %v3397, %v3421
        %v3428 = vmul.f32 %v3398, %v3422
        %v3429 = vadd.f32 %v3386, %v3426
        %v3430 = vadd.f32 %v3387, %v3427
        %v3431 = vadd.f32 %v3388, %v3428
        %v3432 = vsub.f32 %v3174, 3.0
        %v3433 = vand.u32 2147483647, %v3432
        %v3434 = vsub.f32 1.0, %v3433
        %v3435 = vmax.f32 %v3434, 0.0
        %v3436 = vld [vmem:[%s340 + $0x4] sm:$0xff]
        %v3437 = vld [vmem:[%s340 + $0xc] sm:$0xff]
        %v3439 = vperm.slane %v3435, 0
        %v3440 = vperm.slane %v3435, 1
        %v3441 = vperm.slane %v3435, 2
        %3447 = vst [vmem:[#allocation1] ss:$2 sm:$0xff] %v3436
        %s3448 = scalar_lea.vmem [#allocation1], 16
        %3449 = vst [vmem:[%s3448] ss:$2 sm:$0xff] %v3437
        %v3450 = vld.sshfl [vmem:[#allocation1] sm:$0xff pattern:$0x75316420]
        %v3451 = vld.sshfl [vmem:[#allocation1 + $0x8] sm:$0xff pattern:$0x75316420]
        %v3452 = vld.sshfl [vmem:[#allocation1 + $0x10] sm:$0xff pattern:$0x75316420]
        %v3453 = vld.sshfl [vmem:[#allocation1 + $0x18] sm:$0xff pattern:$0x75316420]
        %3454 = vrot.lane.b32.xlu0 %v3450, 61
        %v3455 = vpop.permute.xlu0 %3454
        %3456 = vrot.lane.b32.xlu0 %v3451, 61
        %v3457 = vpop.permute.xlu0 %3456
        %3458 = vrot.lane.b32.xlu0 %v3452, 61
        %v3459 = vpop.permute.xlu0 %3458
        %3460 = vrot.lane.b32.xlu0 %v3453, 61
        %v3461 = vpop.permute.xlu0 %3460
        %vm3462 = vcmask 498688
        %v3463 = vsel %vm3462, %v3455, %v3457
        %v3464 = vsel %vm3462, %v3457, %v3459
        %v3465 = vsel %vm3462, %v3459, %v3461
        %v3469 = vmul.f32 %v3439, %v3463
        %v3470 = vmul.f32 %v3440, %v3464
        %v3471 = vmul.f32 %v3441, %v3465
        %v3472 = vadd.f32 %v3429, %v3469
        %v3473 = vadd.f32 %v3430, %v3470
        %v3474 = vadd.f32 %v3431, %v3471
        %v3475 = vsub.f32 %v3174, 4.0
        %v3476 = vand.u32 2147483647, %v3475
        %v3477 = vsub.f32 1.0, %v3476
        %v3478 = vmax.f32 %v3477, 0.0
        %v3479 = vld [vmem:[%s340 + $0x4] sm:$0xff]
        %v3480 = vld [vmem:[%s340 + $0xc] sm:$0xff]
        %v3482 = vperm.slane %v3478, 0
        %v3483 = vperm.slane %v3478, 1
        %v3484 = vperm.slane %v3478, 2
        %3490 = vst [vmem:[#allocation1] ss:$2 sm:$0xff] %v3479
        %s3491 = scalar_lea.vmem [#allocation1], 16
        %3492 = vst [vmem:[%s3491] ss:$2 sm:$0xff] %v3480
        %v3493 = vld.sshfl [vmem:[#allocation1] sm:$0xff pattern:$0x75316420]
        %v3494 = vld.sshfl [vmem:[#allocation1 + $0x8] sm:$0xff pattern:$0x75316420]
        %v3495 = vld.sshfl [vmem:[#allocation1 + $0x10] sm:$0xff pattern:$0x75316420]
        %v3496 = vld.sshfl [vmem:[#allocation1 + $0x18] sm:$0xff pattern:$0x75316420]
        %3497 = vrot.lane.b32.xlu0 %v3493, 37
        %v3498 = vpop.permute.xlu0 %3497
        %3499 = vrot.lane.b32.xlu0 %v3494, 37
        %v3500 = vpop.permute.xlu0 %3499
        %3501 = vrot.lane.b32.xlu0 %v3495, 37
        %v3502 = vpop.permute.xlu0 %3501
        %3503 = vrot.lane.b32.xlu0 %v3496, 37
        %v3504 = vpop.permute.xlu0 %3503
        %vm3505 = vcmask 302080
        %v3506 = vsel %vm3505, %v3498, %v3500
        %v3507 = vsel %vm3505, %v3500, %v3502
        %v3508 = vsel %vm3505, %v3502, %v3504
        %v3512 = vmul.f32 %v3482, %v3506
        %v3513 = vmul.f32 %v3483, %v3507
        %v3514 = vmul.f32 %v3484, %v3508
        %v3515 = vadd.f32 %v3472, %v3512
        %v3516 = vadd.f32 %v3473, %v3513
        %v3517 = vadd.f32 %v3474, %v3514
        %v3521 = vrot.slane %v3515, 4
        %v3522 = vrot.slane %v3516, 4
        %v3523 = vrot.slane %v3517, 4
        %3527 = vst [vmem:[#allocation3 + $0x48] sm:$0xf0] %v3521
        %3528 = vst [vmem:[#allocation3 + $0x50] sm:$0xf0] %v3522
        %3529 = vst [vmem:[#allocation3 + $0x58] sm:$0xf0] %v3523
        %v3530 = vld [vmem:[%s1372] ss:$8 sm:$0x7]
        %v3531 = vsub.f32 %v3530, -4.0
        %v3532 = vand.u32 2147483647, %v3531
        %v3533 = vsub.f32 1.0, %v3532
        %v3534 = vmax.f32 %v3533, 0.0
        %v3535 = vld [vmem:[%s340] sm:$0xff]
        %v3536 = vld [vmem:[%s340 + $0x8] sm:$0xff]
        %v3538 = vperm.slane %v3534, 0
        %v3539 = vperm.slane %v3534, 1
        %v3540 = vperm.slane %v3534, 2
        %3546 = vst [vmem:[#allocation1] ss:$2 sm:$0xff] %v3535
        %s3547 = scalar_lea.vmem [#allocation1], 16
        %3548 = vst [vmem:[%s3547] ss:$2 sm:$0xff] %v3536
        %v3549 = vld.sshfl [vmem:[#allocation1] sm:$0xff pattern:$0x75316420]
        %v3550 = vld.sshfl [vmem:[#allocation1 + $0x8] sm:$0xff pattern:$0x75316420]
        %v3551 = vld.sshfl [vmem:[#allocation1 + $0x10] sm:$0xff pattern:$0x75316420]
        %v3552 = vld.sshfl [vmem:[#allocation1 + $0x18] sm:$0xff pattern:$0x75316420]
        %3553 = vrot.lane.b32.xlu0 %v3549, 100
        %v3554 = vpop.permute.xlu0 %3553
        %3555 = vrot.lane.b32.xlu0 %v3550, 100
        %v3556 = vpop.permute.xlu0 %3555
        %3557 = vrot.lane.b32.xlu0 %v3551, 100
        %v3558 = vpop.permute.xlu0 %3557
        %3559 = vrot.lane.b32.xlu0 %v3552, 100
        %v3560 = vpop.permute.xlu0 %3559
        %vm3561 = vcmask 818176
        %v3562 = vsel %vm3561, %v3554, %v3556
        %v3563 = vsel %vm3561, %v3556, %v3558
        %v3564 = vsel %vm3561, %v3558, %v3560
        %v3568 = vmul.f32 %v3538, %v3562
        %v3569 = vmul.f32 %v3539, %v3563
        %v3570 = vmul.f32 %v3540, %v3564
        %v3571 = vadd.f32 %v3568, 0.0
        %v3572 = vadd.f32 %v3569, 0.0
        %v3573 = vadd.f32 %v3570, 0.0
        %v3574 = vsub.f32 %v3530, -3.0
        %v3575 = vand.u32 2147483647, %v3574
        %v3576 = vsub.f32 1.0, %v3575
        %v3577 = vmax.f32 %v3576, 0.0
        %v3578 = vld [vmem:[%s340] sm:$0xff]
        %v3579 = vld [vmem:[%s340 + $0x8] sm:$0xff]
        %v3581 = vperm.slane %v3577, 0
        %v3582 = vperm.slane %v3577, 1
        %v3583 = vperm.slane %v3577, 2
        %3589 = vst [vmem:[#allocation1] ss:$2 sm:$0xff] %v3578
        %s3590 = scalar_lea.vmem [#allocation1], 16
        %3591 = vst [vmem:[%s3590] ss:$2 sm:$0xff] %v3579
        %v3592 = vld.sshfl [vmem:[#allocation1] sm:$0xff pattern:$0x75316420]
        %v3593 = vld.sshfl [vmem:[#allocation1 + $0x8] sm:$0xff pattern:$0x75316420]
        %v3594 = vld.sshfl [vmem:[#allocation1 + $0x10] sm:$0xff pattern:$0x75316420]
        %v3595 = vld.sshfl [vmem:[#allocation1 + $0x18] sm:$0xff pattern:$0x75316420]
        %3596 = vrot.lane.b32.xlu0 %v3592, 76
        %v3597 = vpop.permute.xlu0 %3596
        %3598 = vrot.lane.b32.xlu0 %v3593, 76
        %v3599 = vpop.permute.xlu0 %3598
        %3600 = vrot.lane.b32.xlu0 %v3594, 76
        %v3601 = vpop.permute.xlu0 %3600
        %3602 = vrot.lane.b32.xlu0 %v3595, 76
        %v3603 = vpop.permute.xlu0 %3602
        %vm3604 = vcmask 621568
        %v3605 = vsel %vm3604, %v3597, %v3599
        %v3606 = vsel %vm3604, %v3599, %v3601
        %v3607 = vsel %vm3604, %v3601, %v3603
        %v3611 = vmul.f32 %v3581, %v3605
        %v3612 = vmul.f32 %v3582, %v3606
        %v3613 = vmul.f32 %v3583, %v3607
        %v3614 = vadd.f32 %v3571, %v3611
        %v3615 = vadd.f32 %v3572, %v3612
        %v3616 = vadd.f32 %v3573, %v3613
        %v3617 = vsub.f32 %v3530, -2.0
        %v3618 = vand.u32 2147483647, %v3617
        %v3619 = vsub.f32 1.0, %v3618
        %v3620 = vmax.f32 %v3619, 0.0
        %v3621 = vld [vmem:[%s340] sm:$0xff]
        %v3622 = vld [vmem:[%s340 + $0x8] sm:$0xff]
        %v3624 = vperm.slane %v3620, 0
        %v3625 = vperm.slane %v3620, 1
        %v3626 = vperm.slane %v3620, 2
        %3632 = vst [vmem:[#allocation1] ss:$2 sm:$0xff] %v3621
        %s3633 = scalar_lea.vmem [#allocation1], 16
        %3634 = vst [vmem:[%s3633] ss:$2 sm:$0xff] %v3622
        %v3635 = vld.sshfl [vmem:[#allocation1] sm:$0xff pattern:$0x75316420]
        %v3636 = vld.sshfl [vmem:[#allocation1 + $0x8] sm:$0xff pattern:$0x75316420]
        %v3637 = vld.sshfl [vmem:[#allocation1 + $0x10] sm:$0xff pattern:$0x75316420]
        %v3638 = vld.sshfl [vmem:[#allocation1 + $0x18] sm:$0xff pattern:$0x75316420]
        %3639 = vrot.lane.b32.xlu0 %v3635, 52
        %v3640 = vpop.permute.xlu0 %3639
        %3641 = vrot.lane.b32.xlu0 %v3636, 52
        %v3642 = vpop.permute.xlu0 %3641
        %3643 = vrot.lane.b32.xlu0 %v3637, 52
        %v3644 = vpop.permute.xlu0 %3643
        %3645 = vrot.lane.b32.xlu0 %v3638, 52
        %v3646 = vpop.permute.xlu0 %3645
        %vm3647 = vcmask 424960
        %v3648 = vsel %vm3647, %v3640, %v3642
        %v3649 = vsel %vm3647, %v3642, %v3644
        %v3650 = vsel %vm3647, %v3644, %v3646
        %v3654 = vmul.f32 %v3624, %v3648
        %v3655 = vmul.f32 %v3625, %v3649
        %v3656 = vmul.f32 %v3626, %v3650
        %v3657 = vadd.f32 %v3614, %v3654
        %v3658 = vadd.f32 %v3615, %v3655
        %v3659 = vadd.f32 %v3616, %v3656
        %v3660 = vsub.f32 %v3530, -1.0
        %v3661 = vand.u32 2147483647, %v3660
        %v3662 = vsub.f32 1.0, %v3661
        %v3663 = vmax.f32 %v3662, 0.0
        %v3664 = vld [vmem:[%s340] sm:$0xff]
        %v3665 = vld [vmem:[%s340 + $0x8] sm:$0xff]
        %v3667 = vperm.slane %v3663, 0
        %v3668 = vperm.slane %v3663, 1
        %v3669 = vperm.slane %v3663, 2
        %3675 = vst [vmem:[#allocation1] ss:$2 sm:$0xff] %v3664
        %s3676 = scalar_lea.vmem [#allocation1], 16
        %3677 = vst [vmem:[%s3676] ss:$2 sm:$0xff] %v3665
        %v3678 = vld.sshfl [vmem:[#allocation1] sm:$0xff pattern:$0x75316420]
        %v3679 = vld.sshfl [vmem:[#allocation1 + $0x8] sm:$0xff pattern:$0x75316420]
        %v3680 = vld.sshfl [vmem:[#allocation1 + $0x10] sm:$0xff pattern:$0x75316420]
        %v3681 = vld.sshfl [vmem:[#allocation1 + $0x18] sm:$0xff pattern:$0x75316420]
        %3682 = vrot.lane.b32.xlu0 %v3678, 28
        %v3683 = vpop.permute.xlu0 %3682
        %3684 = vrot.lane.b32.xlu0 %v3679, 28
        %v3685 = vpop.permute.xlu0 %3684
        %3686 = vrot.lane.b32.xlu0 %v3680, 28
        %v3687 = vpop.permute.xlu0 %3686
        %3688 = vrot.lane.b32.xlu0 %v3681, 28
        %v3689 = vpop.permute.xlu0 %3688
        %vm3690 = vcmask 228352
        %v3691 = vsel %vm3690, %v3683, %v3685
        %v3692 = vsel %vm3690, %v3685, %v3687
        %v3693 = vsel %vm3690, %v3687, %v3689
        %v3697 = vmul.f32 %v3667, %v3691
        %v3698 = vmul.f32 %v3668, %v3692
        %v3699 = vmul.f32 %v3669, %v3693
        %v3700 = vadd.f32 %v3657, %v3697
        %v3701 = vadd.f32 %v3658, %v3698
        %v3702 = vadd.f32 %v3659, %v3699
        %v3703 = vand.u32 2147483647, %v3530
        %v3704 = vsub.f32 1.0, %v3703
        %v3705 = vmax.f32 %v3704, 0.0
        %v3706 = vld [vmem:[%s340] sm:$0xff]
        %v3707 = vld [vmem:[%s340 + $0x8] sm:$0xff]
        %v3709 = vperm.slane %v3705, 0
        %v3710 = vperm.slane %v3705, 1
        %v3711 = vperm.slane %v3705, 2
        %3717 = vst [vmem:[#allocation1] ss:$2 sm:$0xff] %v3706
        %s3718 = scalar_lea.vmem [#allocation1], 16
        %3719 = vst [vmem:[%s3718] ss:$2 sm:$0xff] %v3707
        %v3720 = vld.sshfl [vmem:[#allocation1] sm:$0xff pattern:$0x75316420]
        %v3721 = vld.sshfl [vmem:[#allocation1 + $0x8] sm:$0xff pattern:$0x75316420]
        %v3722 = vld.sshfl [vmem:[#allocation1 + $0x10] sm:$0xff pattern:$0x75316420]
        %v3723 = vld.sshfl [vmem:[#allocation1 + $0x18] sm:$0xff pattern:$0x75316420]
        %3724 = vrot.lane.b32.xlu0 %v3720, 4
        %v3725 = vpop.permute.xlu0 %3724
        %3726 = vrot.lane.b32.xlu0 %v3721, 4
        %v3727 = vpop.permute.xlu0 %3726
        %3728 = vrot.lane.b32.xlu0 %v3722, 4
        %v3729 = vpop.permute.xlu0 %3728
        %3730 = vrot.lane.b32.xlu0 %v3723, 4
        %v3731 = vpop.permute.xlu0 %3730
        %vm3732 = vcmask 31744
        %v3733 = vsel %vm3732, %v3725, %v3727
        %v3734 = vsel %vm3732, %v3727, %v3729
        %v3735 = vsel %vm3732, %v3729, %v3731
        %v3739 = vmul.f32 %v3709, %v3733
        %v3740 = vmul.f32 %v3710, %v3734
        %v3741 = vmul.f32 %v3711, %v3735
        %v3742 = vadd.f32 %v3700, %v3739
        %v3743 = vadd.f32 %v3701, %v3740
        %v3744 = vadd.f32 %v3702, %v3741
        %v3745 = vsub.f32 %v3530, 1.0
        %v3746 = vand.u32 2147483647, %v3745
        %v3747 = vsub.f32 1.0, %v3746
        %v3748 = vmax.f32 %v3747, 0.0
        %v3749 = vld [vmem:[%s340 + $0x4] sm:$0xff]
        %v3750 = vld [vmem:[%s340 + $0xc] sm:$0xff]
        %v3752 = vperm.slane %v3748, 0
        %v3753 = vperm.slane %v3748, 1
        %v3754 = vperm.slane %v3748, 2
        %3760 = vst [vmem:[#allocation1] ss:$2 sm:$0xff] %v3749
        %s3761 = scalar_lea.vmem [#allocation1], 16
        %3762 = vst [vmem:[%s3761] ss:$2 sm:$0xff] %v3750
        %v3763 = vld.sshfl [vmem:[#allocation1] sm:$0xff pattern:$0x75316420]
        %v3764 = vld.sshfl [vmem:[#allocation1 + $0x8] sm:$0xff pattern:$0x75316420]
        %v3765 = vld.sshfl [vmem:[#allocation1 + $0x10] sm:$0xff pattern:$0x75316420]
        %v3766 = vld.sshfl [vmem:[#allocation1 + $0x18] sm:$0xff pattern:$0x75316420]
        %3767 = vrot.lane.b32.xlu0 %v3763, 108
        %v3768 = vpop.permute.xlu0 %3767
        %3769 = vrot.lane.b32.xlu0 %v3764, 108
        %v3770 = vpop.permute.xlu0 %3769
        %3771 = vrot.lane.b32.xlu0 %v3765, 108
        %v3772 = vpop.permute.xlu0 %3771
        %3773 = vrot.lane.b32.xlu0 %v3766, 108
        %v3774 = vpop.permute.xlu0 %3773
        %v3775 = vsel %vm1505, %v3768, %v3770
        %v3776 = vsel %vm1505, %v3770, %v3772
        %v3777 = vsel %vm1505, %v3772, %v3774
        %v3781 = vmul.f32 %v3752, %v3775
        %v3782 = vmul.f32 %v3753, %v3776
        %v3783 = vmul.f32 %v3754, %v3777
        %v3784 = vadd.f32 %v3742, %v3781
        %v3785 = vadd.f32 %v3743, %v3782
        %v3786 = vadd.f32 %v3744, %v3783
        %v3787 = vsub.f32 %v3530, 2.0
        %v3788 = vand.u32 2147483647, %v3787
        %v3789 = vsub.f32 1.0, %v3788
        %v3790 = vmax.f32 %v3789, 0.0
        %v3791 = vld [vmem:[%s340 + $0x4] sm:$0xff]
        %v3792 = vld [vmem:[%s340 + $0xc] sm:$0xff]
        %v3794 = vperm.slane %v3790, 0
        %v3795 = vperm.slane %v3790, 1
        %v3796 = vperm.slane %v3790, 2
        %3802 = vst [vmem:[#allocation1] ss:$2 sm:$0xff] %v3791
        %s3803 = scalar_lea.vmem [#allocation1], 16
        %3804 = vst [vmem:[%s3803] ss:$2 sm:$0xff] %v3792
        %v3805 = vld.sshfl [vmem:[#allocation1] sm:$0xff pattern:$0x75316420]
        %v3806 = vld.sshfl [vmem:[#allocation1 + $0x8] sm:$0xff pattern:$0x75316420]
        %v3807 = vld.sshfl [vmem:[#allocation1 + $0x10] sm:$0xff pattern:$0x75316420]
        %v3808 = vld.sshfl [vmem:[#allocation1 + $0x18] sm:$0xff pattern:$0x75316420]
        %3809 = vrot.lane.b32.xlu0 %v3805, 84
        %v3810 = vpop.permute.xlu0 %3809
        %3811 = vrot.lane.b32.xlu0 %v3806, 84
        %v3812 = vpop.permute.xlu0 %3811
        %3813 = vrot.lane.b32.xlu0 %v3807, 84
        %v3814 = vpop.permute.xlu0 %3813
        %3815 = vrot.lane.b32.xlu0 %v3808, 84
        %v3816 = vpop.permute.xlu0 %3815
        %v3817 = vsel %vm1548, %v3810, %v3812
        %v3818 = vsel %vm1548, %v3812, %v3814
        %v3819 = vsel %vm1548, %v3814, %v3816
        %v3823 = vmul.f32 %v3794, %v3817
        %v3824 = vmul.f32 %v3795, %v3818
        %v3825 = vmul.f32 %v3796, %v3819
        %v3826 = vadd.f32 %v3784, %v3823
        %v3827 = vadd.f32 %v3785, %v3824
        %v3828 = vadd.f32 %v3786, %v3825
        %v3829 = vsub.f32 %v3530, 3.0
        %v3830 = vand.u32 2147483647, %v3829
        %v3831 = vsub.f32 1.0, %v3830
        %v3832 = vmax.f32 %v3831, 0.0
        %v3833 = vld [vmem:[%s340 + $0x4] sm:$0xff]
        %v3834 = vld [vmem:[%s340 + $0xc] sm:$0xff]
        %v3836 = vperm.slane %v3832, 0
        %v3837 = vperm.slane %v3832, 1
        %v3838 = vperm.slane %v3832, 2
        %3844 = vst [vmem:[#allocation1] ss:$2 sm:$0xff] %v3833
        %s3845 = scalar_lea.vmem [#allocation1], 16
        %3846 = vst [vmem:[%s3845] ss:$2 sm:$0xff] %v3834
        %v3847 = vld.sshfl [vmem:[#allocation1] sm:$0xff pattern:$0x75316420]
        %v3848 = vld.sshfl [vmem:[#allocation1 + $0x8] sm:$0xff pattern:$0x75316420]
        %v3849 = vld.sshfl [vmem:[#allocation1 + $0x10] sm:$0xff pattern:$0x75316420]
        %v3850 = vld.sshfl [vmem:[#allocation1 + $0x18] sm:$0xff pattern:$0x75316420]
        %3851 = vrot.lane.b32.xlu0 %v3847, 60
        %v3852 = vpop.permute.xlu0 %3851
        %3853 = vrot.lane.b32.xlu0 %v3848, 60
        %v3854 = vpop.permute.xlu0 %3853
        %3855 = vrot.lane.b32.xlu0 %v3849, 60
        %v3856 = vpop.permute.xlu0 %3855
        %3857 = vrot.lane.b32.xlu0 %v3850, 60
        %v3858 = vpop.permute.xlu0 %3857
        %v3859 = vsel %vm1591, %v3852, %v3854
        %v3860 = vsel %vm1591, %v3854, %v3856
        %v3861 = vsel %vm1591, %v3856, %v3858
        %v3865 = vmul.f32 %v3836, %v3859
        %v3866 = vmul.f32 %v3837, %v3860
        %v3867 = vmul.f32 %v3838, %v3861
        %v3868 = vadd.f32 %v3826, %v3865
        %v3869 = vadd.f32 %v3827, %v3866
        %v3870 = vadd.f32 %v3828, %v3867
        %v3871 = vsub.f32 %v3530, 4.0
        %v3872 = vand.u32 2147483647, %v3871
        %v3873 = vsub.f32 1.0, %v3872
        %v3874 = vmax.f32 %v3873, 0.0
        %v3875 = vld [vmem:[%s340 + $0x4] sm:$0xff]
        %v3876 = vld [vmem:[%s340 + $0xc] sm:$0xff]
        %v3878 = vperm.slane %v3874, 0
        %v3879 = vperm.slane %v3874, 1
        %v3880 = vperm.slane %v3874, 2
        %3886 = vst [vmem:[#allocation1] ss:$2 sm:$0xff] %v3875
        %s3887 = scalar_lea.vmem [#allocation1], 16
        %3888 = vst [vmem:[%s3887] ss:$2 sm:$0xff] %v3876
        %v3889 = vld.sshfl [vmem:[#allocation1] sm:$0xff pattern:$0x75316420]
        %v3890 = vld.sshfl [vmem:[#allocation1 + $0x8] sm:$0xff pattern:$0x75316420]
        %v3891 = vld.sshfl [vmem:[#allocation1 + $0x10] sm:$0xff pattern:$0x75316420]
        %v3892 = vld.sshfl [vmem:[#allocation1 + $0x18] sm:$0xff pattern:$0x75316420]
        %3893 = vrot.lane.b32.xlu0 %v3889, 36
        %v3894 = vpop.permute.xlu0 %3893
        %3895 = vrot.lane.b32.xlu0 %v3890, 36
        %v3896 = vpop.permute.xlu0 %3895
        %3897 = vrot.lane.b32.xlu0 %v3891, 36
        %v3898 = vpop.permute.xlu0 %3897
        %3899 = vrot.lane.b32.xlu0 %v3892, 36
        %v3900 = vpop.permute.xlu0 %3899
        %v3901 = vsel %vm784, %v3894, %v3896
        %v3902 = vsel %vm784, %v3896, %v3898
        %v3903 = vsel %vm784, %v3898, %v3900
        %v3907 = vmul.f32 %v3878, %v3901
        %v3908 = vmul.f32 %v3879, %v3902
        %v3909 = vmul.f32 %v3880, %v3903
        %v3910 = vadd.f32 %v3868, %v3907
        %v3911 = vadd.f32 %v3869, %v3908
        %v3912 = vadd.f32 %v3870, %v3909
        %v3913 = vsub.f32 %v3530, 5.0
        %v3914 = vand.u32 2147483647, %v3913
        %v3915 = vsub.f32 1.0, %v3914
        %v3916 = vmax.f32 %v3915, 0.0
        %v3917 = vld [vmem:[%s340 + $0x4] sm:$0xff]
        %v3918 = vld [vmem:[%s340 + $0xc] sm:$0xff]
        %v3920 = vperm.slane %v3916, 0
        %v3921 = vperm.slane %v3916, 1
        %v3922 = vperm.slane %v3916, 2
        %3928 = vst [vmem:[#allocation1] ss:$2 sm:$0xff] %v3917
        %s3929 = scalar_lea.vmem [#allocation1], 16
        %3930 = vst [vmem:[%s3929] ss:$2 sm:$0xff] %v3918
        %v3931 = vld.sshfl [vmem:[#allocation1] sm:$0xff pattern:$0x75316420]
        %v3932 = vld.sshfl [vmem:[#allocation1 + $0x8] sm:$0xff pattern:$0x75316420]
        %v3933 = vld.sshfl [vmem:[#allocation1 + $0x10] sm:$0xff pattern:$0x75316420]
        %v3934 = vld.sshfl [vmem:[#allocation1 + $0x18] sm:$0xff pattern:$0x75316420]
        %3935 = vrot.lane.b32.xlu0 %v3931, 12
        %v3936 = vpop.permute.xlu0 %3935
        %3937 = vrot.lane.b32.xlu0 %v3932, 12
        %v3938 = vpop.permute.xlu0 %3937
        %3939 = vrot.lane.b32.xlu0 %v3933, 12
        %v3940 = vpop.permute.xlu0 %3939
        %3941 = vrot.lane.b32.xlu0 %v3934, 12
        %v3942 = vpop.permute.xlu0 %3941
        %v3943 = vsel %vm1675, %v3936, %v3938
        %v3944 = vsel %vm1675, %v3938, %v3940
        %v3945 = vsel %vm1675, %v3940, %v3942
        %v3949 = vmul.f32 %v3920, %v3943
        %v3950 = vmul.f32 %v3921, %v3944
        %v3951 = vmul.f32 %v3922, %v3945
        %v3952 = vadd.f32 %v3910, %v3949
        %v3953 = vadd.f32 %v3911, %v3950
        %v3954 = vadd.f32 %v3912, %v3951
        %3955 = vst [vmem:[#allocation3 + $0x60] sm:$0xf] %v3952
        %3956 = vst [vmem:[#allocation3 + $0x68] sm:$0xf] %v3953
        %3957 = vst [vmem:[#allocation3 + $0x70] sm:$0xf] %v3954
        %v3958 = vld [vmem:[#allocation3] sm:$0xff]
        %v3959 = vld [vmem:[#allocation3 + $0x8] sm:$0xff]
        %v3960 = vld [vmem:[#allocation3 + $0x10] sm:$0xff]
        %v3961 = vld [vmem:[#allocation3 + $0x18] sm:$0xff]
        %v3962 = vld [vmem:[#allocation3 + $0x20] sm:$0xff]
        %v3963 = vld [vmem:[#allocation3 + $0x28] sm:$0xff]
        %v3964 = vld [vmem:[#allocation3 + $0x30] sm:$0xff]
        %v3965 = vld [vmem:[#allocation3 + $0x38] sm:$0xff]
        %v3966 = vld [vmem:[#allocation3 + $0x40] sm:$0xff]
        %v3967 = vld [vmem:[#allocation3 + $0x48] sm:$0xff]
        %v3968 = vld [vmem:[#allocation3 + $0x50] sm:$0xff]
        %v3969 = vld [vmem:[#allocation3 + $0x58] sm:$0xff]
        %v3970 = vld [vmem:[#allocation3 + $0x60] sm:$0xf]
        %v3971 = vld [vmem:[#allocation3 + $0x68] sm:$0xf]
        %v3972 = vld [vmem:[#allocation3 + $0x70] sm:$0xf]
        %3974 = vset.pattern.permute.xlu0 0
        %3975 = vperm.xlu0 %3974, %v394
        %v3976 = vpop.permute.xlu0 %3975
        %v3979 = vsel %vm784, %v393, 0
        %v3982 = vsel %vm404, %v3970, 0
        %v3985 = vsel %vm404, %v3971, 0
        %v3988 = vsel %vm404, %v3972, 0
        %3990 = vmatpush.msra.mxu0 0.0
        %3991 = vmatpush.msra.mxu0 0.0
        %3992 = vmatpush.msra.mxu0 0.0
        %3993 = vmatpush.msra.mxu0 0.0
        %3994 = vmatpush.msra.mxu0 0.0
        %3995 = vmatpush.msra.mxu0 0.0
        %3996 = vmatpush.msra.mxu0 0.0
        %3997 = vmatpush.msra.mxu0 0.0
        %3998 = vmatpush.msra.mxu0 0.0
        %3999 = vmatpush.msra.mxu0 0.0
        %4000 = vmatpush.msra.mxu0 0.0
        %4001 = vmatpush.msra.mxu0 %v3982
        %4002 = vmatpush.msra.mxu0 %v3967
        %4003 = vmatpush.msra.mxu0 %v3964
        %4004 = vmatpush.msra.mxu0 %v3961
        %4005 = vmatpush.msra.mxu0 %v3958
        %4006 = vmatmul.f32.gmra.mxu0 %v3979
        %v4007 = vpop.f32.mrf.mxu0
        %v4008 = vadd.f32 %v3976, %v4007
        %4009 = vdwg.mxu0
        %4010 = vmatpush.msra.mxu0 0.0
        %4011 = vmatpush.msra.mxu0 0.0
        %4012 = vmatpush.msra.mxu0 0.0
        %4013 = vmatpush.msra.mxu0 0.0
        %4014 = vmatpush.msra.mxu0 0.0
        %4015 = vmatpush.msra.mxu0 0.0
        %4016 = vmatpush.msra.mxu0 0.0
        %4017 = vmatpush.msra.mxu0 0.0
        %4018 = vmatpush.msra.mxu0 0.0
        %4019 = vmatpush.msra.mxu0 0.0
        %4020 = vmatpush.msra.mxu0 0.0
        %4021 = vmatpush.msra.mxu0 %v3985
        %4022 = vmatpush.msra.mxu0 %v3968
        %4023 = vmatpush.msra.mxu0 %v3965
        %4024 = vmatpush.msra.mxu0 %v3962
        %4025 = vmatpush.msra.mxu0 %v3959
        %4026 = vmatmul.f32.gmra.mxu0 %v3979
        %v4027 = vpop.f32.mrf.mxu0
        %v4028 = vadd.f32 %v3976, %v4027
        %4029 = vdwg.mxu0
        %4030 = vmatpush.msra.mxu0 0.0
        %4031 = vmatpush.msra.mxu0 0.0
        %4032 = vmatpush.msra.mxu0 0.0
        %4033 = vmatpush.msra.mxu0 0.0
        %4034 = vmatpush.msra.mxu0 0.0
        %4035 = vmatpush.msra.mxu0 0.0
        %4036 = vmatpush.msra.mxu0 0.0
        %4037 = vmatpush.msra.mxu0 0.0
        %4038 = vmatpush.msra.mxu0 0.0
        %4039 = vmatpush.msra.mxu0 0.0
        %4040 = vmatpush.msra.mxu0 0.0
        %4041 = vmatpush.msra.mxu0 %v3988
        %4042 = vmatpush.msra.mxu0 %v3969
        %4043 = vmatpush.msra.mxu0 %v3966
        %4044 = vmatpush.msra.mxu0 %v3963
        %4045 = vmatpush.msra.mxu0 %v3960
        %4046 = vmatmul.f32.gmra.mxu0 %v3979
        %v4047 = vpop.f32.mrf.mxu0
        %v4048 = vadd.f32 %v3976, %v4047
        %4049 = vdwg.mxu0
        %v4052 = vrot.slane %v4028, 4
        %v4053 = vsel %vm404, %v4008, %v4052
        %4055 = vst [vmem:[%s377] sm:$0xff] %v4053
        %4056 = vst [vmem:[%s377 + $0x8] sm:$0xf] %v4048
        %v4057 = vld [vmem:[%s377] sm:$0xff]
        %v4058 = vld [vmem:[%s377 + $0x8] sm:$0xf]
        %v4059 = vrot.slane %v880, 4
        %v4060 = vsel %vm404, %v879, %v4059
        %v4062 = vmul.f32 %v4057, %v4060
        %v4063 = vmul.f32 %v4058, %v881
        %4066 = vst [vmem:[#allocation1] ss:$2 sm:$0xff] %v4062
        %s4067 = scalar_lea.vmem [#allocation1], 16
        %4068 = vst [vmem:[%s4067] ss:$2 sm:$0xff] %v4063
        %v4069 = vld.sshfl [vmem:[#allocation1] sm:$0xff pattern:$0x75316420]
        %v4070 = vld.sshfl [vmem:[#allocation1 + $0x8] sm:$0xff pattern:$0x75316420]
        %v4071 = vld.sshfl [vmem:[#allocation1 + $0x10] sm:$0xff pattern:$0x75316420]
        %v4075 = vsel %vm404, %v4069, 0.0
        %v4076 = vsel %vm404, %v4070, 0.0
        %v4077 = vadd.f32 %v4075, %v4076
        %v4078 = vsel %vm404, %v4071, 0.0
        %v4079 = vadd.f32 %v4077, %v4078
        %4080 = vadd.xlane.f32.xlu0 %v4079
        %v4081 = vpop.xlane.xlu0 %4080
        %v4082 = vsel %vm404, %v4081, 0.0
        %v4083 = vrot.slane %v4082, 4
        %v4084 = vadd.f32 %v4082, %v4083
        %v4085 = vrot.slane %v4084, 2
        %v4086 = vadd.f32 %v4084, %v4085
        %v4087 = vrot.slane %v4086, 1
        %v4088 = vadd.f32 %v4086, %v4087
        %v4089 = vrcp.pop 1024.0
        %v4090 = vmul.f32 1024.0, %v4089
        %v4091 = vsub.f32 1.0, %v4090
        %v4092 = vmul.f32 %v4089, %v4091
        %v4093 = vadd.f32 %v4089, %v4092
        %vm4094 = vweird.f32 %v4089
        %v4095 = vsel %vm4094, %v4089, %v4093
        %v4096 = vmul.f32 %v4088, %v4095
        %v4097 = vsub.f32 %v4057, %v4096
        %v4098 = vsub.f32 %v4058, %v4096
        %v4099 = vmul.f32 %v4097, %v4060
        %v4100 = vmul.f32 %v4098, %v881
        %v4101 = vmul.f32 %v4099, %v4099
        %v4102 = vmul.f32 %v4100, %v4100
        %4105 = vst [vmem:[#allocation1] ss:$2 sm:$0xff] %v4101
        %s4106 = scalar_lea.vmem [#allocation1], 16
        %4107 = vst [vmem:[%s4106] ss:$2 sm:$0xff] %v4102
        %v4108 = vld.sshfl [vmem:[#allocation1] sm:$0xff pattern:$0x75316420]
        %v4109 = vld.sshfl [vmem:[#allocation1 + $0x8] sm:$0xff pattern:$0x75316420]
        %v4110 = vld.sshfl [vmem:[#allocation1 + $0x10] sm:$0xff pattern:$0x75316420]
        %v4114 = vsel %vm404, %v4108, 0.0
        %v4115 = vsel %vm404, %v4109, 0.0
        %v4116 = vadd.f32 %v4114, %v4115
        %v4117 = vsel %vm404, %v4110, 0.0
        %v4118 = vadd.f32 %v4116, %v4117
        %4119 = vadd.xlane.f32.xlu0 %v4118
        %v4120 = vpop.xlane.xlu0 %4119
        %v4121 = vsel %vm404, %v4120, 0.0
        %v4122 = vrot.slane %v4121, 4
        %v4123 = vadd.f32 %v4121, %v4122
        %v4124 = vrot.slane %v4123, 2
        %v4125 = vadd.f32 %v4123, %v4124
        %v4126 = vrot.slane %v4125, 1
        %v4127 = vadd.f32 %v4125, %v4126
        %v4128 = vmul.f32 %v4127, %v4095
        %v4129 = vadd.f32 %v4128, 1e-05
        %v4130 = vrsqrt.pop %v4129
        %v4131 = vmul.f32 %v4130, %v4129
        %v4132 = vmul.f32 %v4131, %v4130
        %v4133 = vmul.f32 0.5, %v4132
        %v4134 = vsub.f32 1.5, %v4133
        %v4135 = vmul.f32 %v4130, %v4134
        %vm4136 = vweird.f32 %v4129
        %vm4137 = vweird.f32 %v4130
        %vm4138 = vmor %vm4136, %vm4137
        %v4139 = vsel %vm4138, %v4130, %v4135
        %v4140 = vmul.f32 %v4097, %v4139
        %v4141 = vmul.f32 %v4098, %v4139
        %4143 = vset.pattern.permute.xlu0 0
        %4144 = vperm.xlu0 %4143, %v395
        %v4145 = vpop.permute.xlu0 %4144
        %v4147 = vunpack.c.l.s4 839922192
        %v4148 = vunpack.c.0.s8 %v4147
        %v4149 = vperm.slane %v4145, %v4148
        %v4151 = vmul.f32 %v4140, %v4149
        %v4152 = vmul.f32 %v4141, %v4149
        %4154 = vset.pattern.permute.xlu0 0
        %4155 = vperm.xlu0 %4154, %v396
        %v4156 = vpop.permute.xlu0 %4155
        %v4158 = vunpack.c.l.s4 839922192
        %v4159 = vunpack.c.0.s8 %v4158
        %v4160 = vperm.slane %v4156, %v4159
        %v4162 = vadd.f32 %v4151, %v4160
        %v4163 = vadd.f32 %v4152, %v4160
        %v4164 = vmax.f32 %v4162, 0.0
        %v4165 = vmax.f32 %v4163, 0.0
        %4166 = vst [vmem:[%s377] sm:$0xff] %v4164
        %4167 = vst [vmem:[%s377 + $0x8] sm:$0xf] %v4165
        %s4168 = sand.u32 %s250, 1
        %s4169 = scalar_lea.sflag [#allocation8], %s4168
        %s4170 = sand.u32 %s250, 1
        %s4171 = smul.addr %s4170, 12
        %s4172 = scalar_lea.vmem [#allocation9], %s4171
        // Predicated region
        $region65: #{tpu_custom_call.1} parent=59 // pred_check
          %p4173 = pneg %p260
        $region66: #{tpu_custom_call.1} parent=59 // pred_check_branch
          %4175 = sbr.rel (%p4173) target = $region68
        $region67: #{tpu_custom_call.1} parent=59 // pred_region
          %4177 = vsyncadd %s4169, 0
          %s4178 = smul.addr %s27, 3
          %s4179 = smul.addr %s4178, 4
          %s4180 = scalar_lea.hbm %s10, %s4179
          %s4182 = sshll.u32 %s4172, 4
          %s4183 = int_to_ptr.vmem [resolvable:$true] %s4182
          %s4184 = sshll.u32 %s4180, 4
          %s4185 = int_to_ptr.hbm [resolvable:$true] %s4184
          %4187 = dma.vmem_to_hbm [thread:$0]  %s4183, 192, %s4185, %s4169
        $region68: #{tpu_custom_call.1} parent=59 // pred_fallthru
          _
      $region60: #{tpu_custom_call.1} parent=5 // pred_fallthru
        _
      %p4188 = scmp.le.s32.totalorder 2, %s22
      // Predicated region
      $region69: #{tpu_custom_call.1} parent=5 // pred_check
        %p4189 = pneg %p4188
      $region70: #{tpu_custom_call.1} parent=5 // pred_check_branch
        %4191 = sbr.rel (%p4189) target = $region72
      $region71: #{tpu_custom_call.1} parent=5 // pred_region
        %s4192 = ssub.s32 %s22, 2
        // Predicated region
        $region73: #{tpu_custom_call.1} parent=71 // pred_check
          %p4193 = pneg %p266
        $region74: #{tpu_custom_call.1} parent=71 // pred_check_branch
          %4195 = sbr.rel (%p4193) target = $region76
        $region75: #{tpu_custom_call.1} parent=71 // pred_region
          %s4196 = sand.u32 %s251, 1
          %s4197 = scalar_lea.sflag [#allocation8], %s4196
          %s4198 = sand.u32 %s251, 1
          %s4199 = smul.addr %s4198, 12
          %s4200 = scalar_lea.vmem [#allocation9], %s4199
          %4202 = dma.done %s4197, 192
        $region76: #{tpu_custom_call.1} parent=71 // pred_fallthru
          _
      $region72: #{tpu_custom_call.1} parent=5 // pred_fallthru
        _
    $region6: #{tpu_custom_call.1} parent=1 // loop_footer
      %s26 = sadd.s32 1, %s22
    $region7: #{tpu_custom_call.1} parent=1 // loop_footer_branch
      %21 = sbr.rel target = $region3
    $region8: #{tpu_custom_call.1} parent=1 // loop_exit
      _
    %4203 = vsyncpa [#allocation7], 1
    %s4204 = scalar_lea.sflag [#allocation7], 1
    %4205 = vsyncpa %s4204, 1
    %4206 = vsyncpa [#allocation8], 1
    %s4207 = scalar_lea.sflag [#allocation8], 1
    %4208 = vsyncpa %s4207, 1

</llo_original>
